<compile_context>
chip_gen: v7x
topology: tpu7x:2x2x1
jax: 0.10.0
libtpu: 0.0.40
codegen_flags: <defaults>
</compile_context>

<pallas_src>
import functools

import jax
import jax.numpy as jnp
from jax import lax
from jax.experimental import pallas as pl
from jax.experimental.pallas import tpu as pltpu

EPS = 1e-5
LANES = 128
SUBLANES = 8


def _round_up(x, m):
    return (x + m - 1) // m * m


def _pick_tile_h(hout, wp, cp, coutp, budget_bytes=8 << 20, max_rows=2048):
    """Largest divisor of hout whose per-grid-step working set fits the VMEM budget."""
    best = 1
    for th in range(1, hout + 1):
        if hout % th:
            continue
        rows = th * wp
        if rows > max_rows:
            continue
        # f32 acc + bf16 matmul operand + f32 matmul result + double-buffered f32 out tile
        cost = rows * (cp * 4 + cp * 2 + coutp * 4) + 2 * rows * coutp * 4
        if cost <= budget_bytes:
            best = th
    return best


# ------------------------- fused Pallas kernel -------------------------

def _make_fused_kernel(stride, tile_h, wp):
    S = stride

    def kernel(xs_ref, dww_ref, b1_ref, pww_ref, s2_ref, b2_ref, o_ref):
        # xs_ref : (S*S, Hs, Ws, Cp)  bf16 parity planes of padded input (per batch elem)
        # dww_ref: (3, 3, Cp)         depthwise taps with BN1 scale folded in (f32)
        # b1_ref : (1, Cp)            folded BN1 bias (includes conv bias)
        # pww_ref: (Cp, Coutp)        1x1 conv weight, bf16
        # s2/b2  : (1, Coutp)         folded BN2 scale / bias (includes conv bias)
        # o_ref  : (1, tile_h, wp, Coutp)
        cp = xs_ref.shape[-1]
        coutp = o_ref.shape[-1]

        h = pl.program_id(1)
        r0 = h * tile_h
        if tile_h % SUBLANES == 0:          # static: hint aligned sublane loads
            r0 = pl.multiple_of(r0, SUBLANES)

        taps = dww_ref[...]                 # (3, 3, Cp) hoisted out of the tap loop

        # --- depthwise 3x3 conv (stride folded into parity planes), f32 accumulate ---
        acc = jnp.zeros((tile_h, wp, cp), jnp.float32)
        for kh in range(3):
            for kw in range(3):
                plane = (kh % S) * S + (kw % S)
                dh, dc = kh // S, kw // S
                patch = xs_ref[plane, pl.ds(r0 + dh, tile_h), dc:dc + wp, :]
                acc = acc + patch.astype(jnp.float32) * taps[kh, kw].reshape(1, 1, cp)

        # BN1 scale already folded into the taps; only bias + ReLU remain.  Result stays
        # in VMEM/vregs and is fed straight into the pointwise matmul (no HBM roundtrip).
        dw_act = jnp.maximum(acc + b1_ref[...], 0.0)

        # --- 1x1 conv as a lane-dense bf16 MXU matmul + folded BN2 + ReLU ---
        a = dw_act.reshape(tile_h * wp, cp).astype(jnp.bfloat16)
        y = jnp.dot(a, pww_ref[...], preferred_element_type=jnp.float32)
        y = jnp.maximum(y * s2_ref[...] + b2_ref[...], 0.0)
        o_ref[0] = y.reshape(tile_h, wp, coutp).astype(o_ref.dtype)

    return kernel


# ------------------------- wrapper -------------------------

@functools.partial(jax.jit, static_argnames=("stride", "single_buffer"))
def _depthwise_impl(x_nchw, params, stride, single_buffer):
    N, C, H, W = x_nchw.shape
    Cout = params["pw_w"].shape[1]
    S = int(stride)

    Hout = (H + 2 - 3) // S + 1
    Wout = (W + 2 - 3) // S + 1
    Cp = _round_up(C, LANES)
    Coutp = _round_up(Cout, LANES)
    Wp = _round_up(Wout, SUBLANES)          # layout-free reshapes + aligned stores

    # Fold conv biases + eval-mode BatchNorm into per-channel scale/bias; fold the BN1
    # scale straight into the depthwise taps (exact rewrite).
    s1 = params["bn1_gamma"] / jnp.sqrt(params["bn1_var"] + EPS)
    b1 = params["bn1_beta"] + s1 * (params["dw_b"] - params["bn1_mean"])
    s2 = params["bn2_gamma"] / jnp.sqrt(params["bn2_var"] + EPS)
    b2 = params["bn2_beta"] + s2 * (params["pw_b"] - params["bn2_mean"])

    def lane_pad(v, tgt):
        return jnp.pad(v, [(0, 0)] * (v.ndim - 1) + [(0, tgt - v.shape[-1])])

    dw_w = lane_pad(params["dw_w"] * s1, Cp)                              # (3,3,Cp) f32
    b1p = lane_pad(b1, Cp).reshape(1, Cp)
    pw_w = jnp.pad(params["pw_w"], ((0, Cp - C), (0, Coutp - Cout)))
    pw_w = pw_w.astype(jnp.bfloat16)                                      # (Cp,Coutp) bf16
    s2p = lane_pad(s2, Coutp).reshape(1, Coutp)
    b2p = lane_pad(b2, Coutp).reshape(1, Coutp)

    # NCHW -> NHWC, conv padding=1, lane-pad channels, bf16 activations.
    # TODO(synk): in a full NHWC network drop this transpose pair and do the stride-parity
    # gather in-kernel (manual DMA from a pl.ANY HBM ref) to cut the extra HBM passes.
    x = jnp.transpose(x_nchw, (0, 2, 3, 1))
    x = jnp.pad(x, ((0, 0), (1, 1), (1, 1), (0, Cp - C))).astype(jnp.bfloat16)

    # Parity (space-to-depth) split so the kernel computes the strided output directly
    # with unit-stride reads: tap (kh,kw) of the stride-S conv reads plane (kh%S, kw%S)
    # at row/col offset (kh//S, kw//S).
    off = 2 // S
    Hs, Ws = Hout + off, Wp + off
    planes = []
    for p in range(S):
        for q in range(S):
            pv = x[:, p::S, q::S, :][:, :Hs, :Ws, :]
            pv = jnp.pad(pv, ((0, 0), (0, Hs - pv.shape[1]),
                              (0, Ws - pv.shape[2]), (0, 0)))
            planes.append(pv)
    xs = jnp.stack(planes, axis=1).reshape(N * S * S, Hs, Ws, Cp)

    TH = _pick_tile_h(Hout, Wp, Cp, Coutp)
    n_h = Hout // TH

    # Single-buffer the per-batch-resident input block and every constant-index operand
    # (their block index never changes; the second pipeline buffer is pure VMEM waste).
    pipe = {}
    if single_buffer and hasattr(pl, "Buffered"):
        pipe = {"pipeline_mode": pl.Buffered(1)}

    # Explicit VMEM budget (defaults: 16 MiB v5e / 32 MiB v6e,v7x; v7x physical is 64 MiB).
    xs_bufs = 1 if single_buffer else 2
    xs_bytes = S * S * Hs * Ws * Cp * 2
    wgt_bytes = (3 * 3 * Cp + Cp + 2 * Coutp) * 4 + Cp * Coutp * 2
    out_bytes = TH * Wp * Coutp * 4
    work_bytes = TH * Wp * (2 * Cp * 4 + Cp * 2 + Coutp * 4)
    need = xs_bufs * (xs_bytes + wgt_bytes) + 2 * out_bytes + work_bytes
    vmem_limit = int(min(max(2 * need + (4 << 20), 32 << 20), 64 << 20))

    out = pl.pallas_call(
        _make_fused_kernel(S, TH, Wp),
        out_shape=jax.ShapeDtypeStruct((N, Hout, Wp, Coutp), jnp.float32),
        grid=(N, n_h),
        in_specs=[
            pl.BlockSpec((S * S, Hs, Ws, Cp), lambda n, h: (n, 0, 0, 0), **pipe),
            pl.BlockSpec((3, 3, Cp), lambda n, h: (0, 0, 0), **pipe),
            pl.BlockSpec((1, Cp), lambda n, h: (0, 0), **pipe),
            pl.BlockSpec((Cp, Coutp), lambda n, h: (0, 0), **pipe),
            pl.BlockSpec((1, Coutp), lambda n, h: (0, 0), **pipe),
            pl.BlockSpec((1, Coutp), lambda n, h: (0, 0), **pipe),
        ],
        out_specs=pl.BlockSpec((1, TH, Wp, Coutp), lambda n, h: (n, h, 0, 0)),
        compiler_params=pltpu.CompilerParams(
            dimension_semantics=("parallel", "parallel"),
            vmem_limit_bytes=vmem_limit),
    )(xs, dw_w, b1p, pw_w, s2p, b2p)

    # TODO(synk): for layers with C or Cout well below 128 the lane pad wastes VPU/MXU
    # work and output write bandwidth; a packed small-C layout would recover it.
    out = out[:, :, :Wout, :Cout]               # drop sublane / lane padding
    return jnp.transpose(out, (0, 3, 1, 2))     # back to NCHW


def depthwise_forward(x_nchw, params, stride):
    """Forward pass of the `depthwise` module. Input/output are NCHW float32."""
    try:
        return jax.block_until_ready(_depthwise_impl(x_nchw, params, int(stride), True))
    except Exception:
        # pl.Buffered(1) unsupported on this build -> fall back to default buffering.
        return jax.block_until_ready(_depthwise_impl(x_nchw, params, int(stride), False))


# ------------------------- deterministic parameter init -------------------------

def init_params(key, cin, cout):
    ks = jax.random.split(key, 12)
    p = {}
    p["dw_w"] = 0.2 * jax.random.normal(ks[0], (3, 3, cin), jnp.float32)   # depthwise taps, HWC
    p["dw_b"] = 0.1 * jax.random.normal(ks[1], (cin,), jnp.float32)
    p["bn1_gamma"] = 1.0 + 0.1 * jax.random.normal(ks[2], (cin,), jnp.float32)
    p["bn1_beta"] = 0.1 * jax.random.normal(ks[3], (cin,), jnp.float32)
    p["bn1_mean"] = 0.1 * jax.random.normal(ks[4], (cin,), jnp.float32)
    p["bn1_var"] = jnp.abs(1.0 + 0.1 * jax.random.normal(ks[5], (cin,), jnp.float32))
    p["pw_w"] = 0.2 * jax.random.normal(ks[6], (cin, cout), jnp.float32)   # (Cin, Cout)
    p["pw_b"] = 0.1 * jax.random.normal(ks[7], (cout,), jnp.float32)
    p["bn2_gamma"] = 1.0 + 0.1 * jax.random.normal(ks[8], (cout,), jnp.float32)
    p["bn2_beta"] = 0.1 * jax.random.normal(ks[9], (cout,), jnp.float32)
    p["bn2_mean"] = 0.1 * jax.random.normal(ks[10], (cout,), jnp.float32)
    p["bn2_var"] = jnp.abs(1.0 + 0.1 * jax.random.normal(ks[11], (cout,), jnp.float32))
    return p


# ------------------------- pure-JAX reference (unfused, f32) -------------------------

def reference_forward(x_nchw, params, stride):
    x = jnp.transpose(x_nchw, (0, 2, 3, 1))  # NHWC
    C = x.shape[-1]
    w_dw = params["dw_w"].reshape(3, 3, 1, C)  # HWIO, feature_group_count=C
    y = lax.conv_general_dilated(
        x, w_dw, window_strides=(stride, stride), padding=((1, 1), (1, 1)),
        dimension_numbers=("NHWC", "HWIO", "NHWC"), feature_group_count=C)
    y = y + params["dw_b"]
    y = params["bn1_gamma"] * (y - params["bn1_mean"]) / jnp.sqrt(params["bn1_var"] + EPS) \
        + params["bn1_beta"]
    y = jnp.maximum(y, 0.0)
    z = jnp.einsum("nhwc,cd->nhwd", y, params["pw_w"]) + params["pw_b"]
    z = params["bn2_gamma"] * (z - params["bn2_mean"]) / jnp.sqrt(params["bn2_var"] + EPS) \
        + params["bn2_beta"]
    z = jnp.maximum(z, 0.0)
    return jnp.transpose(z, (0, 3, 1, 2))


# ------------------------- main -------------------------

if __name__ == "__main__":
    key = jax.random.PRNGKey(0)
    kx, kp = jax.random.split(key)

    N, Cin, H, W = 2, 8, 16, 16
    Cout = 16
    x = jax.random.normal(kx, (N, Cin, H, W), jnp.float32)  # NCHW, PyTorch convention
    params = init_params(kp, Cin, Cout)

    for stride in (1, 2):
        out = depthwise_forward(x, params, stride)
        jax.block_until_ready(out)
        ref = reference_forward(x, params, stride)
        assert out.shape == ref.shape, (out.shape, ref.shape)
        err = float(jnp.max(jnp.abs(out - ref)))
        # bf16 activations + bf16 1x1-matmul operands (f32 accumulate) vs. an f32
        # reference -> bf16-level tolerance. (The pure-f32 kernel path verified at 5e-4.)
        assert err < 5e-2, f"stride={stride} max abs err {err}"

    print("KERNEL_OK")
</pallas_src>

<mosaic_0001>
module attributes {stable_mosaic.version = 11 : i64} {
  func.func @kernel(%arg0: i32, %arg1: i32, %arg2: memref<1x18x18x128xbf16, #tpu.memory_space<vmem>>, %arg3: memref<3x3x128xf32, #tpu.memory_space<vmem>>, %arg4: memref<1x128xf32, #tpu.memory_space<vmem>>, %arg5: memref<128x128xbf16, #tpu.memory_space<vmem>>, %arg6: memref<1x128xf32, #tpu.memory_space<vmem>>, %arg7: memref<1x128xf32, #tpu.memory_space<vmem>>, %arg8: memref<1x16x16x128xf32, #tpu.memory_space<vmem>>) attributes {dimension_semantics = [#tpu.dimension_semantics<parallel>, #tpu.dimension_semantics<parallel>], iteration_bounds = array<i64: 2, 1>, scalar_prefetch = 0 : i64, scratch_operands = 0 : i64, tpu.core_type = #tpu.core_type<tc>, window_params = [{pipeline_mode = #tpu.pipeline_mode<synchronous>, transform_indices = @transform_0, window_bounds = array<i64: 1, 18, 18, 128>}, {pipeline_mode = #tpu.pipeline_mode<synchronous>, transform_indices = @transform_1, window_bounds = array<i64: 3, 3, 128>}, {pipeline_mode = #tpu.pipeline_mode<synchronous>, transform_indices = @transform_2, window_bounds = array<i64: 1, 128>}, {pipeline_mode = #tpu.pipeline_mode<synchronous>, transform_indices = @transform_3, window_bounds = array<i64: 128, 128>}, {pipeline_mode = #tpu.pipeline_mode<synchronous>, transform_indices = @transform_4, window_bounds = array<i64: 1, 128>}, {pipeline_mode = #tpu.pipeline_mode<synchronous>, transform_indices = @transform_5, window_bounds = array<i64: 1, 128>}, {transform_indices = @transform_6, window_bounds = array<i64: 1, 16, 16, 128>}]} {
    %c16_i32 = arith.constant 16 : i32
    %0 = arith.muli %arg1, %c16_i32 : i32
    %1 = tpu.assume_multiple %0, 8 : i32
    %c0 = arith.constant 0 : index
    %c0_0 = arith.constant 0 : index
    %c0_1 = arith.constant 0 : index
    %2 = vector.load %arg3[%c0, %c0_0, %c0_1] : memref<3x3x128xf32, #tpu.memory_space<vmem>>, vector<3x3x128xf32>
    %cst = arith.constant 0.000000e+00 : f32
    %3 = vector.broadcast %cst : f32 to vector<16x16x128xf32>
    %c0_i32 = arith.constant 0 : i32
    %4 = arith.addi %1, %c0_i32 : i32
    %c0_2 = arith.constant 0 : index
    %5 = arith.index_cast %4 : i32 to index
    %c0_3 = arith.constant 0 : index
    %c0_4 = arith.constant 0 : index
    %6 = vector.load %arg2[%c0_2, %5, %c0_3, %c0_4] : memref<1x18x18x128xbf16, #tpu.memory_space<vmem>>, vector<1x16x16x128xbf16>
    %7 = vector.shape_cast %6 : vector<1x16x16x128xbf16> to vector<16x16x128xbf16>
    %8 = arith.extf %7 : vector<16x16x128xbf16> to vector<16x16x128xf32>
    %9 = vector.extract_strided_slice %2 {offsets = [0, 0, 0], sizes = [1, 1, 128], strides = [1, 1, 1]} : vector<3x3x128xf32> to vector<1x1x128xf32>
    %10 = vector.shape_cast %9 : vector<1x1x128xf32> to vector<128xf32>
    %11 = vector.shape_cast %10 : vector<128xf32> to vector<1x1x128xf32>
    %12 = vector.broadcast %11 : vector<1x1x128xf32> to vector<16x16x128xf32>
    %13 = arith.mulf %8, %12 : vector<16x16x128xf32>
    %14 = arith.addf %3, %13 : vector<16x16x128xf32>
    %c0_i32_5 = arith.constant 0 : i32
    %15 = arith.addi %1, %c0_i32_5 : i32
    %c0_6 = arith.constant 0 : index
    %16 = arith.index_cast %15 : i32 to index
    %c1 = arith.constant 1 : index
    %c0_7 = arith.constant 0 : index
    %17 = vector.load %arg2[%c0_6, %16, %c1, %c0_7] : memref<1x18x18x128xbf16, #tpu.memory_space<vmem>>, vector<1x16x16x128xbf16>
    %18 = vector.shape_cast %17 : vector<1x16x16x128xbf16> to vector<16x16x128xbf16>
    %19 = arith.extf %18 : vector<16x16x128xbf16> to vector<16x16x128xf32>
    %20 = vector.extract_strided_slice %2 {offsets = [0, 1, 0], sizes = [1, 1, 128], strides = [1, 1, 1]} : vector<3x3x128xf32> to vector<1x1x128xf32>
    %21 = vector.shape_cast %20 : vector<1x1x128xf32> to vector<128xf32>
    %22 = vector.shape_cast %21 : vector<128xf32> to vector<1x1x128xf32>
    %23 = vector.broadcast %22 : vector<1x1x128xf32> to vector<16x16x128xf32>
    %24 = arith.mulf %19, %23 : vector<16x16x128xf32>
    %25 = arith.addf %14, %24 : vector<16x16x128xf32>
    %c0_i32_8 = arith.constant 0 : i32
    %26 = arith.addi %1, %c0_i32_8 : i32
    %c0_9 = arith.constant 0 : index
    %27 = arith.index_cast %26 : i32 to index
    %c2 = arith.constant 2 : index
    %c0_10 = arith.constant 0 : index
    %28 = vector.load %arg2[%c0_9, %27, %c2, %c0_10] : memref<1x18x18x128xbf16, #tpu.memory_space<vmem>>, vector<1x16x16x128xbf16>
    %29 = vector.shape_cast %28 : vector<1x16x16x128xbf16> to vector<16x16x128xbf16>
    %30 = arith.extf %29 : vector<16x16x128xbf16> to vector<16x16x128xf32>
    %31 = vector.extract_strided_slice %2 {offsets = [0, 2, 0], sizes = [1, 1, 128], strides = [1, 1, 1]} : vector<3x3x128xf32> to vector<1x1x128xf32>
    %32 = vector.shape_cast %31 : vector<1x1x128xf32> to vector<128xf32>
    %33 = vector.shape_cast %32 : vector<128xf32> to vector<1x1x128xf32>
    %34 = vector.broadcast %33 : vector<1x1x128xf32> to vector<16x16x128xf32>
    %35 = arith.mulf %30, %34 : vector<16x16x128xf32>
    %36 = arith.addf %25, %35 : vector<16x16x128xf32>
    %c1_i32 = arith.constant 1 : i32
    %37 = arith.addi %1, %c1_i32 : i32
    %c0_11 = arith.constant 0 : index
    %38 = arith.index_cast %37 : i32 to index
    %c0_12 = arith.constant 0 : index
    %c0_13 = arith.constant 0 : index
    %39 = vector.load %arg2[%c0_11, %38, %c0_12, %c0_13] : memref<1x18x18x128xbf16, #tpu.memory_space<vmem>>, vector<1x16x16x128xbf16>
    %40 = vector.shape_cast %39 : vector<1x16x16x128xbf16> to vector<16x16x128xbf16>
    %41 = arith.extf %40 : vector<16x16x128xbf16> to vector<16x16x128xf32>
    %42 = vector.extract_strided_slice %2 {offsets = [1, 0, 0], sizes = [1, 1, 128], strides = [1, 1, 1]} : vector<3x3x128xf32> to vector<1x1x128xf32>
    %43 = vector.shape_cast %42 : vector<1x1x128xf32> to vector<128xf32>
    %44 = vector.shape_cast %43 : vector<128xf32> to vector<1x1x128xf32>
    %45 = vector.broadcast %44 : vector<1x1x128xf32> to vector<16x16x128xf32>
    %46 = arith.mulf %41, %45 : vector<16x16x128xf32>
    %47 = arith.addf %36, %46 : vector<16x16x128xf32>
    %c1_i32_14 = arith.constant 1 : i32
    %48 = arith.addi %1, %c1_i32_14 : i32
    %c0_15 = arith.constant 0 : index
    %49 = arith.index_cast %48 : i32 to index
    %c1_16 = arith.constant 1 : index
    %c0_17 = arith.constant 0 : index
    %50 = vector.load %arg2[%c0_15, %49, %c1_16, %c0_17] : memref<1x18x18x128xbf16, #tpu.memory_space<vmem>>, vector<1x16x16x128xbf16>
    %51 = vector.shape_cast %50 : vector<1x16x16x128xbf16> to vector<16x16x128xbf16>
    %52 = arith.extf %51 : vector<16x16x128xbf16> to vector<16x16x128xf32>
    %53 = vector.extract_strided_slice %2 {offsets = [1, 1, 0], sizes = [1, 1, 128], strides = [1, 1, 1]} : vector<3x3x128xf32> to vector<1x1x128xf32>
    %54 = vector.shape_cast %53 : vector<1x1x128xf32> to vector<128xf32>
    %55 = vector.shape_cast %54 : vector<128xf32> to vector<1x1x128xf32>
    %56 = vector.broadcast %55 : vector<1x1x128xf32> to vector<16x16x128xf32>
    %57 = arith.mulf %52, %56 : vector<16x16x128xf32>
    %58 = arith.addf %47, %57 : vector<16x16x128xf32>
    %c1_i32_18 = arith.constant 1 : i32
    %59 = arith.addi %1, %c1_i32_18 : i32
    %c0_19 = arith.constant 0 : index
    %60 = arith.index_cast %59 : i32 to index
    %c2_20 = arith.constant 2 : index
    %c0_21 = arith.constant 0 : index
    %61 = vector.load %arg2[%c0_19, %60, %c2_20, %c0_21] : memref<1x18x18x128xbf16, #tpu.memory_space<vmem>>, vector<1x16x16x128xbf16>
    %62 = vector.shape_cast %61 : vector<1x16x16x128xbf16> to vector<16x16x128xbf16>
    %63 = arith.extf %62 : vector<16x16x128xbf16> to vector<16x16x128xf32>
    %64 = vector.extract_strided_slice %2 {offsets = [1, 2, 0], sizes = [1, 1, 128], strides = [1, 1, 1]} : vector<3x3x128xf32> to vector<1x1x128xf32>
    %65 = vector.shape_cast %64 : vector<1x1x128xf32> to vector<128xf32>
    %66 = vector.shape_cast %65 : vector<128xf32> to vector<1x1x128xf32>
    %67 = vector.broadcast %66 : vector<1x1x128xf32> to vector<16x16x128xf32>
    %68 = arith.mulf %63, %67 : vector<16x16x128xf32>
    %69 = arith.addf %58, %68 : vector<16x16x128xf32>
    %c2_i32 = arith.constant 2 : i32
    %70 = arith.addi %1, %c2_i32 : i32
    %c0_22 = arith.constant 0 : index
    %71 = arith.index_cast %70 : i32 to index
    %c0_23 = arith.constant 0 : index
    %c0_24 = arith.constant 0 : index
    %72 = vector.load %arg2[%c0_22, %71, %c0_23, %c0_24] : memref<1x18x18x128xbf16, #tpu.memory_space<vmem>>, vector<1x16x16x128xbf16>
    %73 = vector.shape_cast %72 : vector<1x16x16x128xbf16> to vector<16x16x128xbf16>
    %74 = arith.extf %73 : vector<16x16x128xbf16> to vector<16x16x128xf32>
    %75 = vector.extract_strided_slice %2 {offsets = [2, 0, 0], sizes = [1, 1, 128], strides = [1, 1, 1]} : vector<3x3x128xf32> to vector<1x1x128xf32>
    %76 = vector.shape_cast %75 : vector<1x1x128xf32> to vector<128xf32>
    %77 = vector.shape_cast %76 : vector<128xf32> to vector<1x1x128xf32>
    %78 = vector.broadcast %77 : vector<1x1x128xf32> to vector<16x16x128xf32>
    %79 = arith.mulf %74, %78 : vector<16x16x128xf32>
    %80 = arith.addf %69, %79 : vector<16x16x128xf32>
    %c2_i32_25 = arith.constant 2 : i32
    %81 = arith.addi %1, %c2_i32_25 : i32
    %c0_26 = arith.constant 0 : index
    %82 = arith.index_cast %81 : i32 to index
    %c1_27 = arith.constant 1 : index
    %c0_28 = arith.constant 0 : index
    %83 = vector.load %arg2[%c0_26, %82, %c1_27, %c0_28] : memref<1x18x18x128xbf16, #tpu.memory_space<vmem>>, vector<1x16x16x128xbf16>
    %84 = vector.shape_cast %83 : vector<1x16x16x128xbf16> to vector<16x16x128xbf16>
    %85 = arith.extf %84 : vector<16x16x128xbf16> to vector<16x16x128xf32>
    %86 = vector.extract_strided_slice %2 {offsets = [2, 1, 0], sizes = [1, 1, 128], strides = [1, 1, 1]} : vector<3x3x128xf32> to vector<1x1x128xf32>
    %87 = vector.shape_cast %86 : vector<1x1x128xf32> to vector<128xf32>
    %88 = vector.shape_cast %87 : vector<128xf32> to vector<1x1x128xf32>
    %89 = vector.broadcast %88 : vector<1x1x128xf32> to vector<16x16x128xf32>
    %90 = arith.mulf %85, %89 : vector<16x16x128xf32>
    %91 = arith.addf %80, %90 : vector<16x16x128xf32>
    %c2_i32_29 = arith.constant 2 : i32
    %92 = arith.addi %1, %c2_i32_29 : i32
    %c0_30 = arith.constant 0 : index
    %93 = arith.index_cast %92 : i32 to index
    %c2_31 = arith.constant 2 : index
    %c0_32 = arith.constant 0 : index
    %94 = vector.load %arg2[%c0_30, %93, %c2_31, %c0_32] : memref<1x18x18x128xbf16, #tpu.memory_space<vmem>>, vector<1x16x16x128xbf16>
    %95 = vector.shape_cast %94 : vector<1x16x16x128xbf16> to vector<16x16x128xbf16>
    %96 = arith.extf %95 : vector<16x16x128xbf16> to vector<16x16x128xf32>
    %97 = vector.extract_strided_slice %2 {offsets = [2, 2, 0], sizes = [1, 1, 128], strides = [1, 1, 1]} : vector<3x3x128xf32> to vector<1x1x128xf32>
    %98 = vector.shape_cast %97 : vector<1x1x128xf32> to vector<128xf32>
    %99 = vector.shape_cast %98 : vector<128xf32> to vector<1x1x128xf32>
    %100 = vector.broadcast %99 : vector<1x1x128xf32> to vector<16x16x128xf32>
    %101 = arith.mulf %96, %100 : vector<16x16x128xf32>
    %102 = arith.addf %91, %101 : vector<16x16x128xf32>
    %c0_33 = arith.constant 0 : index
    %c0_34 = arith.constant 0 : index
    %103 = vector.load %arg4[%c0_33, %c0_34] : memref<1x128xf32, #tpu.memory_space<vmem>>, vector<1x128xf32>
    %104 = vector.shape_cast %103 : vector<1x128xf32> to vector<1x1x128xf32>
    %105 = vector.broadcast %104 : vector<1x1x128xf32> to vector<16x16x128xf32>
    %106 = arith.addf %102, %105 : vector<16x16x128xf32>
    %cst_35 = arith.constant 0.000000e+00 : f32
    %107 = vector.broadcast %cst_35 : f32 to vector<16x16x128xf32>
    %108 = arith.maximumf %106, %107 : vector<16x16x128xf32>
    %109 = vector.shape_cast %108 : vector<16x16x128xf32> to vector<256x128xf32>
    %110 = arith.truncf %109 : vector<256x128xf32> to vector<256x128xbf16>
    %c0_36 = arith.constant 0 : index
    %c0_37 = arith.constant 0 : index
    %111 = vector.load %arg5[%c0_36, %c0_37] : memref<128x128xbf16, #tpu.memory_space<vmem>>, vector<128x128xbf16>
    %cst_38 = arith.constant dense<0.000000e+00> : vector<256x128xf32>
    %112 = tpu.matmul %110, %111, %cst_38 {dimension_numbers = #tpu.dot_dimension_numbers<[1], [0], [0], [1], [0, 0, 1, 1], [], []>} : vector<256x128xbf16>, vector<128x128xbf16>, vector<256x128xf32> -> vector<256x128xf32>
    %c0_39 = arith.constant 0 : index
    %c0_40 = arith.constant 0 : index
    %113 = vector.load %arg6[%c0_39, %c0_40] : memref<1x128xf32, #tpu.memory_space<vmem>>, vector<1x128xf32>
    %114 = vector.broadcast %113 : vector<1x128xf32> to vector<256x128xf32>
    %115 = arith.mulf %112, %114 : vector<256x128xf32>
    %c0_41 = arith.constant 0 : index
    %c0_42 = arith.constant 0 : index
    %116 = vector.load %arg7[%c0_41, %c0_42] : memref<1x128xf32, #tpu.memory_space<vmem>>, vector<1x128xf32>
    %117 = vector.broadcast %116 : vector<1x128xf32> to vector<256x128xf32>
    %118 = arith.addf %115, %117 : vector<256x128xf32>
    %cst_43 = arith.constant 0.000000e+00 : f32
    %119 = vector.broadcast %cst_43 : f32 to vector<256x128xf32>
    %120 = arith.maximumf %118, %119 : vector<256x128xf32>
    %121 = vector.shape_cast %120 : vector<256x128xf32> to vector<16x16x128xf32>
    %c0_44 = arith.constant 0 : index
    %c0_45 = arith.constant 0 : index
    %c0_46 = arith.constant 0 : index
    %c0_47 = arith.constant 0 : index
    %122 = vector.load %arg8[%c0_44, %c0_45, %c0_46, %c0_47] : memref<1x16x16x128xf32, #tpu.memory_space<vmem>>, vector<1x16x16x128xf32>
    %123 = vector.shape_cast %122 : vector<1x16x16x128xf32> to vector<16x16x128xf32>
    %124 = vector.shape_cast %121 : vector<16x16x128xf32> to vector<1x16x16x128xf32>
    tpu.vector_store %arg8[%c0_44, %c0_45, %c0_46, %c0_47], %124 {strides = array<i32>} : memref<1x16x16x128xf32, #tpu.memory_space<vmem>>, vector<1x16x16x128xf32>,
    return
  }
  func.func @transform_0(%arg0: i32, %arg1: i32) -> (i32, i32, i32, i32) {
    %c0_i32 = arith.constant 0 : i32
    %c0_i32_0 = arith.constant 0 : i32
    %c0_i32_1 = arith.constant 0 : i32
    %c0_i32_2 = arith.constant 0 : i32
    return %arg0, %c0_i32, %c0_i32_0, %c0_i32_1 : i32, i32, i32, i32
  }
  func.func @transform_1(%arg0: i32, %arg1: i32) -> (i32, i32, i32) {
    %c0_i32 = arith.constant 0 : i32
    %c0_i32_0 = arith.constant 0 : i32
    %c0_i32_1 = arith.constant 0 : i32
    %c0_i32_2 = arith.constant 0 : i32
    return %c0_i32, %c0_i32_0, %c0_i32_1 : i32, i32, i32
  }
  func.func @transform_2(%arg0: i32, %arg1: i32) -> (i32, i32) {
    %c0_i32 = arith.constant 0 : i32
    %c0_i32_0 = arith.constant 0 : i32
    %c0_i32_1 = arith.constant 0 : i32
    return %c0_i32, %c0_i32_0 : i32, i32
  }
  func.func @transform_3(%arg0: i32, %arg1: i32) -> (i32, i32) {
    %c0_i32 = arith.constant 0 : i32
    %c0_i32_0 = arith.constant 0 : i32
    %c0_i32_1 = arith.constant 0 : i32
    return %c0_i32, %c0_i32_0 : i32, i32
  }
  func.func @transform_4(%arg0: i32, %arg1: i32) -> (i32, i32) {
    %c0_i32 = arith.constant 0 : i32
    %c0_i32_0 = arith.constant 0 : i32
    %c0_i32_1 = arith.constant 0 : i32
    return %c0_i32, %c0_i32_0 : i32, i32
  }
  func.func @transform_5(%arg0: i32, %arg1: i32) -> (i32, i32) {
    %c0_i32 = arith.constant 0 : i32
    %c0_i32_0 = arith.constant 0 : i32
    %c0_i32_1 = arith.constant 0 : i32
    return %c0_i32, %c0_i32_0 : i32, i32
  }
  func.func @transform_6(%arg0: i32, %arg1: i32) -> (i32, i32, i32, i32) {
    %c0_i32 = arith.constant 0 : i32
    %c0_i32_0 = arith.constant 0 : i32
    %c0_i32_1 = arith.constant 0 : i32
    return %arg0, %arg1, %c0_i32, %c0_i32_0 : i32, i32, i32, i32
  }
}

module attributes {stable_mosaic.version = 11 : i64} {
  func.func @kernel(%arg0: i32, %arg1: i32, %arg2: memref<1x18x18x128xbf16, #tpu.memory_space<vmem>>, %arg3: memref<3x3x128xf32, #tpu.memory_space<vmem>>, %arg4: memref<1x128xf32, #tpu.memory_space<vmem>>, %arg5: memref<128x128xbf16, #tpu.memory_space<vmem>>, %arg6: memref<1x128xf32, #tpu.memory_space<vmem>>, %arg7: memref<1x128xf32, #tpu.memory_space<vmem>>, %arg8: memref<1x16x16x128xf32, #tpu.memory_space<vmem>>) attributes {dimension_semantics = [#tpu.dimension_semantics<parallel>, #tpu.dimension_semantics<parallel>], iteration_bounds = array<i64: 2, 1>, scalar_prefetch = 0 : i64, scratch_operands = 0 : i64, tpu.core_type = #tpu.core_type<tc>, window_params = [{transform_indices = @transform_0, window_bounds = array<i64: 1, 18, 18, 128>}, {pipeline_mode = #tpu.pipeline_mode<synchronous>, transform_indices = @transform_1, window_bounds = array<i64: 3, 3, 128>}, {pipeline_mode = #tpu.pipeline_mode<synchronous>, transform_indices = @transform_2, window_bounds = array<i64: 1, 128>}, {pipeline_mode = #tpu.pipeline_mode<synchronous>, transform_indices = @transform_3, window_bounds = array<i64: 128, 128>}, {pipeline_mode = #tpu.pipeline_mode<synchronous>, transform_indices = @transform_4, window_bounds = array<i64: 1, 128>}, {pipeline_mode = #tpu.pipeline_mode<synchronous>, transform_indices = @transform_5, window_bounds = array<i64: 1, 128>}, {transform_indices = @transform_6, window_bounds = array<i64: 1, 16, 16, 128>}]} {
    %c16_i32 = arith.constant 16 : i32
    %0 = arith.muli %arg1, %c16_i32 : i32
    %1 = tpu.assume_multiple %0, 8 : i32
    %c0 = arith.constant 0 : index
    %c0_0 = arith.constant 0 : index
    %c0_1 = arith.constant 0 : index
    %2 = vector.load %arg3[%c0, %c0_0, %c0_1] : memref<3x3x128xf32, #tpu.memory_space<vmem>>, vector<3x3x128xf32>
    %cst = arith.constant 0.000000e+00 : f32
    %3 = vector.broadcast %cst : f32 to vector<16x16x128xf32>
    %c0_i32 = arith.constant 0 : i32
    %4 = arith.addi %1, %c0_i32 : i32
    %c0_2 = arith.constant 0 : index
    %5 = arith.index_cast %4 : i32 to index
    %c0_3 = arith.constant 0 : index
    %c0_4 = arith.constant 0 : index
    %6 = vector.load %arg2[%c0_2, %5, %c0_3, %c0_4] : memref<1x18x18x128xbf16, #tpu.memory_space<vmem>>, vector<1x16x16x128xbf16>
    %7 = vector.shape_cast %6 : vector<1x16x16x128xbf16> to vector<16x16x128xbf16>
    %8 = arith.extf %7 : vector<16x16x128xbf16> to vector<16x16x128xf32>
    %9 = vector.extract_strided_slice %2 {offsets = [0, 0, 0], sizes = [1, 1, 128], strides = [1, 1, 1]} : vector<3x3x128xf32> to vector<1x1x128xf32>
    %10 = vector.shape_cast %9 : vector<1x1x128xf32> to vector<128xf32>
    %11 = vector.shape_cast %10 : vector<128xf32> to vector<1x1x128xf32>
    %12 = vector.broadcast %11 : vector<1x1x128xf32> to vector<16x16x128xf32>
    %13 = arith.mulf %8, %12 : vector<16x16x128xf32>
    %14 = arith.addf %3, %13 : vector<16x16x128xf32>
    %c0_i32_5 = arith.constant 0 : i32
    %15 = arith.addi %1, %c0_i32_5 : i32
    %c0_6 = arith.constant 0 : index
    %16 = arith.index_cast %15 : i32 to index
    %c1 = arith.constant 1 : index
    %c0_7 = arith.constant 0 : index
    %17 = vector.load %arg2[%c0_6, %16, %c1, %c0_7] : memref<1x18x18x128xbf16, #tpu.memory_space<vmem>>, vector<1x16x16x128xbf16>
    %18 = vector.shape_cast %17 : vector<1x16x16x128xbf16> to vector<16x16x128xbf16>
    %19 = arith.extf %18 : vector<16x16x128xbf16> to vector<16x16x128xf32>
    %20 = vector.extract_strided_slice %2 {offsets = [0, 1, 0], sizes = [1, 1, 128], strides = [1, 1, 1]} : vector<3x3x128xf32> to vector<1x1x128xf32>
    %21 = vector.shape_cast %20 : vector<1x1x128xf32> to vector<128xf32>
    %22 = vector.shape_cast %21 : vector<128xf32> to vector<1x1x128xf32>
    %23 = vector.broadcast %22 : vector<1x1x128xf32> to vector<16x16x128xf32>
    %24 = arith.mulf %19, %23 : vector<16x16x128xf32>
    %25 = arith.addf %14, %24 : vector<16x16x128xf32>
    %c0_i32_8 = arith.constant 0 : i32
    %26 = arith.addi %1, %c0_i32_8 : i32
    %c0_9 = arith.constant 0 : index
    %27 = arith.index_cast %26 : i32 to index
    %c2 = arith.constant 2 : index
    %c0_10 = arith.constant 0 : index
    %28 = vector.load %arg2[%c0_9, %27, %c2, %c0_10] : memref<1x18x18x128xbf16, #tpu.memory_space<vmem>>, vector<1x16x16x128xbf16>
    %29 = vector.shape_cast %28 : vector<1x16x16x128xbf16> to vector<16x16x128xbf16>
    %30 = arith.extf %29 : vector<16x16x128xbf16> to vector<16x16x128xf32>
    %31 = vector.extract_strided_slice %2 {offsets = [0, 2, 0], sizes = [1, 1, 128], strides = [1, 1, 1]} : vector<3x3x128xf32> to vector<1x1x128xf32>
    %32 = vector.shape_cast %31 : vector<1x1x128xf32> to vector<128xf32>
    %33 = vector.shape_cast %32 : vector<128xf32> to vector<1x1x128xf32>
    %34 = vector.broadcast %33 : vector<1x1x128xf32> to vector<16x16x128xf32>
    %35 = arith.mulf %30, %34 : vector<16x16x128xf32>
    %36 = arith.addf %25, %35 : vector<16x16x128xf32>
    %c1_i32 = arith.constant 1 : i32
    %37 = arith.addi %1, %c1_i32 : i32
    %c0_11 = arith.constant 0 : index
    %38 = arith.index_cast %37 : i32 to index
    %c0_12 = arith.constant 0 : index
    %c0_13 = arith.constant 0 : index
    %39 = vector.load %arg2[%c0_11, %38, %c0_12, %c0_13] : memref<1x18x18x128xbf16, #tpu.memory_space<vmem>>, vector<1x16x16x128xbf16>
    %40 = vector.shape_cast %39 : vector<1x16x16x128xbf16> to vector<16x16x128xbf16>
    %41 = arith.extf %40 : vector<16x16x128xbf16> to vector<16x16x128xf32>
    %42 = vector.extract_strided_slice %2 {offsets = [1, 0, 0], sizes = [1, 1, 128], strides = [1, 1, 1]} : vector<3x3x128xf32> to vector<1x1x128xf32>
    %43 = vector.shape_cast %42 : vector<1x1x128xf32> to vector<128xf32>
    %44 = vector.shape_cast %43 : vector<128xf32> to vector<1x1x128xf32>
    %45 = vector.broadcast %44 : vector<1x1x128xf32> to vector<16x16x128xf32>
    %46 = arith.mulf %41, %45 : vector<16x16x128xf32>
    %47 = arith.addf %36, %46 : vector<16x16x128xf32>
    %c1_i32_14 = arith.constant 1 : i32
    %48 = arith.addi %1, %c1_i32_14 : i32
    %c0_15 = arith.constant 0 : index
    %49 = arith.index_cast %48 : i32 to index
    %c1_16 = arith.constant 1 : index
    %c0_17 = arith.constant 0 : index
    %50 = vector.load %arg2[%c0_15, %49, %c1_16, %c0_17] : memref<1x18x18x128xbf16, #tpu.memory_space<vmem>>, vector<1x16x16x128xbf16>
    %51 = vector.shape_cast %50 : vector<1x16x16x128xbf16> to vector<16x16x128xbf16>
    %52 = arith.extf %51 : vector<16x16x128xbf16> to vector<16x16x128xf32>
    %53 = vector.extract_strided_slice %2 {offsets = [1, 1, 0], sizes = [1, 1, 128], strides = [1, 1, 1]} : vector<3x3x128xf32> to vector<1x1x128xf32>
    %54 = vector.shape_cast %53 : vector<1x1x128xf32> to vector<128xf32>
    %55 = vector.shape_cast %54 : vector<128xf32> to vector<1x1x128xf32>
    %56 = vector.broadcast %55 : vector<1x1x128xf32> to vector<16x16x128xf32>
    %57 = arith.mulf %52, %56 : vector<16x16x128xf32>
    %58 = arith.addf %47, %57 : vector<16x16x128xf32>
    %c1_i32_18 = arith.constant 1 : i32
    %59 = arith.addi %1, %c1_i32_18 : i32
    %c0_19 = arith.constant 0 : index
    %60 = arith.index_cast %59 : i32 to index
    %c2_20 = arith.constant 2 : index
    %c0_21 = arith.constant 0 : index
    %61 = vector.load %arg2[%c0_19, %60, %c2_20, %c0_21] : memref<1x18x18x128xbf16, #tpu.memory_space<vmem>>, vector<1x16x16x128xbf16>
    %62 = vector.shape_cast %61 : vector<1x16x16x128xbf16> to vector<16x16x128xbf16>
    %63 = arith.extf %62 : vector<16x16x128xbf16> to vector<16x16x128xf32>
    %64 = vector.extract_strided_slice %2 {offsets = [1, 2, 0], sizes = [1, 1, 128], strides = [1, 1, 1]} : vector<3x3x128xf32> to vector<1x1x128xf32>
    %65 = vector.shape_cast %64 : vector<1x1x128xf32> to vector<128xf32>
    %66 = vector.shape_cast %65 : vector<128xf32> to vector<1x1x128xf32>
    %67 = vector.broadcast %66 : vector<1x1x128xf32> to vector<16x16x128xf32>
    %68 = arith.mulf %63, %67 : vector<16x16x128xf32>
    %69 = arith.addf %58, %68 : vector<16x16x128xf32>
    %c2_i32 = arith.constant 2 : i32
    %70 = arith.addi %1, %c2_i32 : i32
    %c0_22 = arith.constant 0 : index
    %71 = arith.index_cast %70 : i32 to index
    %c0_23 = arith.constant 0 : index
    %c0_24 = arith.constant 0 : index
    %72 = vector.load %arg2[%c0_22, %71, %c0_23, %c0_24] : memref<1x18x18x128xbf16, #tpu.memory_space<vmem>>, vector<1x16x16x128xbf16>
    %73 = vector.shape_cast %72 : vector<1x16x16x128xbf16> to vector<16x16x128xbf16>
    %74 = arith.extf %73 : vector<16x16x128xbf16> to vector<16x16x128xf32>
    %75 = vector.extract_strided_slice %2 {offsets = [2, 0, 0], sizes = [1, 1, 128], strides = [1, 1, 1]} : vector<3x3x128xf32> to vector<1x1x128xf32>
    %76 = vector.shape_cast %75 : vector<1x1x128xf32> to vector<128xf32>
    %77 = vector.shape_cast %76 : vector<128xf32> to vector<1x1x128xf32>
    %78 = vector.broadcast %77 : vector<1x1x128xf32> to vector<16x16x128xf32>
    %79 = arith.mulf %74, %78 : vector<16x16x128xf32>
    %80 = arith.addf %69, %79 : vector<16x16x128xf32>
    %c2_i32_25 = arith.constant 2 : i32
    %81 = arith.addi %1, %c2_i32_25 : i32
    %c0_26 = arith.constant 0 : index
    %82 = arith.index_cast %81 : i32 to index
    %c1_27 = arith.constant 1 : index
    %c0_28 = arith.constant 0 : index
    %83 = vector.load %arg2[%c0_26, %82, %c1_27, %c0_28] : memref<1x18x18x128xbf16, #tpu.memory_space<vmem>>, vector<1x16x16x128xbf16>
    %84 = vector.shape_cast %83 : vector<1x16x16x128xbf16> to vector<16x16x128xbf16>
    %85 = arith.extf %84 : vector<16x16x128xbf16> to vector<16x16x128xf32>
    %86 = vector.extract_strided_slice %2 {offsets = [2, 1, 0], sizes = [1, 1, 128], strides = [1, 1, 1]} : vector<3x3x128xf32> to vector<1x1x128xf32>
    %87 = vector.shape_cast %86 : vector<1x1x128xf32> to vector<128xf32>
    %88 = vector.shape_cast %87 : vector<128xf32> to vector<1x1x128xf32>
    %89 = vector.broadcast %88 : vector<1x1x128xf32> to vector<16x16x128xf32>
    %90 = arith.mulf %85, %89 : vector<16x16x128xf32>
    %91 = arith.addf %80, %90 : vector<16x16x128xf32>
    %c2_i32_29 = arith.constant 2 : i32
    %92 = arith.addi %1, %c2_i32_29 : i32
    %c0_30 = arith.constant 0 : index
    %93 = arith.index_cast %92 : i32 to index
    %c2_31 = arith.constant 2 : index
    %c0_32 = arith.constant 0 : index
    %94 = vector.load %arg2[%c0_30, %93, %c2_31, %c0_32] : memref<1x18x18x128xbf16, #tpu.memory_space<vmem>>, vector<1x16x16x128xbf16>
    %95 = vector.shape_cast %94 : vector<1x16x16x128xbf16> to vector<16x16x128xbf16>
    %96 = arith.extf %95 : vector<16x16x128xbf16> to vector<16x16x128xf32>
    %97 = vector.extract_strided_slice %2 {offsets = [2, 2, 0], sizes = [1, 1, 128], strides = [1, 1, 1]} : vector<3x3x128xf32> to vector<1x1x128xf32>
    %98 = vector.shape_cast %97 : vector<1x1x128xf32> to vector<128xf32>
    %99 = vector.shape_cast %98 : vector<128xf32> to vector<1x1x128xf32>
    %100 = vector.broadcast %99 : vector<1x1x128xf32> to vector<16x16x128xf32>
    %101 = arith.mulf %96, %100 : vector<16x16x128xf32>
    %102 = arith.addf %91, %101 : vector<16x16x128xf32>
    %c0_33 = arith.constant 0 : index
    %c0_34 = arith.constant 0 : index
    %103 = vector.load %arg4[%c0_33, %c0_34] : memref<1x128xf32, #tpu.memory_space<vmem>>, vector<1x128xf32>
    %104 = vector.shape_cast %103 : vector<1x128xf32> to vector<1x1x128xf32>
    %105 = vector.broadcast %104 : vector<1x1x128xf32> to vector<16x16x128xf32>
    %106 = arith.addf %102, %105 : vector<16x16x128xf32>
    %cst_35 = arith.constant 0.000000e+00 : f32
    %107 = vector.broadcast %cst_35 : f32 to vector<16x16x128xf32>
    %108 = arith.maximumf %106, %107 : vector<16x16x128xf32>
    %109 = vector.shape_cast %108 : vector<16x16x128xf32> to vector<256x128xf32>
    %110 = arith.truncf %109 : vector<256x128xf32> to vector<256x128xbf16>
    %c0_36 = arith.constant 0 : index
    %c0_37 = arith.constant 0 : index
    %111 = vector.load %arg5[%c0_36, %c0_37] : memref<128x128xbf16, #tpu.memory_space<vmem>>, vector<128x128xbf16>
    %cst_38 = arith.constant dense<0.000000e+00> : vector<256x128xf32>
    %112 = tpu.matmul %110, %111, %cst_38 {dimension_numbers = #tpu.dot_dimension_numbers<[1], [0], [0], [1], [0, 0, 1, 1], [], []>} : vector<256x128xbf16>, vector<128x128xbf16>, vector<256x128xf32> -> vector<256x128xf32>
    %c0_39 = arith.constant 0 : index
    %c0_40 = arith.constant 0 : index
    %113 = vector.load %arg6[%c0_39, %c0_40] : memref<1x128xf32, #tpu.memory_space<vmem>>, vector<1x128xf32>
    %114 = vector.broadcast %113 : vector<1x128xf32> to vector<256x128xf32>
    %115 = arith.mulf %112, %114 : vector<256x128xf32>
    %c0_41 = arith.constant 0 : index
    %c0_42 = arith.constant 0 : index
    %116 = vector.load %arg7[%c0_41, %c0_42] : memref<1x128xf32, #tpu.memory_space<vmem>>, vector<1x128xf32>
    %117 = vector.broadcast %116 : vector<1x128xf32> to vector<256x128xf32>
    %118 = arith.addf %115, %117 : vector<256x128xf32>
    %cst_43 = arith.constant 0.000000e+00 : f32
    %119 = vector.broadcast %cst_43 : f32 to vector<256x128xf32>
    %120 = arith.maximumf %118, %119 : vector<256x128xf32>
    %121 = vector.shape_cast %120 : vector<256x128xf32> to vector<16x16x128xf32>
    %c0_44 = arith.constant 0 : index
    %c0_45 = arith.constant 0 : index
    %c0_46 = arith.constant 0 : index
    %c0_47 = arith.constant 0 : index
    %122 = vector.load %arg8[%c0_44, %c0_45, %c0_46, %c0_47] : memref<1x16x16x128xf32, #tpu.memory_space<vmem>>, vector<1x16x16x128xf32>
    %123 = vector.shape_cast %122 : vector<1x16x16x128xf32> to vector<16x16x128xf32>
    %124 = vector.shape_cast %121 : vector<16x16x128xf32> to vector<1x16x16x128xf32>
    tpu.vector_store %arg8[%c0_44, %c0_45, %c0_46, %c0_47], %124 {strides = array<i32>} : memref<1x16x16x128xf32, #tpu.memory_space<vmem>>, vector<1x16x16x128xf32>,
    return
  }
  func.func @transform_0(%arg0: i32, %arg1: i32) -> (i32, i32, i32, i32) {
    %c0_i32 = arith.constant 0 : i32
    %c0_i32_0 = arith.constant 0 : i32
    %c0_i32_1 = arith.constant 0 : i32
    %c0_i32_2 = arith.constant 0 : i32
    return %arg0, %c0_i32, %c0_i32_0, %c0_i32_1 : i32, i32, i32, i32
  }
  func.func @transform_1(%arg0: i32, %arg1: i32) -> (i32, i32, i32) {
    %c0_i32 = arith.constant 0 : i32
    %c0_i32_0 = arith.constant 0 : i32
    %c0_i32_1 = arith.constant 0 : i32
    %c0_i32_2 = arith.constant 0 : i32
    return %c0_i32, %c0_i32_0, %c0_i32_1 : i32, i32, i32
  }
  func.func @transform_2(%arg0: i32, %arg1: i32) -> (i32, i32) {
    %c0_i32 = arith.constant 0 : i32
    %c0_i32_0 = arith.constant 0 : i32
    %c0_i32_1 = arith.constant 0 : i32
    return %c0_i32, %c0_i32_0 : i32, i32
  }
  func.func @transform_3(%arg0: i32, %arg1: i32) -> (i32, i32) {
    %c0_i32 = arith.constant 0 : i32
    %c0_i32_0 = arith.constant 0 : i32
    %c0_i32_1 = arith.constant 0 : i32
    return %c0_i32, %c0_i32_0 : i32, i32
  }
  func.func @transform_4(%arg0: i32, %arg1: i32) -> (i32, i32) {
    %c0_i32 = arith.constant 0 : i32
    %c0_i32_0 = arith.constant 0 : i32
    %c0_i32_1 = arith.constant 0 : i32
    return %c0_i32, %c0_i32_0 : i32, i32
  }
  func.func @transform_5(%arg0: i32, %arg1: i32) -> (i32, i32) {
    %c0_i32 = arith.constant 0 : i32
    %c0_i32_0 = arith.constant 0 : i32
    %c0_i32_1 = arith.constant 0 : i32
    return %c0_i32, %c0_i32_0 : i32, i32
  }
  func.func @transform_6(%arg0: i32, %arg1: i32) -> (i32, i32, i32, i32) {
    %c0_i32 = arith.constant 0 : i32
    %c0_i32_0 = arith.constant 0 : i32
    %c0_i32_1 = arith.constant 0 : i32
    return %arg0, %arg1, %c0_i32, %c0_i32_0 : i32, i32, i32, i32
  }
}

</mosaic_0001>

<llo_original>
// kernel: _depthwise_impl.1
$region0: #{_depthwise_impl.1}
  #allocation0 [shape = 'u32[]', space=smem, size = 0x4, offset = 0x4, fixed_abs, tag = 'smem constant byte address 0x4 - core index']
  #allocation1 [shape = 'u32[144,128]{1,0:T(1,128)}', space=vmem, size = 0x12000, scoped, tag = 'internal scratch']
  %s0 = inlined_call_operand.vmem [shape: bf16[2,18,18,128], index: 0, kind: input, shape index: {}]
  %s1 = inlined_call_operand.vmem [shape: f32[3,3,128], index: 1, kind: input, shape index: {}]
  %s2 = inlined_call_operand.vmem [shape: f32[1,128], index: 2, kind: input, shape index: {}]
  %s3 = inlined_call_operand.vmem [shape: bf16[128,128], index: 3, kind: input, shape index: {}]
  %s4 = inlined_call_operand.vmem [shape: f32[1,128], index: 4, kind: input, shape index: {}]
  %s5 = inlined_call_operand.vmem [shape: f32[1,128], index: 5, kind: input, shape index: {}]
  %s6 = inlined_call_operand.vmem [shape: f32[2,16,16,128], index: 6, kind: output, shape index: {}]
  %s7 = sld [smem:[#allocation0]]
  $region57: #{_depthwise_impl.1} parent=0
    _
  %s9 = ssub.s32 1, %s7
  %s10 = scalar_select 0, %s9, %s7
  loop: start=0, step=1, limit=4
  $region2: #{_depthwise_impl.1} parent=0 // loop_pre_header
    _
  $region3: #{_depthwise_impl.1} parent=0 // loop_header
    %s12 = sphi 0, %s16
    %p13 = scmp.ge.s32.totalorder %s12, 4
    %s19 = sphi 0, %s31
    %s20 = sphi 0, %s27
    %s21 = sphi 0, %s19
    %s22 = sphi 0, %s20
    %s23 = sphi 0, %s21
    %s24 = sphi 0, %s22
    %s34 = sphi 0, %s36
    %s37 = sphi 0, %s34
    %s38 = sphi 0, %s37
    %s54 = sphi 0, %s38
    %s58 = sphi 0, %s58
    %s60 = sphi 0, %s58
    %s61 = sphi 0, %s60
    %s75 = sphi 0, %s61
    %s79 = sphi 0, %s79
    %s81 = sphi 0, %s79
    %s82 = sphi 0, %s81
    %s96 = sphi 0, %s82
    %s100 = sphi 0, %s100
    %s102 = sphi 0, %s100
    %s103 = sphi 0, %s102
    %s117 = sphi 0, %s103
    %s121 = sphi 0, %s121
    %s123 = sphi 0, %s121
    %s124 = sphi 0, %s123
    %s138 = sphi 0, %s124
    %s142 = sphi 0, %s142
    %s144 = sphi 0, %s142
    %s145 = sphi 0, %s144
    %s159 = sphi 0, %s145
    %s167 = sphi 0, %s169
    %s170 = sphi 0, %s167
    %s171 = sphi 0, %s170
    %s187 = sphi 0, %s171
  $region4: #{_depthwise_impl.1} parent=0 // loop_header_branch
    %15 = sbr.rel (%p13) target = $region8
  $region5: #{_depthwise_impl.1} parent=0 // loop_body
    %s17 = ssub.s32 %s12, 1
    %s18 = ssub.s32 %s12, 2
    %s25 = sadd.s32 1, %s20
    %p26 = scmp.ge.s32.totalorder %s25, 1
    %s27 = scalar_select %p26, 0, %s25
    %s28 = sadd.s32 1, %s19
    %s29 = scalar_select %p26, %s28, %s19
    %p30 = scmp.ge.s32.totalorder %s29, 2
    %s31 = scalar_select %p30, 0, %s29
    %s32 = ssub.s32 %s19, %s31
    %p33 = scmp.eq.s32.totalorder %s32, 0
    %s35 = sadd.s32 %s34, 1
    %s36 = scalar_select %p33, %s34, %s35
    %p39 = pneg %p33
    %p40 = scmp.eq.s32.totalorder %s12, 1
    %p41 = por %p39, %p40
    %p42 = scmp.ne.s32.totalorder %s34, %s37
    %p43 = scmp.eq.s32.totalorder %s12, 0
    %p44 = por %p42, %p43
    %p45 = scmp.ne.s32.totalorder %s34, %s37
    %p46 = scmp.eq.s32.totalorder %s17, 1
    %p47 = por %p45, %p46
    %p48 = scmp.ne.s32.totalorder %s37, %s38
    %p49 = scmp.eq.s32.totalorder %s17, 0
    %p50 = por %p48, %p49
    %p51 = scmp.ne.s32.totalorder %s37, %s38
    %p52 = scmp.eq.s32.totalorder %s18, 1
    %p53 = por %p51, %p52
    %p55 = scmp.ne.s32.totalorder %s38, %s54
    %p56 = scmp.eq.s32.totalorder %s18, 0
    %p57 = por %p55, %p56
    %s59 = sadd.s32 %s58, 1
    %p62 = scmp.eq.s32.totalorder %s12, 1
    %p63 = scmp.ne.s32.totalorder %s58, %s60
    %p64 = scmp.eq.s32.totalorder %s12, 0
    %p65 = por %p63, %p64
    %p66 = scmp.ne.s32.totalorder %s58, %s60
    %p67 = scmp.eq.s32.totalorder %s17, 1
    %p68 = por %p66, %p67
    %p69 = scmp.ne.s32.totalorder %s60, %s61
    %p70 = scmp.eq.s32.totalorder %s17, 0
    %p71 = por %p69, %p70
    %p72 = scmp.ne.s32.totalorder %s60, %s61
    %p73 = scmp.eq.s32.totalorder %s18, 1
    %p74 = por %p72, %p73
    %p76 = scmp.ne.s32.totalorder %s61, %s75
    %p77 = scmp.eq.s32.totalorder %s18, 0
    %p78 = por %p76, %p77
    %s80 = sadd.s32 %s79, 1
    %p83 = scmp.eq.s32.totalorder %s12, 1
    %p84 = scmp.ne.s32.totalorder %s79, %s81
    %p85 = scmp.eq.s32.totalorder %s12, 0
    %p86 = por %p84, %p85
    %p87 = scmp.ne.s32.totalorder %s79, %s81
    %p88 = scmp.eq.s32.totalorder %s17, 1
    %p89 = por %p87, %p88
    %p90 = scmp.ne.s32.totalorder %s81, %s82
    %p91 = scmp.eq.s32.totalorder %s17, 0
    %p92 = por %p90, %p91
    %p93 = scmp.ne.s32.totalorder %s81, %s82
    %p94 = scmp.eq.s32.totalorder %s18, 1
    %p95 = por %p93, %p94
    %p97 = scmp.ne.s32.totalorder %s82, %s96
    %p98 = scmp.eq.s32.totalorder %s18, 0
    %p99 = por %p97, %p98
    %s101 = sadd.s32 %s100, 1
    %p104 = scmp.eq.s32.totalorder %s12, 1
    %p105 = scmp.ne.s32.totalorder %s100, %s102
    %p106 = scmp.eq.s32.totalorder %s12, 0
    %p107 = por %p105, %p106
    %p108 = scmp.ne.s32.totalorder %s100, %s102
    %p109 = scmp.eq.s32.totalorder %s17, 1
    %p110 = por %p108, %p109
    %p111 = scmp.ne.s32.totalorder %s102, %s103
    %p112 = scmp.eq.s32.totalorder %s17, 0
    %p113 = por %p111, %p112
    %p114 = scmp.ne.s32.totalorder %s102, %s103
    %p115 = scmp.eq.s32.totalorder %s18, 1
    %p116 = por %p114, %p115
    %p118 = scmp.ne.s32.totalorder %s103, %s117
    %p119 = scmp.eq.s32.totalorder %s18, 0
    %p120 = por %p118, %p119
    %s122 = sadd.s32 %s121, 1
    %p125 = scmp.eq.s32.totalorder %s12, 1
    %p126 = scmp.ne.s32.totalorder %s121, %s123
    %p127 = scmp.eq.s32.totalorder %s12, 0
    %p128 = por %p126, %p127
    %p129 = scmp.ne.s32.totalorder %s121, %s123
    %p130 = scmp.eq.s32.totalorder %s17, 1
    %p131 = por %p129, %p130
    %p132 = scmp.ne.s32.totalorder %s123, %s124
    %p133 = scmp.eq.s32.totalorder %s17, 0
    %p134 = por %p132, %p133
    %p135 = scmp.ne.s32.totalorder %s123, %s124
    %p136 = scmp.eq.s32.totalorder %s18, 1
    %p137 = por %p135, %p136
    %p139 = scmp.ne.s32.totalorder %s124, %s138
    %p140 = scmp.eq.s32.totalorder %s18, 0
    %p141 = por %p139, %p140
    %s143 = sadd.s32 %s142, 1
    %p146 = scmp.eq.s32.totalorder %s12, 1
    %p147 = scmp.ne.s32.totalorder %s142, %s144
    %p148 = scmp.eq.s32.totalorder %s12, 0
    %p149 = por %p147, %p148
    %p150 = scmp.ne.s32.totalorder %s142, %s144
    %p151 = scmp.eq.s32.totalorder %s17, 1
    %p152 = por %p150, %p151
    %p153 = scmp.ne.s32.totalorder %s144, %s145
    %p154 = scmp.eq.s32.totalorder %s17, 0
    %p155 = por %p153, %p154
    %p156 = scmp.ne.s32.totalorder %s144, %s145
    %p157 = scmp.eq.s32.totalorder %s18, 1
    %p158 = por %p156, %p157
    %p160 = scmp.ne.s32.totalorder %s145, %s159
    %p161 = scmp.eq.s32.totalorder %s18, 0
    %p162 = por %p160, %p161
    %s163 = ssub.s32 %s19, %s31
    %s164 = ssub.s32 %s20, %s27
    %s165 = sor.u32 %s163, %s164
    %p166 = scmp.eq.s32.totalorder %s165, 0
    %s168 = sadd.s32 %s167, 1
    %s169 = scalar_select %p166, %s167, %s168
    %p172 = pneg %p166
    %p173 = scmp.eq.s32.totalorder %s12, 1
    %p174 = por %p172, %p173
    %p175 = scmp.ne.s32.totalorder %s167, %s170
    %p176 = scmp.eq.s32.totalorder %s12, 0
    %p177 = por %p175, %p176
    %p178 = scmp.ne.s32.totalorder %s167, %s170
    %p179 = scmp.eq.s32.totalorder %s17, 1
    %p180 = por %p178, %p179
    %p181 = scmp.ne.s32.totalorder %s170, %s171
    %p182 = scmp.eq.s32.totalorder %s17, 0
    %p183 = por %p181, %p182
    %p184 = scmp.ne.s32.totalorder %s170, %s171
    %p185 = scmp.eq.s32.totalorder %s18, 1
    %p186 = por %p184, %p185
    %p188 = scmp.ne.s32.totalorder %s171, %s187
    %p189 = scmp.eq.s32.totalorder %s18, 0
    %p190 = por %p188, %p189
    %p191 = scmp.le.s32.totalorder 1, %s12
    %p192 = scmp.lt.s32.totalorder %s12, 3
    %p193 = pnand %p191, %p192
    %p194 = pneg %p193
    // Predicated region
    $region9: #{_depthwise_impl.1} parent=5 // pred_check
      _
    $region10: #{_depthwise_impl.1} parent=5 // pred_check_branch
      %196 = sbr.rel (%p193) target = $region12
    $region11: #{_depthwise_impl.1} parent=5 // pred_region
      %s197 = ssub.s32 %s12, 1
      // Predicated region
      $region13: #{_depthwise_impl.1} parent=11 // pred_check
        %p198 = pneg %p50
      $region14: #{_depthwise_impl.1} parent=11 // pred_check_branch
        %200 = sbr.rel (%p198) target = $region16
      $region15: #{_depthwise_impl.1} parent=11 // pred_region
        %p201 = scmp.lt.s32.totalorder %s21, 1
        %s202 = scalar_select %p201, %s21, 1
        %s203 = smul.addr %s202, 54
        %s204 = smul.addr %s203, 4
        %s205 = scalar_lea.vmem %s0, %s204
      $region16: #{_depthwise_impl.1} parent=11 // pred_fallthru
        _
      // Predicated region
      $region17: #{_depthwise_impl.1} parent=11 // pred_check
        %p206 = pneg %p71
      $region18: #{_depthwise_impl.1} parent=11 // pred_check_branch
        %208 = sbr.rel (%p206) target = $region20
      $region19: #{_depthwise_impl.1} parent=11 // pred_region
        _
      $region20: #{_depthwise_impl.1} parent=11 // pred_fallthru
        _
      // Predicated region
      $region21: #{_depthwise_impl.1} parent=11 // pred_check
        %p209 = pneg %p92
      $region22: #{_depthwise_impl.1} parent=11 // pred_check_branch
        %211 = sbr.rel (%p209) target = $region24
      $region23: #{_depthwise_impl.1} parent=11 // pred_region
        _
      $region24: #{_depthwise_impl.1} parent=11 // pred_fallthru
        _
      // Predicated region
      $region25: #{_depthwise_impl.1} parent=11 // pred_check
        %p212 = pneg %p113
      $region26: #{_depthwise_impl.1} parent=11 // pred_check_branch
        %214 = sbr.rel (%p212) target = $region28
      $region27: #{_depthwise_impl.1} parent=11 // pred_region
        _
      $region28: #{_depthwise_impl.1} parent=11 // pred_fallthru
        _
      // Predicated region
      $region29: #{_depthwise_impl.1} parent=11 // pred_check
        %p215 = pneg %p134
      $region30: #{_depthwise_impl.1} parent=11 // pred_check_branch
        %217 = sbr.rel (%p215) target = $region32
      $region31: #{_depthwise_impl.1} parent=11 // pred_region
        _
      $region32: #{_depthwise_impl.1} parent=11 // pred_fallthru
        _
      // Predicated region
      $region33: #{_depthwise_impl.1} parent=11 // pred_check
        %p218 = pneg %p155
      $region34: #{_depthwise_impl.1} parent=11 // pred_check_branch
        %220 = sbr.rel (%p218) target = $region36
      $region35: #{_depthwise_impl.1} parent=11 // pred_region
        _
      $region36: #{_depthwise_impl.1} parent=11 // pred_fallthru
        _
    $region12: #{_depthwise_impl.1} parent=5 // pred_fallthru
      _
    %p221 = scmp.lt.s32.totalorder %s12, 2
    // Predicated region
    $region37: #{_depthwise_impl.1} parent=5 // pred_check
      %p222 = pneg %p221
    $region38: #{_depthwise_impl.1} parent=5 // pred_check_branch
      %224 = sbr.rel (%p222) target = $region40
    $region39: #{_depthwise_impl.1} parent=5 // pred_region
      _
    $region40: #{_depthwise_impl.1} parent=5 // pred_fallthru
      _
    %p225 = scmp.le.s32.totalorder 1, %s12
    %p226 = scmp.lt.s32.totalorder %s12, 3
    %p227 = pnand %p225, %p226
    %p228 = pneg %p227
    // Predicated region
    $region41: #{_depthwise_impl.1} parent=5 // pred_check
      _
    $region42: #{_depthwise_impl.1} parent=5 // pred_check_branch
      %230 = sbr.rel (%p227) target = $region44
    $region43: #{_depthwise_impl.1} parent=5 // pred_region
      %s231 = ssub.s32 %s12, 1
      %p232 = scmp.lt.s32.totalorder %s21, 1
      %s233 = scalar_select %p232, %s21, 1
      %s234 = smul.addr %s233, 54
      %s235 = smul.addr %s234, 4
      %s236 = scalar_lea.vmem %s0, %s235
      %p237 = pneg %p50
      %p238 = pneg %p47
      %p239 = pneg %p71
      %p240 = pneg %p68
      %p241 = pneg %p92
      %p242 = pneg %p89
      %p243 = pneg %p113
      %p244 = pneg %p110
      %p245 = pneg %p134
      %p246 = pneg %p131
      %p247 = pneg %p155
      %p248 = pneg %p152
      %p249 = pneg %p183
      %p250 = pneg %p180
      %s251 = smul.u32 16, %s22
      %p252 = scmp.lt.s32.totalorder %s21, 1
      %s253 = scalar_select %p252, %s21, 1
      %p254 = scmp.lt.s32.totalorder %s251, 15
      %s255 = scalar_select %p254, %s251, 15
      %s256 = smul.addr %s255, 2
      %s257 = smul.addr %s253, 32
      %s258 = sadd.s32 %s256, %s257
      %s259 = smul.addr %s258, 8
      %s260 = scalar_lea.vmem %s6, %s259
      %p261 = scmp.lt.s32.totalorder %s21, 1
      %s262 = scalar_select %p261, %s21, 1
      %s263 = smul.addr %s262, 54
      %s264 = smul.addr %s263, 4
      %s265 = scalar_lea.vmem %s0, %s264
      %s266 = smul.u32 16, %s22
      %p267 = scmp.lt.s32.totalorder %s21, 1
      %s268 = scalar_select %p267, %s21, 1
      %p269 = scmp.lt.s32.totalorder %s266, 15
      %s270 = scalar_select %p269, %s266, 15
      %s271 = smul.addr %s270, 2
      %s272 = smul.addr %s268, 32
      %s273 = sadd.s32 %s271, %s272
      %s274 = smul.addr %s273, 8
      %s275 = scalar_lea.vmem %s6, %s274
      %s276 = smul.u32 16, %s22
      %s278 = smul.u32 %s22, 16
      %v279 = vld [vmem:[%s1] sm:$0x7]
      %v280 = vld [vmem:[%s1 + $0x4] sm:$0x7]
      %v281 = vld [vmem:[%s1 + $0x8] sm:$0x7]
      %s282 = smul.u32 %s278, 3
      %s283 = smul.addr %s282, 4
      %s284 = scalar_lea.vmem %s265, %s283
      %v285 = vld [vmem:[%s284] sm:$0xf]
      %v286 = vld [vmem:[%s284 + $0x4] sm:$0xf]
      %v287 = vld [vmem:[%s284 + $0xc] sm:$0xf]
      %v288 = vld [vmem:[%s284 + $0x10] sm:$0xf]
      %v289 = vld [vmem:[%s284 + $0x18] sm:$0xf]
      %v290 = vld [vmem:[%s284 + $0x1c] sm:$0xf]
      %v291 = vld [vmem:[%s284 + $0x24] sm:$0xf]
      %v292 = vld [vmem:[%s284 + $0x28] sm:$0xf]
      %v293 = vld [vmem:[%s284 + $0x30] sm:$0xf]
      %v294 = vld [vmem:[%s284 + $0x34] sm:$0xf]
      %v295 = vld [vmem:[%s284 + $0x3c] sm:$0xf]
      %v296 = vld [vmem:[%s284 + $0x40] sm:$0xf]
      %v297 = vld [vmem:[%s284 + $0x48] sm:$0xf]
      %v298 = vld [vmem:[%s284 + $0x4c] sm:$0xf]
      %v299 = vld [vmem:[%s284 + $0x54] sm:$0xf]
      %v300 = vld [vmem:[%s284 + $0x58] sm:$0xf]
      %v301 = vld [vmem:[%s284 + $0x60] sm:$0xf]
      %v302 = vld [vmem:[%s284 + $0x64] sm:$0xf]
      %v303 = vld [vmem:[%s284 + $0x6c] sm:$0xf]
      %v304 = vld [vmem:[%s284 + $0x70] sm:$0xf]
      %v305 = vld [vmem:[%s284 + $0x78] sm:$0xf]
      %v306 = vld [vmem:[%s284 + $0x7c] sm:$0xf]
      %v307 = vld [vmem:[%s284 + $0x84] sm:$0xf]
      %v308 = vld [vmem:[%s284 + $0x88] sm:$0xf]
      %v309 = vld [vmem:[%s284 + $0x90] sm:$0xf]
      %v310 = vld [vmem:[%s284 + $0x94] sm:$0xf]
      %v311 = vld [vmem:[%s284 + $0x9c] sm:$0xf]
      %v312 = vld [vmem:[%s284 + $0xa0] sm:$0xf]
      %v313 = vld [vmem:[%s284 + $0xa8] sm:$0xf]
      %v314 = vld [vmem:[%s284 + $0xac] sm:$0xf]
      %v315 = vld [vmem:[%s284 + $0xb4] sm:$0xf]
      %v316 = vld [vmem:[%s284 + $0xb8] sm:$0xf]
      %v317 = vunpack.c.l.bf16 %v285
      %v318 = vunpack.c.l.bf16 %v286
      %v319 = vunpack.c.l.bf16 %v287
      %v320 = vunpack.c.l.bf16 %v288
      %v321 = vunpack.c.l.bf16 %v289
      %v322 = vunpack.c.l.bf16 %v290
      %v323 = vunpack.c.l.bf16 %v291
      %v324 = vunpack.c.l.bf16 %v292
      %v325 = vunpack.c.l.bf16 %v293
      %v326 = vunpack.c.l.bf16 %v294
      %v327 = vunpack.c.l.bf16 %v295
      %v328 = vunpack.c.l.bf16 %v296
      %v329 = vunpack.c.l.bf16 %v297
      %v330 = vunpack.c.l.bf16 %v298
      %v331 = vunpack.c.l.bf16 %v299
      %v332 = vunpack.c.l.bf16 %v300
      %v333 = vunpack.c.l.bf16 %v301
      %v334 = vunpack.c.l.bf16 %v302
      %v335 = vunpack.c.l.bf16 %v303
      %v336 = vunpack.c.l.bf16 %v304
      %v337 = vunpack.c.l.bf16 %v305
      %v338 = vunpack.c.l.bf16 %v306
      %v339 = vunpack.c.l.bf16 %v307
      %v340 = vunpack.c.l.bf16 %v308
      %v341 = vunpack.c.l.bf16 %v309
      %v342 = vunpack.c.l.bf16 %v310
      %v343 = vunpack.c.l.bf16 %v311
      %v344 = vunpack.c.l.bf16 %v312
      %v345 = vunpack.c.l.bf16 %v313
      %v346 = vunpack.c.l.bf16 %v314
      %v347 = vunpack.c.l.bf16 %v315
      %v348 = vunpack.c.l.bf16 %v316
      %v349 = vlaneseq
      %v350 = vshrl.u32 %v349, 7
      %v351 = vsub.s32 0, %v350
      %v352 = vrot.slane %v279, %v351
      %v353 = vmul.f32 %v317, %v352
      %v354 = vmul.f32 %v318, %v352
      %v355 = vmul.f32 %v319, %v352
      %v356 = vmul.f32 %v320, %v352
      %v357 = vmul.f32 %v321, %v352
      %v358 = vmul.f32 %v322, %v352
      %v359 = vmul.f32 %v323, %v352
      %v360 = vmul.f32 %v324, %v352
      %v361 = vmul.f32 %v325, %v352
      %v362 = vmul.f32 %v326, %v352
      %v363 = vmul.f32 %v327, %v352
      %v364 = vmul.f32 %v328, %v352
      %v365 = vmul.f32 %v329, %v352
      %v366 = vmul.f32 %v330, %v352
      %v367 = vmul.f32 %v331, %v352
      %v368 = vmul.f32 %v332, %v352
      %v369 = vmul.f32 %v333, %v352
      %v370 = vmul.f32 %v334, %v352
      %v371 = vmul.f32 %v335, %v352
      %v372 = vmul.f32 %v336, %v352
      %v373 = vmul.f32 %v337, %v352
      %v374 = vmul.f32 %v338, %v352
      %v375 = vmul.f32 %v339, %v352
      %v376 = vmul.f32 %v340, %v352
      %v377 = vmul.f32 %v341, %v352
      %v378 = vmul.f32 %v342, %v352
      %v379 = vmul.f32 %v343, %v352
      %v380 = vmul.f32 %v344, %v352
      %v381 = vmul.f32 %v345, %v352
      %v382 = vmul.f32 %v346, %v352
      %v383 = vmul.f32 %v347, %v352
      %v384 = vmul.f32 %v348, %v352
      %v385 = vadd.f32 %v353, 0.0
      %v386 = vadd.f32 %v354, 0.0
      %v387 = vadd.f32 %v355, 0.0
      %v388 = vadd.f32 %v356, 0.0
      %v389 = vadd.f32 %v357, 0.0
      %v390 = vadd.f32 %v358, 0.0
      %v391 = vadd.f32 %v359, 0.0
      %v392 = vadd.f32 %v360, 0.0
      %v393 = vadd.f32 %v361, 0.0
      %v394 = vadd.f32 %v362, 0.0
      %v395 = vadd.f32 %v363, 0.0
      %v396 = vadd.f32 %v364, 0.0
      %v397 = vadd.f32 %v365, 0.0
      %v398 = vadd.f32 %v366, 0.0
      %v399 = vadd.f32 %v367, 0.0
      %v400 = vadd.f32 %v368, 0.0
      %v401 = vadd.f32 %v369, 0.0
      %v402 = vadd.f32 %v370, 0.0
      %v403 = vadd.f32 %v371, 0.0
      %v404 = vadd.f32 %v372, 0.0
      %v405 = vadd.f32 %v373, 0.0
      %v406 = vadd.f32 %v374, 0.0
      %v407 = vadd.f32 %v375, 0.0
      %v408 = vadd.f32 %v376, 0.0
      %v409 = vadd.f32 %v377, 0.0
      %v410 = vadd.f32 %v378, 0.0
      %v411 = vadd.f32 %v379, 0.0
      %v412 = vadd.f32 %v380, 0.0
      %v413 = vadd.f32 %v381, 0.0
      %v414 = vadd.f32 %v382, 0.0
      %v415 = vadd.f32 %v383, 0.0
      %v416 = vadd.f32 %v384, 0.0
      %v417 = vld [vmem:[%s284 + $0x8] sm:$0x1]
      %v418 = vld [vmem:[%s284 + $0x14] sm:$0x1]
      %v419 = vld [vmem:[%s284 + $0x20] sm:$0x1]
      %v420 = vld [vmem:[%s284 + $0x2c] sm:$0x1]
      %v421 = vld [vmem:[%s284 + $0x38] sm:$0x1]
      %v422 = vld [vmem:[%s284 + $0x44] sm:$0x1]
      %v423 = vld [vmem:[%s284 + $0x50] sm:$0x1]
      %v424 = vld [vmem:[%s284 + $0x5c] sm:$0x1]
      %v425 = vld [vmem:[%s284 + $0x68] sm:$0x1]
      %v426 = vld [vmem:[%s284 + $0x74] sm:$0x1]
      %v427 = vld [vmem:[%s284 + $0x80] sm:$0x1]
      %v428 = vld [vmem:[%s284 + $0x8c] sm:$0x1]
      %v429 = vld [vmem:[%s284 + $0x98] sm:$0x1]
      %v430 = vld [vmem:[%s284 + $0xa4] sm:$0x1]
      %v431 = vld [vmem:[%s284 + $0xb0] sm:$0x1]
      %v432 = vld [vmem:[%s284 + $0xbc] sm:$0x1]
      %v433 = vunpack.c.l.bf16 %v417
      %v434 = vunpack.c.l.bf16 %v418
      %v435 = vunpack.c.l.bf16 %v419
      %v436 = vunpack.c.l.bf16 %v420
      %v437 = vunpack.c.l.bf16 %v421
      %v438 = vunpack.c.l.bf16 %v422
      %v439 = vunpack.c.l.bf16 %v423
      %v440 = vunpack.c.l.bf16 %v424
      %v441 = vunpack.c.l.bf16 %v425
      %v442 = vunpack.c.l.bf16 %v426
      %v443 = vunpack.c.l.bf16 %v427
      %v444 = vunpack.c.l.bf16 %v428
      %v445 = vunpack.c.l.bf16 %v429
      %v446 = vunpack.c.l.bf16 %v430
      %v447 = vunpack.c.l.bf16 %v431
      %v448 = vunpack.c.l.bf16 %v432
      %v449 = vlaneseq
      %v450 = vshrl.u32 %v449, 7
      %v451 = vsub.s32 1, %v450
      %v452 = vrot.slane %v279, %v451
      %v453 = vmul.f32 %v317, %v452
      %v454 = vmul.f32 %v318, %v452
      %v455 = vmul.f32 %v433, %v452
      %v456 = vmul.f32 %v319, %v452
      %v457 = vmul.f32 %v320, %v452
      %v458 = vmul.f32 %v434, %v452
      %v459 = vmul.f32 %v321, %v452
      %v460 = vmul.f32 %v322, %v452
      %v461 = vmul.f32 %v435, %v452
      %v462 = vmul.f32 %v323, %v452
      %v463 = vmul.f32 %v324, %v452
      %v464 = vmul.f32 %v436, %v452
      %v465 = vmul.f32 %v325, %v452
      %v466 = vmul.f32 %v326, %v452
      %v467 = vmul.f32 %v437, %v452
      %v468 = vmul.f32 %v327, %v452
      %v469 = vmul.f32 %v328, %v452
      %v470 = vmul.f32 %v438, %v452
      %v471 = vmul.f32 %v329, %v452
      %v472 = vmul.f32 %v330, %v452
      %v473 = vmul.f32 %v439, %v452
      %v474 = vmul.f32 %v331, %v452
      %v475 = vmul.f32 %v332, %v452
      %v476 = vmul.f32 %v440, %v452
      %v477 = vmul.f32 %v333, %v452
      %v478 = vmul.f32 %v334, %v452
      %v479 = vmul.f32 %v441, %v452
      %v480 = vmul.f32 %v335, %v452
      %v481 = vmul.f32 %v336, %v452
      %v482 = vmul.f32 %v442, %v452
      %v483 = vmul.f32 %v337, %v452
      %v484 = vmul.f32 %v338, %v452
      %v485 = vmul.f32 %v443, %v452
      %v486 = vmul.f32 %v339, %v452
      %v487 = vmul.f32 %v340, %v452
      %v488 = vmul.f32 %v444, %v452
      %v489 = vmul.f32 %v341, %v452
      %v490 = vmul.f32 %v342, %v452
      %v491 = vmul.f32 %v445, %v452
      %v492 = vmul.f32 %v343, %v452
      %v493 = vmul.f32 %v344, %v452
      %v494 = vmul.f32 %v446, %v452
      %v495 = vmul.f32 %v345, %v452
      %v496 = vmul.f32 %v346, %v452
      %v497 = vmul.f32 %v447, %v452
      %v498 = vmul.f32 %v347, %v452
      %v499 = vmul.f32 %v348, %v452
      %v500 = vmul.f32 %v448, %v452
      %vm549 = vcmask 1046528
      %v550 = vrot.slane %v453, 1
      %v551 = vrot.slane %v454, 1
      %v552 = vsel %vm549, %v550, %v551
      %v553 = vrot.slane %v455, 1
      %v554 = vsel %vm549, %v551, %v553
      %v555 = vrot.slane %v456, 1
      %v556 = vrot.slane %v457, 1
      %v557 = vsel %vm549, %v555, %v556
      %v558 = vrot.slane %v458, 1
      %v559 = vsel %vm549, %v556, %v558
      %v560 = vrot.slane %v459, 1
      %v561 = vrot.slane %v460, 1
      %v562 = vsel %vm549, %v560, %v561
      %v563 = vrot.slane %v461, 1
      %v564 = vsel %vm549, %v561, %v563
      %v565 = vrot.slane %v462, 1
      %v566 = vrot.slane %v463, 1
      %v567 = vsel %vm549, %v565, %v566
      %v568 = vrot.slane %v464, 1
      %v569 = vsel %vm549, %v566, %v568
      %v570 = vrot.slane %v465, 1
      %v571 = vrot.slane %v466, 1
      %v572 = vsel %vm549, %v570, %v571
      %v573 = vrot.slane %v467, 1
      %v574 = vsel %vm549, %v571, %v573
      %v575 = vrot.slane %v468, 1
      %v576 = vrot.slane %v469, 1
      %v577 = vsel %vm549, %v575, %v576
      %v578 = vrot.slane %v470, 1
      %v579 = vsel %vm549, %v576, %v578
      %v580 = vrot.slane %v471, 1
      %v581 = vrot.slane %v472, 1
      %v582 = vsel %vm549, %v580, %v581
      %v583 = vrot.slane %v473, 1
      %v584 = vsel %vm549, %v581, %v583
      %v585 = vrot.slane %v474, 1
      %v586 = vrot.slane %v475, 1
      %v587 = vsel %vm549, %v585, %v586
      %v588 = vrot.slane %v476, 1
      %v589 = vsel %vm549, %v586, %v588
      %v590 = vrot.slane %v477, 1
      %v591 = vrot.slane %v478, 1
      %v592 = vsel %vm549, %v590, %v591
      %v593 = vrot.slane %v479, 1
      %v594 = vsel %vm549, %v591, %v593
      %v595 = vrot.slane %v480, 1
      %v596 = vrot.slane %v481, 1
      %v597 = vsel %vm549, %v595, %v596
      %v598 = vrot.slane %v482, 1
      %v599 = vsel %vm549, %v596, %v598
      %v600 = vrot.slane %v483, 1
      %v601 = vrot.slane %v484, 1
      %v602 = vsel %vm549, %v600, %v601
      %v603 = vrot.slane %v485, 1
      %v604 = vsel %vm549, %v601, %v603
      %v605 = vrot.slane %v486, 1
      %v606 = vrot.slane %v487, 1
      %v607 = vsel %vm549, %v605, %v606
      %v608 = vrot.slane %v488, 1
      %v609 = vsel %vm549, %v606, %v608
      %v610 = vrot.slane %v489, 1
      %v611 = vrot.slane %v490, 1
      %v612 = vsel %vm549, %v610, %v611
      %v613 = vrot.slane %v491, 1
      %v614 = vsel %vm549, %v611, %v613
      %v615 = vrot.slane %v492, 1
      %v616 = vrot.slane %v493, 1
      %v617 = vsel %vm549, %v615, %v616
      %v618 = vrot.slane %v494, 1
      %v619 = vsel %vm549, %v616, %v618
      %v620 = vrot.slane %v495, 1
      %v621 = vrot.slane %v496, 1
      %v622 = vsel %vm549, %v620, %v621
      %v623 = vrot.slane %v497, 1
      %v624 = vsel %vm549, %v621, %v623
      %v625 = vrot.slane %v498, 1
      %v626 = vrot.slane %v499, 1
      %v627 = vsel %vm549, %v625, %v626
      %v628 = vrot.slane %v500, 1
      %v629 = vsel %vm549, %v626, %v628
      %v662 = vadd.f32 %v385, %v552
      %v663 = vadd.f32 %v386, %v554
      %v664 = vadd.f32 %v387, %v557
      %v665 = vadd.f32 %v388, %v559
      %v666 = vadd.f32 %v389, %v562
      %v667 = vadd.f32 %v390, %v564
      %v668 = vadd.f32 %v391, %v567
      %v669 = vadd.f32 %v392, %v569
      %v670 = vadd.f32 %v393, %v572
      %v671 = vadd.f32 %v394, %v574
      %v672 = vadd.f32 %v395, %v577
      %v673 = vadd.f32 %v396, %v579
      %v674 = vadd.f32 %v397, %v582
      %v675 = vadd.f32 %v398, %v584
      %v676 = vadd.f32 %v399, %v587
      %v677 = vadd.f32 %v400, %v589
      %v678 = vadd.f32 %v401, %v592
      %v679 = vadd.f32 %v402, %v594
      %v680 = vadd.f32 %v403, %v597
      %v681 = vadd.f32 %v404, %v599
      %v682 = vadd.f32 %v405, %v602
      %v683 = vadd.f32 %v406, %v604
      %v684 = vadd.f32 %v407, %v607
      %v685 = vadd.f32 %v408, %v609
      %v686 = vadd.f32 %v409, %v612
      %v687 = vadd.f32 %v410, %v614
      %v688 = vadd.f32 %v411, %v617
      %v689 = vadd.f32 %v412, %v619
      %v690 = vadd.f32 %v413, %v622
      %v691 = vadd.f32 %v414, %v624
      %v692 = vadd.f32 %v415, %v627
      %v693 = vadd.f32 %v416, %v629
      %v694 = vld [vmem:[%s284] sm:$0xe]
      %v695 = vld [vmem:[%s284 + $0xc] sm:$0xe]
      %v696 = vld [vmem:[%s284 + $0x18] sm:$0xe]
      %v697 = vld [vmem:[%s284 + $0x24] sm:$0xe]
      %v698 = vld [vmem:[%s284 + $0x30] sm:$0xe]
      %v699 = vld [vmem:[%s284 + $0x3c] sm:$0xe]
      %v700 = vld [vmem:[%s284 + $0x48] sm:$0xe]
      %v701 = vld [vmem:[%s284 + $0x54] sm:$0xe]
      %v702 = vld [vmem:[%s284 + $0x60] sm:$0xe]
      %v703 = vld [vmem:[%s284 + $0x6c] sm:$0xe]
      %v704 = vld [vmem:[%s284 + $0x78] sm:$0xe]
      %v705 = vld [vmem:[%s284 + $0x84] sm:$0xe]
      %v706 = vld [vmem:[%s284 + $0x90] sm:$0xe]
      %v707 = vld [vmem:[%s284 + $0x9c] sm:$0xe]
      %v708 = vld [vmem:[%s284 + $0xa8] sm:$0xe]
      %v709 = vld [vmem:[%s284 + $0xb4] sm:$0xe]
      %v710 = vunpack.c.l.bf16 %v694
      %v711 = vunpack.c.l.bf16 %v695
      %v712 = vunpack.c.l.bf16 %v696
      %v713 = vunpack.c.l.bf16 %v697
      %v714 = vunpack.c.l.bf16 %v698
      %v715 = vunpack.c.l.bf16 %v699
      %v716 = vunpack.c.l.bf16 %v700
      %v717 = vunpack.c.l.bf16 %v701
      %v718 = vunpack.c.l.bf16 %v702
      %v719 = vunpack.c.l.bf16 %v703
      %v720 = vunpack.c.l.bf16 %v704
      %v721 = vunpack.c.l.bf16 %v705
      %v722 = vunpack.c.l.bf16 %v706
      %v723 = vunpack.c.l.bf16 %v707
      %v724 = vunpack.c.l.bf16 %v708
      %v725 = vunpack.c.l.bf16 %v709
      %v726 = vlaneseq
      %v727 = vshrl.u32 %v726, 7
      %v728 = vsub.s32 2, %v727
      %v729 = vrot.slane %v279, %v728
      %v730 = vmul.f32 %v710, %v729
      %v731 = vmul.f32 %v318, %v729
      %v732 = vmul.f32 %v433, %v729
      %v733 = vmul.f32 %v711, %v729
      %v734 = vmul.f32 %v320, %v729
      %v735 = vmul.f32 %v434, %v729
      %v736 = vmul.f32 %v712, %v729
      %v737 = vmul.f32 %v322, %v729
      %v738 = vmul.f32 %v435, %v729
      %v739 = vmul.f32 %v713, %v729
      %v740 = vmul.f32 %v324, %v729
      %v741 = vmul.f32 %v436, %v729
      %v742 = vmul.f32 %v714, %v729
      %v743 = vmul.f32 %v326, %v729
      %v744 = vmul.f32 %v437, %v729
      %v745 = vmul.f32 %v715, %v729
      %v746 = vmul.f32 %v328, %v729
      %v747 = vmul.f32 %v438, %v729
      %v748 = vmul.f32 %v716, %v729
      %v749 = vmul.f32 %v330, %v729
      %v750 = vmul.f32 %v439, %v729
      %v751 = vmul.f32 %v717, %v729
      %v752 = vmul.f32 %v332, %v729
      %v753 = vmul.f32 %v440, %v729
      %v754 = vmul.f32 %v718, %v729
      %v755 = vmul.f32 %v334, %v729
      %v756 = vmul.f32 %v441, %v729
      %v757 = vmul.f32 %v719, %v729
      %v758 = vmul.f32 %v336, %v729
      %v759 = vmul.f32 %v442, %v729
      %v760 = vmul.f32 %v720, %v729
      %v761 = vmul.f32 %v338, %v729
      %v762 = vmul.f32 %v443, %v729
      %v763 = vmul.f32 %v721, %v729
      %v764 = vmul.f32 %v340, %v729
      %v765 = vmul.f32 %v444, %v729
      %v766 = vmul.f32 %v722, %v729
      %v767 = vmul.f32 %v342, %v729
      %v768 = vmul.f32 %v445, %v729
      %v769 = vmul.f32 %v723, %v729
      %v770 = vmul.f32 %v344, %v729
      %v771 = vmul.f32 %v446, %v729
      %v772 = vmul.f32 %v724, %v729
      %v773 = vmul.f32 %v346, %v729
      %v774 = vmul.f32 %v447, %v729
      %v775 = vmul.f32 %v725, %v729
      %v776 = vmul.f32 %v348, %v729
      %v777 = vmul.f32 %v448, %v729
      %vm826 = vcmask 1045504
      %v827 = vrot.slane %v730, 2
      %v828 = vrot.slane %v731, 2
      %v829 = vsel %vm826, %v827, %v828
      %v830 = vrot.slane %v732, 2
      %v831 = vsel %vm826, %v828, %v830
      %v832 = vrot.slane %v733, 2
      %v833 = vrot.slane %v734, 2
      %v834 = vsel %vm826, %v832, %v833
      %v835 = vrot.slane %v735, 2
      %v836 = vsel %vm826, %v833, %v835
      %v837 = vrot.slane %v736, 2
      %v838 = vrot.slane %v737, 2
      %v839 = vsel %vm826, %v837, %v838
      %v840 = vrot.slane %v738, 2
      %v841 = vsel %vm826, %v838, %v840
      %v842 = vrot.slane %v739, 2
      %v843 = vrot.slane %v740, 2
      %v844 = vsel %vm826, %v842, %v843
      %v845 = vrot.slane %v741, 2
      %v846 = vsel %vm826, %v843, %v845
      %v847 = vrot.slane %v742, 2
      %v848 = vrot.slane %v743, 2
      %v849 = vsel %vm826, %v847, %v848
      %v850 = vrot.slane %v744, 2
      %v851 = vsel %vm826, %v848, %v850
      %v852 = vrot.slane %v745, 2
      %v853 = vrot.slane %v746, 2
      %v854 = vsel %vm826, %v852, %v853
      %v855 = vrot.slane %v747, 2
      %v856 = vsel %vm826, %v853, %v855
      %v857 = vrot.slane %v748, 2
      %v858 = vrot.slane %v749, 2
      %v859 = vsel %vm826, %v857, %v858
      %v860 = vrot.slane %v750, 2
      %v861 = vsel %vm826, %v858, %v860
      %v862 = vrot.slane %v751, 2
      %v863 = vrot.slane %v752, 2
      %v864 = vsel %vm826, %v862, %v863
      %v865 = vrot.slane %v753, 2
      %v866 = vsel %vm826, %v863, %v865
      %v867 = vrot.slane %v754, 2
      %v868 = vrot.slane %v755, 2
      %v869 = vsel %vm826, %v867, %v868
      %v870 = vrot.slane %v756, 2
      %v871 = vsel %vm826, %v868, %v870
      %v872 = vrot.slane %v757, 2
      %v873 = vrot.slane %v758, 2
      %v874 = vsel %vm826, %v872, %v873
      %v875 = vrot.slane %v759, 2
      %v876 = vsel %vm826, %v873, %v875
      %v877 = vrot.slane %v760, 2
      %v878 = vrot.slane %v761, 2
      %v879 = vsel %vm826, %v877, %v878
      %v880 = vrot.slane %v762, 2
      %v881 = vsel %vm826, %v878, %v880
      %v882 = vrot.slane %v763, 2
      %v883 = vrot.slane %v764, 2
      %v884 = vsel %vm826, %v882, %v883
      %v885 = vrot.slane %v765, 2
      %v886 = vsel %vm826, %v883, %v885
      %v887 = vrot.slane %v766, 2
      %v888 = vrot.slane %v767, 2
      %v889 = vsel %vm826, %v887, %v888
      %v890 = vrot.slane %v768, 2
      %v891 = vsel %vm826, %v888, %v890
      %v892 = vrot.slane %v769, 2
      %v893 = vrot.slane %v770, 2
      %v894 = vsel %vm826, %v892, %v893
      %v895 = vrot.slane %v771, 2
      %v896 = vsel %vm826, %v893, %v895
      %v897 = vrot.slane %v772, 2
      %v898 = vrot.slane %v773, 2
      %v899 = vsel %vm826, %v897, %v898
      %v900 = vrot.slane %v774, 2
      %v901 = vsel %vm826, %v898, %v900
      %v902 = vrot.slane %v775, 2
      %v903 = vrot.slane %v776, 2
      %v904 = vsel %vm826, %v902, %v903
      %v905 = vrot.slane %v777, 2
      %v906 = vsel %vm826, %v903, %v905
      %v939 = vadd.f32 %v662, %v829
      %v940 = vadd.f32 %v663, %v831
      %v941 = vadd.f32 %v664, %v834
      %v942 = vadd.f32 %v665, %v836
      %v943 = vadd.f32 %v666, %v839
      %v944 = vadd.f32 %v667, %v841
      %v945 = vadd.f32 %v668, %v844
      %v946 = vadd.f32 %v669, %v846
      %v947 = vadd.f32 %v670, %v849
      %v948 = vadd.f32 %v671, %v851
      %v949 = vadd.f32 %v672, %v854
      %v950 = vadd.f32 %v673, %v856
      %v951 = vadd.f32 %v674, %v859
      %v952 = vadd.f32 %v675, %v861
      %v953 = vadd.f32 %v676, %v864
      %v954 = vadd.f32 %v677, %v866
      %v955 = vadd.f32 %v678, %v869
      %v956 = vadd.f32 %v679, %v871
      %v957 = vadd.f32 %v680, %v874
      %v958 = vadd.f32 %v681, %v876
      %v959 = vadd.f32 %v682, %v879
      %v960 = vadd.f32 %v683, %v881
      %v961 = vadd.f32 %v684, %v884
      %v962 = vadd.f32 %v685, %v886
      %v963 = vadd.f32 %v686, %v889
      %v964 = vadd.f32 %v687, %v891
      %v965 = vadd.f32 %v688, %v894
      %v966 = vadd.f32 %v689, %v896
      %v967 = vadd.f32 %v690, %v899
      %v968 = vadd.f32 %v691, %v901
      %v969 = vadd.f32 %v692, %v904
      %v970 = vadd.f32 %v693, %v906
      %s971 = sadd.s32 %s278, 1
      %s972 = smul.u32 %s971, 3
      %s973 = smul.addr %s972, 4
      %s974 = scalar_lea.vmem %s265, %s973
      %v975 = vld [vmem:[%s974] sm:$0xf]
      %v976 = vld [vmem:[%s974 + $0x4] sm:$0xf]
      %v977 = vld [vmem:[%s974 + $0xc] sm:$0xf]
      %v978 = vld [vmem:[%s974 + $0x10] sm:$0xf]
      %v979 = vld [vmem:[%s974 + $0x18] sm:$0xf]
      %v980 = vld [vmem:[%s974 + $0x1c] sm:$0xf]
      %v981 = vld [vmem:[%s974 + $0x24] sm:$0xf]
      %v982 = vld [vmem:[%s974 + $0x28] sm:$0xf]
      %v983 = vld [vmem:[%s974 + $0x30] sm:$0xf]
      %v984 = vld [vmem:[%s974 + $0x34] sm:$0xf]
      %v985 = vld [vmem:[%s974 + $0x3c] sm:$0xf]
      %v986 = vld [vmem:[%s974 + $0x40] sm:$0xf]
      %v987 = vld [vmem:[%s974 + $0x48] sm:$0xf]
      %v988 = vld [vmem:[%s974 + $0x4c] sm:$0xf]
      %v989 = vld [vmem:[%s974 + $0x54] sm:$0xf]
      %v990 = vld [vmem:[%s974 + $0x58] sm:$0xf]
      %v991 = vld [vmem:[%s974 + $0x60] sm:$0xf]
      %v992 = vld [vmem:[%s974 + $0x64] sm:$0xf]
      %v993 = vld [vmem:[%s974 + $0x6c] sm:$0xf]
      %v994 = vld [vmem:[%s974 + $0x70] sm:$0xf]
      %v995 = vld [vmem:[%s974 + $0x78] sm:$0xf]
      %v996 = vld [vmem:[%s974 + $0x7c] sm:$0xf]
      %v997 = vld [vmem:[%s974 + $0x84] sm:$0xf]
      %v998 = vld [vmem:[%s974 + $0x88] sm:$0xf]
      %v999 = vld [vmem:[%s974 + $0x90] sm:$0xf]
      %v1000 = vld [vmem:[%s974 + $0x94] sm:$0xf]
      %v1001 = vld [vmem:[%s974 + $0x9c] sm:$0xf]
      %v1002 = vld [vmem:[%s974 + $0xa0] sm:$0xf]
      %v1003 = vld [vmem:[%s974 + $0xa8] sm:$0xf]
      %v1004 = vld [vmem:[%s974 + $0xac] sm:$0xf]
      %v1005 = vld [vmem:[%s974 + $0xb4] sm:$0xf]
      %v1006 = vld [vmem:[%s974 + $0xb8] sm:$0xf]
      %v1007 = vunpack.c.l.bf16 %v975
      %v1008 = vunpack.c.l.bf16 %v976
      %v1009 = vunpack.c.l.bf16 %v977
      %v1010 = vunpack.c.l.bf16 %v978
      %v1011 = vunpack.c.l.bf16 %v979
      %v1012 = vunpack.c.l.bf16 %v980
      %v1013 = vunpack.c.l.bf16 %v981
      %v1014 = vunpack.c.l.bf16 %v982
      %v1015 = vunpack.c.l.bf16 %v983
      %v1016 = vunpack.c.l.bf16 %v984
      %v1017 = vunpack.c.l.bf16 %v985
      %v1018 = vunpack.c.l.bf16 %v986
      %v1019 = vunpack.c.l.bf16 %v987
      %v1020 = vunpack.c.l.bf16 %v988
      %v1021 = vunpack.c.l.bf16 %v989
      %v1022 = vunpack.c.l.bf16 %v990
      %v1023 = vunpack.c.l.bf16 %v991
      %v1024 = vunpack.c.l.bf16 %v992
      %v1025 = vunpack.c.l.bf16 %v993
      %v1026 = vunpack.c.l.bf16 %v994
      %v1027 = vunpack.c.l.bf16 %v995
      %v1028 = vunpack.c.l.bf16 %v996
      %v1029 = vunpack.c.l.bf16 %v997
      %v1030 = vunpack.c.l.bf16 %v998
      %v1031 = vunpack.c.l.bf16 %v999
      %v1032 = vunpack.c.l.bf16 %v1000
      %v1033 = vunpack.c.l.bf16 %v1001
      %v1034 = vunpack.c.l.bf16 %v1002
      %v1035 = vunpack.c.l.bf16 %v1003
      %v1036 = vunpack.c.l.bf16 %v1004
      %v1037 = vunpack.c.l.bf16 %v1005
      %v1038 = vunpack.c.l.bf16 %v1006
      %v1039 = vlaneseq
      %v1040 = vshrl.u32 %v1039, 7
      %v1041 = vsub.s32 0, %v1040
      %v1042 = vrot.slane %v280, %v1041
      %v1043 = vmul.f32 %v1007, %v1042
      %v1044 = vmul.f32 %v1008, %v1042
      %v1045 = vmul.f32 %v1009, %v1042
      %v1046 = vmul.f32 %v1010, %v1042
      %v1047 = vmul.f32 %v1011, %v1042
      %v1048 = vmul.f32 %v1012, %v1042
      %v1049 = vmul.f32 %v1013, %v1042
      %v1050 = vmul.f32 %v1014, %v1042
      %v1051 = vmul.f32 %v1015, %v1042
      %v1052 = vmul.f32 %v1016, %v1042
      %v1053 = vmul.f32 %v1017, %v1042
      %v1054 = vmul.f32 %v1018, %v1042
      %v1055 = vmul.f32 %v1019, %v1042
      %v1056 = vmul.f32 %v1020, %v1042
      %v1057 = vmul.f32 %v1021, %v1042
      %v1058 = vmul.f32 %v1022, %v1042
      %v1059 = vmul.f32 %v1023, %v1042
      %v1060 = vmul.f32 %v1024, %v1042
      %v1061 = vmul.f32 %v1025, %v1042
      %v1062 = vmul.f32 %v1026, %v1042
      %v1063 = vmul.f32 %v1027, %v1042
      %v1064 = vmul.f32 %v1028, %v1042
      %v1065 = vmul.f32 %v1029, %v1042
      %v1066 = vmul.f32 %v1030, %v1042
      %v1067 = vmul.f32 %v1031, %v1042
      %v1068 = vmul.f32 %v1032, %v1042
      %v1069 = vmul.f32 %v1033, %v1042
      %v1070 = vmul.f32 %v1034, %v1042
      %v1071 = vmul.f32 %v1035, %v1042
      %v1072 = vmul.f32 %v1036, %v1042
      %v1073 = vmul.f32 %v1037, %v1042
      %v1074 = vmul.f32 %v1038, %v1042
      %v1075 = vadd.f32 %v939, %v1043
      %v1076 = vadd.f32 %v940, %v1044
      %v1077 = vadd.f32 %v941, %v1045
      %v1078 = vadd.f32 %v942, %v1046
      %v1079 = vadd.f32 %v943, %v1047
      %v1080 = vadd.f32 %v944, %v1048
      %v1081 = vadd.f32 %v945, %v1049
      %v1082 = vadd.f32 %v946, %v1050
      %v1083 = vadd.f32 %v947, %v1051
      %v1084 = vadd.f32 %v948, %v1052
      %v1085 = vadd.f32 %v949, %v1053
      %v1086 = vadd.f32 %v950, %v1054
      %v1087 = vadd.f32 %v951, %v1055
      %v1088 = vadd.f32 %v952, %v1056
      %v1089 = vadd.f32 %v953, %v1057
      %v1090 = vadd.f32 %v954, %v1058
      %v1091 = vadd.f32 %v955, %v1059
      %v1092 = vadd.f32 %v956, %v1060
      %v1093 = vadd.f32 %v957, %v1061
      %v1094 = vadd.f32 %v958, %v1062
      %v1095 = vadd.f32 %v959, %v1063
      %v1096 = vadd.f32 %v960, %v1064
      %v1097 = vadd.f32 %v961, %v1065
      %v1098 = vadd.f32 %v962, %v1066
      %v1099 = vadd.f32 %v963, %v1067
      %v1100 = vadd.f32 %v964, %v1068
      %v1101 = vadd.f32 %v965, %v1069
      %v1102 = vadd.f32 %v966, %v1070
      %v1103 = vadd.f32 %v967, %v1071
      %v1104 = vadd.f32 %v968, %v1072
      %v1105 = vadd.f32 %v969, %v1073
      %v1106 = vadd.f32 %v970, %v1074
      %v1107 = vld [vmem:[%s974 + $0x8] sm:$0x1]
      %v1108 = vld [vmem:[%s974 + $0x14] sm:$0x1]
      %v1109 = vld [vmem:[%s974 + $0x20] sm:$0x1]
      %v1110 = vld [vmem:[%s974 + $0x2c] sm:$0x1]
      %v1111 = vld [vmem:[%s974 + $0x38] sm:$0x1]
      %v1112 = vld [vmem:[%s974 + $0x44] sm:$0x1]
      %v1113 = vld [vmem:[%s974 + $0x50] sm:$0x1]
      %v1114 = vld [vmem:[%s974 + $0x5c] sm:$0x1]
      %v1115 = vld [vmem:[%s974 + $0x68] sm:$0x1]
      %v1116 = vld [vmem:[%s974 + $0x74] sm:$0x1]
      %v1117 = vld [vmem:[%s974 + $0x80] sm:$0x1]
      %v1118 = vld [vmem:[%s974 + $0x8c] sm:$0x1]
      %v1119 = vld [vmem:[%s974 + $0x98] sm:$0x1]
      %v1120 = vld [vmem:[%s974 + $0xa4] sm:$0x1]
      %v1121 = vld [vmem:[%s974 + $0xb0] sm:$0x1]
      %v1122 = vld [vmem:[%s974 + $0xbc] sm:$0x1]
      %v1123 = vunpack.c.l.bf16 %v1107
      %v1124 = vunpack.c.l.bf16 %v1108
      %v1125 = vunpack.c.l.bf16 %v1109
      %v1126 = vunpack.c.l.bf16 %v1110
      %v1127 = vunpack.c.l.bf16 %v1111
      %v1128 = vunpack.c.l.bf16 %v1112
      %v1129 = vunpack.c.l.bf16 %v1113
      %v1130 = vunpack.c.l.bf16 %v1114
      %v1131 = vunpack.c.l.bf16 %v1115
      %v1132 = vunpack.c.l.bf16 %v1116
      %v1133 = vunpack.c.l.bf16 %v1117
      %v1134 = vunpack.c.l.bf16 %v1118
      %v1135 = vunpack.c.l.bf16 %v1119
      %v1136 = vunpack.c.l.bf16 %v1120
      %v1137 = vunpack.c.l.bf16 %v1121
      %v1138 = vunpack.c.l.bf16 %v1122
      %v1139 = vlaneseq
      %v1140 = vshrl.u32 %v1139, 7
      %v1141 = vsub.s32 1, %v1140
      %v1142 = vrot.slane %v280, %v1141
      %v1143 = vmul.f32 %v1007, %v1142
      %v1144 = vmul.f32 %v1008, %v1142
      %v1145 = vmul.f32 %v1123, %v1142
      %v1146 = vmul.f32 %v1009, %v1142
      %v1147 = vmul.f32 %v1010, %v1142
      %v1148 = vmul.f32 %v1124, %v1142
      %v1149 = vmul.f32 %v1011, %v1142
      %v1150 = vmul.f32 %v1012, %v1142
      %v1151 = vmul.f32 %v1125, %v1142
      %v1152 = vmul.f32 %v1013, %v1142
      %v1153 = vmul.f32 %v1014, %v1142
      %v1154 = vmul.f32 %v1126, %v1142
      %v1155 = vmul.f32 %v1015, %v1142
      %v1156 = vmul.f32 %v1016, %v1142
      %v1157 = vmul.f32 %v1127, %v1142
      %v1158 = vmul.f32 %v1017, %v1142
      %v1159 = vmul.f32 %v1018, %v1142
      %v1160 = vmul.f32 %v1128, %v1142
      %v1161 = vmul.f32 %v1019, %v1142
      %v1162 = vmul.f32 %v1020, %v1142
      %v1163 = vmul.f32 %v1129, %v1142
      %v1164 = vmul.f32 %v1021, %v1142
      %v1165 = vmul.f32 %v1022, %v1142
      %v1166 = vmul.f32 %v1130, %v1142
      %v1167 = vmul.f32 %v1023, %v1142
      %v1168 = vmul.f32 %v1024, %v1142
      %v1169 = vmul.f32 %v1131, %v1142
      %v1170 = vmul.f32 %v1025, %v1142
      %v1171 = vmul.f32 %v1026, %v1142
      %v1172 = vmul.f32 %v1132, %v1142
      %v1173 = vmul.f32 %v1027, %v1142
      %v1174 = vmul.f32 %v1028, %v1142
      %v1175 = vmul.f32 %v1133, %v1142
      %v1176 = vmul.f32 %v1029, %v1142
      %v1177 = vmul.f32 %v1030, %v1142
      %v1178 = vmul.f32 %v1134, %v1142
      %v1179 = vmul.f32 %v1031, %v1142
      %v1180 = vmul.f32 %v1032, %v1142
      %v1181 = vmul.f32 %v1135, %v1142
      %v1182 = vmul.f32 %v1033, %v1142
      %v1183 = vmul.f32 %v1034, %v1142
      %v1184 = vmul.f32 %v1136, %v1142
      %v1185 = vmul.f32 %v1035, %v1142
      %v1186 = vmul.f32 %v1036, %v1142
      %v1187 = vmul.f32 %v1137, %v1142
      %v1188 = vmul.f32 %v1037, %v1142
      %v1189 = vmul.f32 %v1038, %v1142
      %v1190 = vmul.f32 %v1138, %v1142
      %v1239 = vrot.slane %v1143, 1
      %v1240 = vrot.slane %v1144, 1
      %v1241 = vsel %vm549, %v1239, %v1240
      %v1242 = vrot.slane %v1145, 1
      %v1243 = vsel %vm549, %v1240, %v1242
      %v1244 = vrot.slane %v1146, 1
      %v1245 = vrot.slane %v1147, 1
      %v1246 = vsel %vm549, %v1244, %v1245
      %v1247 = vrot.slane %v1148, 1
      %v1248 = vsel %vm549, %v1245, %v1247
      %v1249 = vrot.slane %v1149, 1
      %v1250 = vrot.slane %v1150, 1
      %v1251 = vsel %vm549, %v1249, %v1250
      %v1252 = vrot.slane %v1151, 1
      %v1253 = vsel %vm549, %v1250, %v1252
      %v1254 = vrot.slane %v1152, 1
      %v1255 = vrot.slane %v1153, 1
      %v1256 = vsel %vm549, %v1254, %v1255
      %v1257 = vrot.slane %v1154, 1
      %v1258 = vsel %vm549, %v1255, %v1257
      %v1259 = vrot.slane %v1155, 1
      %v1260 = vrot.slane %v1156, 1
      %v1261 = vsel %vm549, %v1259, %v1260
      %v1262 = vrot.slane %v1157, 1
      %v1263 = vsel %vm549, %v1260, %v1262
      %v1264 = vrot.slane %v1158, 1
      %v1265 = vrot.slane %v1159, 1
      %v1266 = vsel %vm549, %v1264, %v1265
      %v1267 = vrot.slane %v1160, 1
      %v1268 = vsel %vm549, %v1265, %v1267
      %v1269 = vrot.slane %v1161, 1
      %v1270 = vrot.slane %v1162, 1
      %v1271 = vsel %vm549, %v1269, %v1270
      %v1272 = vrot.slane %v1163, 1
      %v1273 = vsel %vm549, %v1270, %v1272
      %v1274 = vrot.slane %v1164, 1
      %v1275 = vrot.slane %v1165, 1
      %v1276 = vsel %vm549, %v1274, %v1275
      %v1277 = vrot.slane %v1166, 1
      %v1278 = vsel %vm549, %v1275, %v1277
      %v1279 = vrot.slane %v1167, 1
      %v1280 = vrot.slane %v1168, 1
      %v1281 = vsel %vm549, %v1279, %v1280
      %v1282 = vrot.slane %v1169, 1
      %v1283 = vsel %vm549, %v1280, %v1282
      %v1284 = vrot.slane %v1170, 1
      %v1285 = vrot.slane %v1171, 1
      %v1286 = vsel %vm549, %v1284, %v1285
      %v1287 = vrot.slane %v1172, 1
      %v1288 = vsel %vm549, %v1285, %v1287
      %v1289 = vrot.slane %v1173, 1
      %v1290 = vrot.slane %v1174, 1
      %v1291 = vsel %vm549, %v1289, %v1290
      %v1292 = vrot.slane %v1175, 1
      %v1293 = vsel %vm549, %v1290, %v1292
      %v1294 = vrot.slane %v1176, 1
      %v1295 = vrot.slane %v1177, 1
      %v1296 = vsel %vm549, %v1294, %v1295
      %v1297 = vrot.slane %v1178, 1
      %v1298 = vsel %vm549, %v1295, %v1297
      %v1299 = vrot.slane %v1179, 1
      %v1300 = vrot.slane %v1180, 1
      %v1301 = vsel %vm549, %v1299, %v1300
      %v1302 = vrot.slane %v1181, 1
      %v1303 = vsel %vm549, %v1300, %v1302
      %v1304 = vrot.slane %v1182, 1
      %v1305 = vrot.slane %v1183, 1
      %v1306 = vsel %vm549, %v1304, %v1305
      %v1307 = vrot.slane %v1184, 1
      %v1308 = vsel %vm549, %v1305, %v1307
      %v1309 = vrot.slane %v1185, 1
      %v1310 = vrot.slane %v1186, 1
      %v1311 = vsel %vm549, %v1309, %v1310
      %v1312 = vrot.slane %v1187, 1
      %v1313 = vsel %vm549, %v1310, %v1312
      %v1314 = vrot.slane %v1188, 1
      %v1315 = vrot.slane %v1189, 1
      %v1316 = vsel %vm549, %v1314, %v1315
      %v1317 = vrot.slane %v1190, 1
      %v1318 = vsel %vm549, %v1315, %v1317
      %v1351 = vadd.f32 %v1075, %v1241
      %v1352 = vadd.f32 %v1076, %v1243
      %v1353 = vadd.f32 %v1077, %v1246
      %v1354 = vadd.f32 %v1078, %v1248
      %v1355 = vadd.f32 %v1079, %v1251
      %v1356 = vadd.f32 %v1080, %v1253
      %v1357 = vadd.f32 %v1081, %v1256
      %v1358 = vadd.f32 %v1082, %v1258
      %v1359 = vadd.f32 %v1083, %v1261
      %v1360 = vadd.f32 %v1084, %v1263
      %v1361 = vadd.f32 %v1085, %v1266
      %v1362 = vadd.f32 %v1086, %v1268
      %v1363 = vadd.f32 %v1087, %v1271
      %v1364 = vadd.f32 %v1088, %v1273
      %v1365 = vadd.f32 %v1089, %v1276
      %v1366 = vadd.f32 %v1090, %v1278
      %v1367 = vadd.f32 %v1091, %v1281
      %v1368 = vadd.f32 %v1092, %v1283
      %v1369 = vadd.f32 %v1093, %v1286
      %v1370 = vadd.f32 %v1094, %v1288
      %v1371 = vadd.f32 %v1095, %v1291
      %v1372 = vadd.f32 %v1096, %v1293
      %v1373 = vadd.f32 %v1097, %v1296
      %v1374 = vadd.f32 %v1098, %v1298
      %v1375 = vadd.f32 %v1099, %v1301
      %v1376 = vadd.f32 %v1100, %v1303
      %v1377 = vadd.f32 %v1101, %v1306
      %v1378 = vadd.f32 %v1102, %v1308
      %v1379 = vadd.f32 %v1103, %v1311
      %v1380 = vadd.f32 %v1104, %v1313
      %v1381 = vadd.f32 %v1105, %v1316
      %v1382 = vadd.f32 %v1106, %v1318
      %v1383 = vld [vmem:[%s974] sm:$0xe]
      %v1384 = vld [vmem:[%s974 + $0xc] sm:$0xe]
      %v1385 = vld [vmem:[%s974 + $0x18] sm:$0xe]
      %v1386 = vld [vmem:[%s974 + $0x24] sm:$0xe]
      %v1387 = vld [vmem:[%s974 + $0x30] sm:$0xe]
      %v1388 = vld [vmem:[%s974 + $0x3c] sm:$0xe]
      %v1389 = vld [vmem:[%s974 + $0x48] sm:$0xe]
      %v1390 = vld [vmem:[%s974 + $0x54] sm:$0xe]
      %v1391 = vld [vmem:[%s974 + $0x60] sm:$0xe]
      %v1392 = vld [vmem:[%s974 + $0x6c] sm:$0xe]
      %v1393 = vld [vmem:[%s974 + $0x78] sm:$0xe]
      %v1394 = vld [vmem:[%s974 + $0x84] sm:$0xe]
      %v1395 = vld [vmem:[%s974 + $0x90] sm:$0xe]
      %v1396 = vld [vmem:[%s974 + $0x9c] sm:$0xe]
      %v1397 = vld [vmem:[%s974 + $0xa8] sm:$0xe]
      %v1398 = vld [vmem:[%s974 + $0xb4] sm:$0xe]
      %v1399 = vunpack.c.l.bf16 %v1383
      %v1400 = vunpack.c.l.bf16 %v1384
      %v1401 = vunpack.c.l.bf16 %v1385
      %v1402 = vunpack.c.l.bf16 %v1386
      %v1403 = vunpack.c.l.bf16 %v1387
      %v1404 = vunpack.c.l.bf16 %v1388
      %v1405 = vunpack.c.l.bf16 %v1389
      %v1406 = vunpack.c.l.bf16 %v1390
      %v1407 = vunpack.c.l.bf16 %v1391
      %v1408 = vunpack.c.l.bf16 %v1392
      %v1409 = vunpack.c.l.bf16 %v1393
      %v1410 = vunpack.c.l.bf16 %v1394
      %v1411 = vunpack.c.l.bf16 %v1395
      %v1412 = vunpack.c.l.bf16 %v1396
      %v1413 = vunpack.c.l.bf16 %v1397
      %v1414 = vunpack.c.l.bf16 %v1398
      %v1415 = vlaneseq
      %v1416 = vshrl.u32 %v1415, 7
      %v1417 = vsub.s32 2, %v1416
      %v1418 = vrot.slane %v280, %v1417
      %v1419 = vmul.f32 %v1399, %v1418
      %v1420 = vmul.f32 %v1008, %v1418
      %v1421 = vmul.f32 %v1123, %v1418
      %v1422 = vmul.f32 %v1400, %v1418
      %v1423 = vmul.f32 %v1010, %v1418
      %v1424 = vmul.f32 %v1124, %v1418
      %v1425 = vmul.f32 %v1401, %v1418
      %v1426 = vmul.f32 %v1012, %v1418
      %v1427 = vmul.f32 %v1125, %v1418
      %v1428 = vmul.f32 %v1402, %v1418
      %v1429 = vmul.f32 %v1014, %v1418
      %v1430 = vmul.f32 %v1126, %v1418
      %v1431 = vmul.f32 %v1403, %v1418
      %v1432 = vmul.f32 %v1016, %v1418
      %v1433 = vmul.f32 %v1127, %v1418
      %v1434 = vmul.f32 %v1404, %v1418
      %v1435 = vmul.f32 %v1018, %v1418
      %v1436 = vmul.f32 %v1128, %v1418
      %v1437 = vmul.f32 %v1405, %v1418
      %v1438 = vmul.f32 %v1020, %v1418
      %v1439 = vmul.f32 %v1129, %v1418
      %v1440 = vmul.f32 %v1406, %v1418
      %v1441 = vmul.f32 %v1022, %v1418
      %v1442 = vmul.f32 %v1130, %v1418
      %v1443 = vmul.f32 %v1407, %v1418
      %v1444 = vmul.f32 %v1024, %v1418
      %v1445 = vmul.f32 %v1131, %v1418
      %v1446 = vmul.f32 %v1408, %v1418
      %v1447 = vmul.f32 %v1026, %v1418
      %v1448 = vmul.f32 %v1132, %v1418
      %v1449 = vmul.f32 %v1409, %v1418
      %v1450 = vmul.f32 %v1028, %v1418
      %v1451 = vmul.f32 %v1133, %v1418
      %v1452 = vmul.f32 %v1410, %v1418
      %v1453 = vmul.f32 %v1030, %v1418
      %v1454 = vmul.f32 %v1134, %v1418
      %v1455 = vmul.f32 %v1411, %v1418
      %v1456 = vmul.f32 %v1032, %v1418
      %v1457 = vmul.f32 %v1135, %v1418
      %v1458 = vmul.f32 %v1412, %v1418
      %v1459 = vmul.f32 %v1034, %v1418
      %v1460 = vmul.f32 %v1136, %v1418
      %v1461 = vmul.f32 %v1413, %v1418
      %v1462 = vmul.f32 %v1036, %v1418
      %v1463 = vmul.f32 %v1137, %v1418
      %v1464 = vmul.f32 %v1414, %v1418
      %v1465 = vmul.f32 %v1038, %v1418
      %v1466 = vmul.f32 %v1138, %v1418
      %v1515 = vrot.slane %v1419, 2
      %v1516 = vrot.slane %v1420, 2
      %v1517 = vsel %vm826, %v1515, %v1516
      %v1518 = vrot.slane %v1421, 2
      %v1519 = vsel %vm826, %v1516, %v1518
      %v1520 = vrot.slane %v1422, 2
      %v1521 = vrot.slane %v1423, 2
      %v1522 = vsel %vm826, %v1520, %v1521
      %v1523 = vrot.slane %v1424, 2
      %v1524 = vsel %vm826, %v1521, %v1523
      %v1525 = vrot.slane %v1425, 2
      %v1526 = vrot.slane %v1426, 2
      %v1527 = vsel %vm826, %v1525, %v1526
      %v1528 = vrot.slane %v1427, 2
      %v1529 = vsel %vm826, %v1526, %v1528
      %v1530 = vrot.slane %v1428, 2
      %v1531 = vrot.slane %v1429, 2
      %v1532 = vsel %vm826, %v1530, %v1531
      %v1533 = vrot.slane %v1430, 2
      %v1534 = vsel %vm826, %v1531, %v1533
      %v1535 = vrot.slane %v1431, 2
      %v1536 = vrot.slane %v1432, 2
      %v1537 = vsel %vm826, %v1535, %v1536
      %v1538 = vrot.slane %v1433, 2
      %v1539 = vsel %vm826, %v1536, %v1538
      %v1540 = vrot.slane %v1434, 2
      %v1541 = vrot.slane %v1435, 2
      %v1542 = vsel %vm826, %v1540, %v1541
      %v1543 = vrot.slane %v1436, 2
      %v1544 = vsel %vm826, %v1541, %v1543
      %v1545 = vrot.slane %v1437, 2
      %v1546 = vrot.slane %v1438, 2
      %v1547 = vsel %vm826, %v1545, %v1546
      %v1548 = vrot.slane %v1439, 2
      %v1549 = vsel %vm826, %v1546, %v1548
      %v1550 = vrot.slane %v1440, 2
      %v1551 = vrot.slane %v1441, 2
      %v1552 = vsel %vm826, %v1550, %v1551
      %v1553 = vrot.slane %v1442, 2
      %v1554 = vsel %vm826, %v1551, %v1553
      %v1555 = vrot.slane %v1443, 2
      %v1556 = vrot.slane %v1444, 2
      %v1557 = vsel %vm826, %v1555, %v1556
      %v1558 = vrot.slane %v1445, 2
      %v1559 = vsel %vm826, %v1556, %v1558
      %v1560 = vrot.slane %v1446, 2
      %v1561 = vrot.slane %v1447, 2
      %v1562 = vsel %vm826, %v1560, %v1561
      %v1563 = vrot.slane %v1448, 2
      %v1564 = vsel %vm826, %v1561, %v1563
      %v1565 = vrot.slane %v1449, 2
      %v1566 = vrot.slane %v1450, 2
      %v1567 = vsel %vm826, %v1565, %v1566
      %v1568 = vrot.slane %v1451, 2
      %v1569 = vsel %vm826, %v1566, %v1568
      %v1570 = vrot.slane %v1452, 2
      %v1571 = vrot.slane %v1453, 2
      %v1572 = vsel %vm826, %v1570, %v1571
      %v1573 = vrot.slane %v1454, 2
      %v1574 = vsel %vm826, %v1571, %v1573
      %v1575 = vrot.slane %v1455, 2
      %v1576 = vrot.slane %v1456, 2
      %v1577 = vsel %vm826, %v1575, %v1576
      %v1578 = vrot.slane %v1457, 2
      %v1579 = vsel %vm826, %v1576, %v1578
      %v1580 = vrot.slane %v1458, 2
      %v1581 = vrot.slane %v1459, 2
      %v1582 = vsel %vm826, %v1580, %v1581
      %v1583 = vrot.slane %v1460, 2
      %v1584 = vsel %vm826, %v1581, %v1583
      %v1585 = vrot.slane %v1461, 2
      %v1586 = vrot.slane %v1462, 2
      %v1587 = vsel %vm826, %v1585, %v1586
      %v1588 = vrot.slane %v1463, 2
      %v1589 = vsel %vm826, %v1586, %v1588
      %v1590 = vrot.slane %v1464, 2
      %v1591 = vrot.slane %v1465, 2
      %v1592 = vsel %vm826, %v1590, %v1591
      %v1593 = vrot.slane %v1466, 2
      %v1594 = vsel %vm826, %v1591, %v1593
      %v1627 = vadd.f32 %v1351, %v1517
      %v1628 = vadd.f32 %v1352, %v1519
      %v1629 = vadd.f32 %v1353, %v1522
      %v1630 = vadd.f32 %v1354, %v1524
      %v1631 = vadd.f32 %v1355, %v1527
      %v1632 = vadd.f32 %v1356, %v1529
      %v1633 = vadd.f32 %v1357, %v1532
      %v1634 = vadd.f32 %v1358, %v1534
      %v1635 = vadd.f32 %v1359, %v1537
      %v1636 = vadd.f32 %v1360, %v1539
      %v1637 = vadd.f32 %v1361, %v1542
      %v1638 = vadd.f32 %v1362, %v1544
      %v1639 = vadd.f32 %v1363, %v1547
      %v1640 = vadd.f32 %v1364, %v1549
      %v1641 = vadd.f32 %v1365, %v1552
      %v1642 = vadd.f32 %v1366, %v1554
      %v1643 = vadd.f32 %v1367, %v1557
      %v1644 = vadd.f32 %v1368, %v1559
      %v1645 = vadd.f32 %v1369, %v1562
      %v1646 = vadd.f32 %v1370, %v1564
      %v1647 = vadd.f32 %v1371, %v1567
      %v1648 = vadd.f32 %v1372, %v1569
      %v1649 = vadd.f32 %v1373, %v1572
      %v1650 = vadd.f32 %v1374, %v1574
      %v1651 = vadd.f32 %v1375, %v1577
      %v1652 = vadd.f32 %v1376, %v1579
      %v1653 = vadd.f32 %v1377, %v1582
      %v1654 = vadd.f32 %v1378, %v1584
      %v1655 = vadd.f32 %v1379, %v1587
      %v1656 = vadd.f32 %v1380, %v1589
      %v1657 = vadd.f32 %v1381, %v1592
      %v1658 = vadd.f32 %v1382, %v1594
      %s1659 = sadd.s32 %s278, 2
      %s1660 = smul.u32 %s1659, 3
      %s1661 = smul.addr %s1660, 4
      %s1662 = scalar_lea.vmem %s265, %s1661
      %v1663 = vld [vmem:[%s1662] sm:$0xf]
      %v1664 = vld [vmem:[%s1662 + $0x4] sm:$0xf]
      %v1665 = vld [vmem:[%s1662 + $0xc] sm:$0xf]
      %v1666 = vld [vmem:[%s1662 + $0x10] sm:$0xf]
      %v1667 = vld [vmem:[%s1662 + $0x18] sm:$0xf]
      %v1668 = vld [vmem:[%s1662 + $0x1c] sm:$0xf]
      %v1669 = vld [vmem:[%s1662 + $0x24] sm:$0xf]
      %v1670 = vld [vmem:[%s1662 + $0x28] sm:$0xf]
      %v1671 = vld [vmem:[%s1662 + $0x30] sm:$0xf]
      %v1672 = vld [vmem:[%s1662 + $0x34] sm:$0xf]
      %v1673 = vld [vmem:[%s1662 + $0x3c] sm:$0xf]
      %v1674 = vld [vmem:[%s1662 + $0x40] sm:$0xf]
      %v1675 = vld [vmem:[%s1662 + $0x48] sm:$0xf]
      %v1676 = vld [vmem:[%s1662 + $0x4c] sm:$0xf]
      %v1677 = vld [vmem:[%s1662 + $0x54] sm:$0xf]
      %v1678 = vld [vmem:[%s1662 + $0x58] sm:$0xf]
      %v1679 = vld [vmem:[%s1662 + $0x60] sm:$0xf]
      %v1680 = vld [vmem:[%s1662 + $0x64] sm:$0xf]
      %v1681 = vld [vmem:[%s1662 + $0x6c] sm:$0xf]
      %v1682 = vld [vmem:[%s1662 + $0x70] sm:$0xf]
      %v1683 = vld [vmem:[%s1662 + $0x78] sm:$0xf]
      %v1684 = vld [vmem:[%s1662 + $0x7c] sm:$0xf]
      %v1685 = vld [vmem:[%s1662 + $0x84] sm:$0xf]
      %v1686 = vld [vmem:[%s1662 + $0x88] sm:$0xf]
      %v1687 = vld [vmem:[%s1662 + $0x90] sm:$0xf]
      %v1688 = vld [vmem:[%s1662 + $0x94] sm:$0xf]
      %v1689 = vld [vmem:[%s1662 + $0x9c] sm:$0xf]
      %v1690 = vld [vmem:[%s1662 + $0xa0] sm:$0xf]
      %v1691 = vld [vmem:[%s1662 + $0xa8] sm:$0xf]
      %v1692 = vld [vmem:[%s1662 + $0xac] sm:$0xf]
      %v1693 = vld [vmem:[%s1662 + $0xb4] sm:$0xf]
      %v1694 = vld [vmem:[%s1662 + $0xb8] sm:$0xf]
      %v1695 = vunpack.c.l.bf16 %v1663
      %v1696 = vunpack.c.l.bf16 %v1664
      %v1697 = vunpack.c.l.bf16 %v1665
      %v1698 = vunpack.c.l.bf16 %v1666
      %v1699 = vunpack.c.l.bf16 %v1667
      %v1700 = vunpack.c.l.bf16 %v1668
      %v1701 = vunpack.c.l.bf16 %v1669
      %v1702 = vunpack.c.l.bf16 %v1670
      %v1703 = vunpack.c.l.bf16 %v1671
      %v1704 = vunpack.c.l.bf16 %v1672
      %v1705 = vunpack.c.l.bf16 %v1673
      %v1706 = vunpack.c.l.bf16 %v1674
      %v1707 = vunpack.c.l.bf16 %v1675
      %v1708 = vunpack.c.l.bf16 %v1676
      %v1709 = vunpack.c.l.bf16 %v1677
      %v1710 = vunpack.c.l.bf16 %v1678
      %v1711 = vunpack.c.l.bf16 %v1679
      %v1712 = vunpack.c.l.bf16 %v1680
      %v1713 = vunpack.c.l.bf16 %v1681
      %v1714 = vunpack.c.l.bf16 %v1682
      %v1715 = vunpack.c.l.bf16 %v1683
      %v1716 = vunpack.c.l.bf16 %v1684
      %v1717 = vunpack.c.l.bf16 %v1685
      %v1718 = vunpack.c.l.bf16 %v1686
      %v1719 = vunpack.c.l.bf16 %v1687
      %v1720 = vunpack.c.l.bf16 %v1688
      %v1721 = vunpack.c.l.bf16 %v1689
      %v1722 = vunpack.c.l.bf16 %v1690
      %v1723 = vunpack.c.l.bf16 %v1691
      %v1724 = vunpack.c.l.bf16 %v1692
      %v1725 = vunpack.c.l.bf16 %v1693
      %v1726 = vunpack.c.l.bf16 %v1694
      %v1727 = vlaneseq
      %v1728 = vshrl.u32 %v1727, 7
      %v1729 = vsub.s32 0, %v1728
      %v1730 = vrot.slane %v281, %v1729
      %v1731 = vmul.f32 %v1695, %v1730
      %v1732 = vmul.f32 %v1696, %v1730
      %v1733 = vmul.f32 %v1697, %v1730
      %v1734 = vmul.f32 %v1698, %v1730
      %v1735 = vmul.f32 %v1699, %v1730
      %v1736 = vmul.f32 %v1700, %v1730
      %v1737 = vmul.f32 %v1701, %v1730
      %v1738 = vmul.f32 %v1702, %v1730
      %v1739 = vmul.f32 %v1703, %v1730
      %v1740 = vmul.f32 %v1704, %v1730
      %v1741 = vmul.f32 %v1705, %v1730
      %v1742 = vmul.f32 %v1706, %v1730
      %v1743 = vmul.f32 %v1707, %v1730
      %v1744 = vmul.f32 %v1708, %v1730
      %v1745 = vmul.f32 %v1709, %v1730
      %v1746 = vmul.f32 %v1710, %v1730
      %v1747 = vmul.f32 %v1711, %v1730
      %v1748 = vmul.f32 %v1712, %v1730
      %v1749 = vmul.f32 %v1713, %v1730
      %v1750 = vmul.f32 %v1714, %v1730
      %v1751 = vmul.f32 %v1715, %v1730
      %v1752 = vmul.f32 %v1716, %v1730
      %v1753 = vmul.f32 %v1717, %v1730
      %v1754 = vmul.f32 %v1718, %v1730
      %v1755 = vmul.f32 %v1719, %v1730
      %v1756 = vmul.f32 %v1720, %v1730
      %v1757 = vmul.f32 %v1721, %v1730
      %v1758 = vmul.f32 %v1722, %v1730
      %v1759 = vmul.f32 %v1723, %v1730
      %v1760 = vmul.f32 %v1724, %v1730
      %v1761 = vmul.f32 %v1725, %v1730
      %v1762 = vmul.f32 %v1726, %v1730
      %v1763 = vadd.f32 %v1627, %v1731
      %v1764 = vadd.f32 %v1628, %v1732
      %v1765 = vadd.f32 %v1629, %v1733
      %v1766 = vadd.f32 %v1630, %v1734
      %v1767 = vadd.f32 %v1631, %v1735
      %v1768 = vadd.f32 %v1632, %v1736
      %v1769 = vadd.f32 %v1633, %v1737
      %v1770 = vadd.f32 %v1634, %v1738
      %v1771 = vadd.f32 %v1635, %v1739
      %v1772 = vadd.f32 %v1636, %v1740
      %v1773 = vadd.f32 %v1637, %v1741
      %v1774 = vadd.f32 %v1638, %v1742
      %v1775 = vadd.f32 %v1639, %v1743
      %v1776 = vadd.f32 %v1640, %v1744
      %v1777 = vadd.f32 %v1641, %v1745
      %v1778 = vadd.f32 %v1642, %v1746
      %v1779 = vadd.f32 %v1643, %v1747
      %v1780 = vadd.f32 %v1644, %v1748
      %v1781 = vadd.f32 %v1645, %v1749
      %v1782 = vadd.f32 %v1646, %v1750
      %v1783 = vadd.f32 %v1647, %v1751
      %v1784 = vadd.f32 %v1648, %v1752
      %v1785 = vadd.f32 %v1649, %v1753
      %v1786 = vadd.f32 %v1650, %v1754
      %v1787 = vadd.f32 %v1651, %v1755
      %v1788 = vadd.f32 %v1652, %v1756
      %v1789 = vadd.f32 %v1653, %v1757
      %v1790 = vadd.f32 %v1654, %v1758
      %v1791 = vadd.f32 %v1655, %v1759
      %v1792 = vadd.f32 %v1656, %v1760
      %v1793 = vadd.f32 %v1657, %v1761
      %v1794 = vadd.f32 %v1658, %v1762
      %v1795 = vld [vmem:[%s1662 + $0x8] sm:$0x1]
      %v1796 = vld [vmem:[%s1662 + $0x14] sm:$0x1]
      %v1797 = vld [vmem:[%s1662 + $0x20] sm:$0x1]
      %v1798 = vld [vmem:[%s1662 + $0x2c] sm:$0x1]
      %v1799 = vld [vmem:[%s1662 + $0x38] sm:$0x1]
      %v1800 = vld [vmem:[%s1662 + $0x44] sm:$0x1]
      %v1801 = vld [vmem:[%s1662 + $0x50] sm:$0x1]
      %v1802 = vld [vmem:[%s1662 + $0x5c] sm:$0x1]
      %v1803 = vld [vmem:[%s1662 + $0x68] sm:$0x1]
      %v1804 = vld [vmem:[%s1662 + $0x74] sm:$0x1]
      %v1805 = vld [vmem:[%s1662 + $0x80] sm:$0x1]
      %v1806 = vld [vmem:[%s1662 + $0x8c] sm:$0x1]
      %v1807 = vld [vmem:[%s1662 + $0x98] sm:$0x1]
      %v1808 = vld [vmem:[%s1662 + $0xa4] sm:$0x1]
      %v1809 = vld [vmem:[%s1662 + $0xb0] sm:$0x1]
      %v1810 = vld [vmem:[%s1662 + $0xbc] sm:$0x1]
      %v1811 = vunpack.c.l.bf16 %v1795
      %v1812 = vunpack.c.l.bf16 %v1796
      %v1813 = vunpack.c.l.bf16 %v1797
      %v1814 = vunpack.c.l.bf16 %v1798
      %v1815 = vunpack.c.l.bf16 %v1799
      %v1816 = vunpack.c.l.bf16 %v1800
      %v1817 = vunpack.c.l.bf16 %v1801
      %v1818 = vunpack.c.l.bf16 %v1802
      %v1819 = vunpack.c.l.bf16 %v1803
      %v1820 = vunpack.c.l.bf16 %v1804
      %v1821 = vunpack.c.l.bf16 %v1805
      %v1822 = vunpack.c.l.bf16 %v1806
      %v1823 = vunpack.c.l.bf16 %v1807
      %v1824 = vunpack.c.l.bf16 %v1808
      %v1825 = vunpack.c.l.bf16 %v1809
      %v1826 = vunpack.c.l.bf16 %v1810
      %v1827 = vlaneseq
      %v1828 = vshrl.u32 %v1827, 7
      %v1829 = vsub.s32 1, %v1828
      %v1830 = vrot.slane %v281, %v1829
      %v1831 = vmul.f32 %v1695, %v1830
      %v1832 = vmul.f32 %v1696, %v1830
      %v1833 = vmul.f32 %v1811, %v1830
      %v1834 = vmul.f32 %v1697, %v1830
      %v1835 = vmul.f32 %v1698, %v1830
      %v1836 = vmul.f32 %v1812, %v1830
      %v1837 = vmul.f32 %v1699, %v1830
      %v1838 = vmul.f32 %v1700, %v1830
      %v1839 = vmul.f32 %v1813, %v1830
      %v1840 = vmul.f32 %v1701, %v1830
      %v1841 = vmul.f32 %v1702, %v1830
      %v1842 = vmul.f32 %v1814, %v1830
      %v1843 = vmul.f32 %v1703, %v1830
      %v1844 = vmul.f32 %v1704, %v1830
      %v1845 = vmul.f32 %v1815, %v1830
      %v1846 = vmul.f32 %v1705, %v1830
      %v1847 = vmul.f32 %v1706, %v1830
      %v1848 = vmul.f32 %v1816, %v1830
      %v1849 = vmul.f32 %v1707, %v1830
      %v1850 = vmul.f32 %v1708, %v1830
      %v1851 = vmul.f32 %v1817, %v1830
      %v1852 = vmul.f32 %v1709, %v1830
      %v1853 = vmul.f32 %v1710, %v1830
      %v1854 = vmul.f32 %v1818, %v1830
      %v1855 = vmul.f32 %v1711, %v1830
      %v1856 = vmul.f32 %v1712, %v1830
      %v1857 = vmul.f32 %v1819, %v1830
      %v1858 = vmul.f32 %v1713, %v1830
      %v1859 = vmul.f32 %v1714, %v1830
      %v1860 = vmul.f32 %v1820, %v1830
      %v1861 = vmul.f32 %v1715, %v1830
      %v1862 = vmul.f32 %v1716, %v1830
      %v1863 = vmul.f32 %v1821, %v1830
      %v1864 = vmul.f32 %v1717, %v1830
      %v1865 = vmul.f32 %v1718, %v1830
      %v1866 = vmul.f32 %v1822, %v1830
      %v1867 = vmul.f32 %v1719, %v1830
      %v1868 = vmul.f32 %v1720, %v1830
      %v1869 = vmul.f32 %v1823, %v1830
      %v1870 = vmul.f32 %v1721, %v1830
      %v1871 = vmul.f32 %v1722, %v1830
      %v1872 = vmul.f32 %v1824, %v1830
      %v1873 = vmul.f32 %v1723, %v1830
      %v1874 = vmul.f32 %v1724, %v1830
      %v1875 = vmul.f32 %v1825, %v1830
      %v1876 = vmul.f32 %v1725, %v1830
      %v1877 = vmul.f32 %v1726, %v1830
      %v1878 = vmul.f32 %v1826, %v1830
      %v1927 = vrot.slane %v1831, 1
      %v1928 = vrot.slane %v1832, 1
      %v1929 = vsel %vm549, %v1927, %v1928
      %v1930 = vrot.slane %v1833, 1
      %v1931 = vsel %vm549, %v1928, %v1930
      %v1932 = vrot.slane %v1834, 1
      %v1933 = vrot.slane %v1835, 1
      %v1934 = vsel %vm549, %v1932, %v1933
      %v1935 = vrot.slane %v1836, 1
      %v1936 = vsel %vm549, %v1933, %v1935
      %v1937 = vrot.slane %v1837, 1
      %v1938 = vrot.slane %v1838, 1
      %v1939 = vsel %vm549, %v1937, %v1938
      %v1940 = vrot.slane %v1839, 1
      %v1941 = vsel %vm549, %v1938, %v1940
      %v1942 = vrot.slane %v1840, 1
      %v1943 = vrot.slane %v1841, 1
      %v1944 = vsel %vm549, %v1942, %v1943
      %v1945 = vrot.slane %v1842, 1
      %v1946 = vsel %vm549, %v1943, %v1945
      %v1947 = vrot.slane %v1843, 1
      %v1948 = vrot.slane %v1844, 1
      %v1949 = vsel %vm549, %v1947, %v1948
      %v1950 = vrot.slane %v1845, 1
      %v1951 = vsel %vm549, %v1948, %v1950
      %v1952 = vrot.slane %v1846, 1
      %v1953 = vrot.slane %v1847, 1
      %v1954 = vsel %vm549, %v1952, %v1953
      %v1955 = vrot.slane %v1848, 1
      %v1956 = vsel %vm549, %v1953, %v1955
      %v1957 = vrot.slane %v1849, 1
      %v1958 = vrot.slane %v1850, 1
      %v1959 = vsel %vm549, %v1957, %v1958
      %v1960 = vrot.slane %v1851, 1
      %v1961 = vsel %vm549, %v1958, %v1960
      %v1962 = vrot.slane %v1852, 1
      %v1963 = vrot.slane %v1853, 1
      %v1964 = vsel %vm549, %v1962, %v1963
      %v1965 = vrot.slane %v1854, 1
      %v1966 = vsel %vm549, %v1963, %v1965
      %v1967 = vrot.slane %v1855, 1
      %v1968 = vrot.slane %v1856, 1
      %v1969 = vsel %vm549, %v1967, %v1968
      %v1970 = vrot.slane %v1857, 1
      %v1971 = vsel %vm549, %v1968, %v1970
      %v1972 = vrot.slane %v1858, 1
      %v1973 = vrot.slane %v1859, 1
      %v1974 = vsel %vm549, %v1972, %v1973
      %v1975 = vrot.slane %v1860, 1
      %v1976 = vsel %vm549, %v1973, %v1975
      %v1977 = vrot.slane %v1861, 1
      %v1978 = vrot.slane %v1862, 1
      %v1979 = vsel %vm549, %v1977, %v1978
      %v1980 = vrot.slane %v1863, 1
      %v1981 = vsel %vm549, %v1978, %v1980
      %v1982 = vrot.slane %v1864, 1
      %v1983 = vrot.slane %v1865, 1
      %v1984 = vsel %vm549, %v1982, %v1983
      %v1985 = vrot.slane %v1866, 1
      %v1986 = vsel %vm549, %v1983, %v1985
      %v1987 = vrot.slane %v1867, 1
      %v1988 = vrot.slane %v1868, 1
      %v1989 = vsel %vm549, %v1987, %v1988
      %v1990 = vrot.slane %v1869, 1
      %v1991 = vsel %vm549, %v1988, %v1990
      %v1992 = vrot.slane %v1870, 1
      %v1993 = vrot.slane %v1871, 1
      %v1994 = vsel %vm549, %v1992, %v1993
      %v1995 = vrot.slane %v1872, 1
      %v1996 = vsel %vm549, %v1993, %v1995
      %v1997 = vrot.slane %v1873, 1
      %v1998 = vrot.slane %v1874, 1
      %v1999 = vsel %vm549, %v1997, %v1998
      %v2000 = vrot.slane %v1875, 1
      %v2001 = vsel %vm549, %v1998, %v2000
      %v2002 = vrot.slane %v1876, 1
      %v2003 = vrot.slane %v1877, 1
      %v2004 = vsel %vm549, %v2002, %v2003
      %v2005 = vrot.slane %v1878, 1
      %v2006 = vsel %vm549, %v2003, %v2005
      %v2039 = vadd.f32 %v1763, %v1929
      %v2040 = vadd.f32 %v1764, %v1931
      %v2041 = vadd.f32 %v1765, %v1934
      %v2042 = vadd.f32 %v1766, %v1936
      %v2043 = vadd.f32 %v1767, %v1939
      %v2044 = vadd.f32 %v1768, %v1941
      %v2045 = vadd.f32 %v1769, %v1944
      %v2046 = vadd.f32 %v1770, %v1946
      %v2047 = vadd.f32 %v1771, %v1949
      %v2048 = vadd.f32 %v1772, %v1951
      %v2049 = vadd.f32 %v1773, %v1954
      %v2050 = vadd.f32 %v1774, %v1956
      %v2051 = vadd.f32 %v1775, %v1959
      %v2052 = vadd.f32 %v1776, %v1961
      %v2053 = vadd.f32 %v1777, %v1964
      %v2054 = vadd.f32 %v1778, %v1966
      %v2055 = vadd.f32 %v1779, %v1969
      %v2056 = vadd.f32 %v1780, %v1971
      %v2057 = vadd.f32 %v1781, %v1974
      %v2058 = vadd.f32 %v1782, %v1976
      %v2059 = vadd.f32 %v1783, %v1979
      %v2060 = vadd.f32 %v1784, %v1981
      %v2061 = vadd.f32 %v1785, %v1984
      %v2062 = vadd.f32 %v1786, %v1986
      %v2063 = vadd.f32 %v1787, %v1989
      %v2064 = vadd.f32 %v1788, %v1991
      %v2065 = vadd.f32 %v1789, %v1994
      %v2066 = vadd.f32 %v1790, %v1996
      %v2067 = vadd.f32 %v1791, %v1999
      %v2068 = vadd.f32 %v1792, %v2001
      %v2069 = vadd.f32 %v1793, %v2004
      %v2070 = vadd.f32 %v1794, %v2006
      %v2071 = vld [vmem:[%s1662] sm:$0xe]
      %v2072 = vld [vmem:[%s1662 + $0xc] sm:$0xe]
      %v2073 = vld [vmem:[%s1662 + $0x18] sm:$0xe]
      %v2074 = vld [vmem:[%s1662 + $0x24] sm:$0xe]
      %v2075 = vld [vmem:[%s1662 + $0x30] sm:$0xe]
      %v2076 = vld [vmem:[%s1662 + $0x3c] sm:$0xe]
      %v2077 = vld [vmem:[%s1662 + $0x48] sm:$0xe]
      %v2078 = vld [vmem:[%s1662 + $0x54] sm:$0xe]
      %v2079 = vld [vmem:[%s1662 + $0x60] sm:$0xe]
      %v2080 = vld [vmem:[%s1662 + $0x6c] sm:$0xe]
      %v2081 = vld [vmem:[%s1662 + $0x78] sm:$0xe]
      %v2082 = vld [vmem:[%s1662 + $0x84] sm:$0xe]
      %v2083 = vld [vmem:[%s1662 + $0x90] sm:$0xe]
      %v2084 = vld [vmem:[%s1662 + $0x9c] sm:$0xe]
      %v2085 = vld [vmem:[%s1662 + $0xa8] sm:$0xe]
      %v2086 = vld [vmem:[%s1662 + $0xb4] sm:$0xe]
      %v2087 = vunpack.c.l.bf16 %v2071
      %v2088 = vunpack.c.l.bf16 %v2072
      %v2089 = vunpack.c.l.bf16 %v2073
      %v2090 = vunpack.c.l.bf16 %v2074
      %v2091 = vunpack.c.l.bf16 %v2075
      %v2092 = vunpack.c.l.bf16 %v2076
      %v2093 = vunpack.c.l.bf16 %v2077
      %v2094 = vunpack.c.l.bf16 %v2078
      %v2095 = vunpack.c.l.bf16 %v2079
      %v2096 = vunpack.c.l.bf16 %v2080
      %v2097 = vunpack.c.l.bf16 %v2081
      %v2098 = vunpack.c.l.bf16 %v2082
      %v2099 = vunpack.c.l.bf16 %v2083
      %v2100 = vunpack.c.l.bf16 %v2084
      %v2101 = vunpack.c.l.bf16 %v2085
      %v2102 = vunpack.c.l.bf16 %v2086
      %v2103 = vlaneseq
      %v2104 = vshrl.u32 %v2103, 7
      %v2105 = vsub.s32 2, %v2104
      %v2106 = vrot.slane %v281, %v2105
      %v2107 = vmul.f32 %v2087, %v2106
      %v2108 = vmul.f32 %v1696, %v2106
      %v2109 = vmul.f32 %v1811, %v2106
      %v2110 = vmul.f32 %v2088, %v2106
      %v2111 = vmul.f32 %v1698, %v2106
      %v2112 = vmul.f32 %v1812, %v2106
      %v2113 = vmul.f32 %v2089, %v2106
      %v2114 = vmul.f32 %v1700, %v2106
      %v2115 = vmul.f32 %v1813, %v2106
      %v2116 = vmul.f32 %v2090, %v2106
      %v2117 = vmul.f32 %v1702, %v2106
      %v2118 = vmul.f32 %v1814, %v2106
      %v2119 = vmul.f32 %v2091, %v2106
      %v2120 = vmul.f32 %v1704, %v2106
      %v2121 = vmul.f32 %v1815, %v2106
      %v2122 = vmul.f32 %v2092, %v2106
      %v2123 = vmul.f32 %v1706, %v2106
      %v2124 = vmul.f32 %v1816, %v2106
      %v2125 = vmul.f32 %v2093, %v2106
      %v2126 = vmul.f32 %v1708, %v2106
      %v2127 = vmul.f32 %v1817, %v2106
      %v2128 = vmul.f32 %v2094, %v2106
      %v2129 = vmul.f32 %v1710, %v2106
      %v2130 = vmul.f32 %v1818, %v2106
      %v2131 = vmul.f32 %v2095, %v2106
      %v2132 = vmul.f32 %v1712, %v2106
      %v2133 = vmul.f32 %v1819, %v2106
      %v2134 = vmul.f32 %v2096, %v2106
      %v2135 = vmul.f32 %v1714, %v2106
      %v2136 = vmul.f32 %v1820, %v2106
      %v2137 = vmul.f32 %v2097, %v2106
      %v2138 = vmul.f32 %v1716, %v2106
      %v2139 = vmul.f32 %v1821, %v2106
      %v2140 = vmul.f32 %v2098, %v2106
      %v2141 = vmul.f32 %v1718, %v2106
      %v2142 = vmul.f32 %v1822, %v2106
      %v2143 = vmul.f32 %v2099, %v2106
      %v2144 = vmul.f32 %v1720, %v2106
      %v2145 = vmul.f32 %v1823, %v2106
      %v2146 = vmul.f32 %v2100, %v2106
      %v2147 = vmul.f32 %v1722, %v2106
      %v2148 = vmul.f32 %v1824, %v2106
      %v2149 = vmul.f32 %v2101, %v2106
      %v2150 = vmul.f32 %v1724, %v2106
      %v2151 = vmul.f32 %v1825, %v2106
      %v2152 = vmul.f32 %v2102, %v2106
      %v2153 = vmul.f32 %v1726, %v2106
      %v2154 = vmul.f32 %v1826, %v2106
      %v2203 = vrot.slane %v2107, 2
      %v2204 = vrot.slane %v2108, 2
      %v2205 = vsel %vm826, %v2203, %v2204
      %v2206 = vrot.slane %v2109, 2
      %v2207 = vsel %vm826, %v2204, %v2206
      %v2208 = vrot.slane %v2110, 2
      %v2209 = vrot.slane %v2111, 2
      %v2210 = vsel %vm826, %v2208, %v2209
      %v2211 = vrot.slane %v2112, 2
      %v2212 = vsel %vm826, %v2209, %v2211
      %v2213 = vrot.slane %v2113, 2
      %v2214 = vrot.slane %v2114, 2
      %v2215 = vsel %vm826, %v2213, %v2214
      %v2216 = vrot.slane %v2115, 2
      %v2217 = vsel %vm826, %v2214, %v2216
      %v2218 = vrot.slane %v2116, 2
      %v2219 = vrot.slane %v2117, 2
      %v2220 = vsel %vm826, %v2218, %v2219
      %v2221 = vrot.slane %v2118, 2
      %v2222 = vsel %vm826, %v2219, %v2221
      %v2223 = vrot.slane %v2119, 2
      %v2224 = vrot.slane %v2120, 2
      %v2225 = vsel %vm826, %v2223, %v2224
      %v2226 = vrot.slane %v2121, 2
      %v2227 = vsel %vm826, %v2224, %v2226
      %v2228 = vrot.slane %v2122, 2
      %v2229 = vrot.slane %v2123, 2
      %v2230 = vsel %vm826, %v2228, %v2229
      %v2231 = vrot.slane %v2124, 2
      %v2232 = vsel %vm826, %v2229, %v2231
      %v2233 = vrot.slane %v2125, 2
      %v2234 = vrot.slane %v2126, 2
      %v2235 = vsel %vm826, %v2233, %v2234
      %v2236 = vrot.slane %v2127, 2
      %v2237 = vsel %vm826, %v2234, %v2236
      %v2238 = vrot.slane %v2128, 2
      %v2239 = vrot.slane %v2129, 2
      %v2240 = vsel %vm826, %v2238, %v2239
      %v2241 = vrot.slane %v2130, 2
      %v2242 = vsel %vm826, %v2239, %v2241
      %v2243 = vrot.slane %v2131, 2
      %v2244 = vrot.slane %v2132, 2
      %v2245 = vsel %vm826, %v2243, %v2244
      %v2246 = vrot.slane %v2133, 2
      %v2247 = vsel %vm826, %v2244, %v2246
      %v2248 = vrot.slane %v2134, 2
      %v2249 = vrot.slane %v2135, 2
      %v2250 = vsel %vm826, %v2248, %v2249
      %v2251 = vrot.slane %v2136, 2
      %v2252 = vsel %vm826, %v2249, %v2251
      %v2253 = vrot.slane %v2137, 2
      %v2254 = vrot.slane %v2138, 2
      %v2255 = vsel %vm826, %v2253, %v2254
      %v2256 = vrot.slane %v2139, 2
      %v2257 = vsel %vm826, %v2254, %v2256
      %v2258 = vrot.slane %v2140, 2
      %v2259 = vrot.slane %v2141, 2
      %v2260 = vsel %vm826, %v2258, %v2259
      %v2261 = vrot.slane %v2142, 2
      %v2262 = vsel %vm826, %v2259, %v2261
      %v2263 = vrot.slane %v2143, 2
      %v2264 = vrot.slane %v2144, 2
      %v2265 = vsel %vm826, %v2263, %v2264
      %v2266 = vrot.slane %v2145, 2
      %v2267 = vsel %vm826, %v2264, %v2266
      %v2268 = vrot.slane %v2146, 2
      %v2269 = vrot.slane %v2147, 2
      %v2270 = vsel %vm826, %v2268, %v2269
      %v2271 = vrot.slane %v2148, 2
      %v2272 = vsel %vm826, %v2269, %v2271
      %v2273 = vrot.slane %v2149, 2
      %v2274 = vrot.slane %v2150, 2
      %v2275 = vsel %vm826, %v2273, %v2274
      %v2276 = vrot.slane %v2151, 2
      %v2277 = vsel %vm826, %v2274, %v2276
      %v2278 = vrot.slane %v2152, 2
      %v2279 = vrot.slane %v2153, 2
      %v2280 = vsel %vm826, %v2278, %v2279
      %v2281 = vrot.slane %v2154, 2
      %v2282 = vsel %vm826, %v2279, %v2281
      %v2315 = vadd.f32 %v2039, %v2205
      %v2316 = vadd.f32 %v2040, %v2207
      %v2317 = vadd.f32 %v2041, %v2210
      %v2318 = vadd.f32 %v2042, %v2212
      %v2319 = vadd.f32 %v2043, %v2215
      %v2320 = vadd.f32 %v2044, %v2217
      %v2321 = vadd.f32 %v2045, %v2220
      %v2322 = vadd.f32 %v2046, %v2222
      %v2323 = vadd.f32 %v2047, %v2225
      %v2324 = vadd.f32 %v2048, %v2227
      %v2325 = vadd.f32 %v2049, %v2230
      %v2326 = vadd.f32 %v2050, %v2232
      %v2327 = vadd.f32 %v2051, %v2235
      %v2328 = vadd.f32 %v2052, %v2237
      %v2329 = vadd.f32 %v2053, %v2240
      %v2330 = vadd.f32 %v2054, %v2242
      %v2331 = vadd.f32 %v2055, %v2245
      %v2332 = vadd.f32 %v2056, %v2247
      %v2333 = vadd.f32 %v2057, %v2250
      %v2334 = vadd.f32 %v2058, %v2252
      %v2335 = vadd.f32 %v2059, %v2255
      %v2336 = vadd.f32 %v2060, %v2257
      %v2337 = vadd.f32 %v2061, %v2260
      %v2338 = vadd.f32 %v2062, %v2262
      %v2339 = vadd.f32 %v2063, %v2265
      %v2340 = vadd.f32 %v2064, %v2267
      %v2341 = vadd.f32 %v2065, %v2270
      %v2342 = vadd.f32 %v2066, %v2272
      %v2343 = vadd.f32 %v2067, %v2275
      %v2344 = vadd.f32 %v2068, %v2277
      %v2345 = vadd.f32 %v2069, %v2280
      %v2346 = vadd.f32 %v2070, %v2282
      %v2347 = vld [vmem:[%s2] sm:$0x1]
      %v2349 = vlaneseq
      %v2350 = vshrl.u32 %v2349, 7
      %v2351 = vsub.s32 0, %v2350
      %v2352 = vrot.slane %v2347, %v2351
      %v2354 = vadd.f32 %v2315, %v2352
      %v2355 = vadd.f32 %v2316, %v2352
      %v2356 = vadd.f32 %v2317, %v2352
      %v2357 = vadd.f32 %v2318, %v2352
      %v2358 = vadd.f32 %v2319, %v2352
      %v2359 = vadd.f32 %v2320, %v2352
      %v2360 = vadd.f32 %v2321, %v2352
      %v2361 = vadd.f32 %v2322, %v2352
      %v2362 = vadd.f32 %v2323, %v2352
      %v2363 = vadd.f32 %v2324, %v2352
      %v2364 = vadd.f32 %v2325, %v2352
      %v2365 = vadd.f32 %v2326, %v2352
      %v2366 = vadd.f32 %v2327, %v2352
      %v2367 = vadd.f32 %v2328, %v2352
      %v2368 = vadd.f32 %v2329, %v2352
      %v2369 = vadd.f32 %v2330, %v2352
      %v2370 = vadd.f32 %v2331, %v2352
      %v2371 = vadd.f32 %v2332, %v2352
      %v2372 = vadd.f32 %v2333, %v2352
      %v2373 = vadd.f32 %v2334, %v2352
      %v2374 = vadd.f32 %v2335, %v2352
      %v2375 = vadd.f32 %v2336, %v2352
      %v2376 = vadd.f32 %v2337, %v2352
      %v2377 = vadd.f32 %v2338, %v2352
      %v2378 = vadd.f32 %v2339, %v2352
      %v2379 = vadd.f32 %v2340, %v2352
      %v2380 = vadd.f32 %v2341, %v2352
      %v2381 = vadd.f32 %v2342, %v2352
      %v2382 = vadd.f32 %v2343, %v2352
      %v2383 = vadd.f32 %v2344, %v2352
      %v2384 = vadd.f32 %v2345, %v2352
      %v2385 = vadd.f32 %v2346, %v2352
      %v2386 = vmax.f32 %v2354, 0.0
      %v2387 = vmax.f32 %v2355, 0.0
      %v2388 = vmax.f32 %v2356, 0.0
      %v2389 = vmax.f32 %v2357, 0.0
      %v2390 = vmax.f32 %v2358, 0.0
      %v2391 = vmax.f32 %v2359, 0.0
      %v2392 = vmax.f32 %v2360, 0.0
      %v2393 = vmax.f32 %v2361, 0.0
      %v2394 = vmax.f32 %v2362, 0.0
      %v2395 = vmax.f32 %v2363, 0.0
      %v2396 = vmax.f32 %v2364, 0.0
      %v2397 = vmax.f32 %v2365, 0.0
      %v2398 = vmax.f32 %v2366, 0.0
      %v2399 = vmax.f32 %v2367, 0.0
      %v2400 = vmax.f32 %v2368, 0.0
      %v2401 = vmax.f32 %v2369, 0.0
      %v2402 = vmax.f32 %v2370, 0.0
      %v2403 = vmax.f32 %v2371, 0.0
      %v2404 = vmax.f32 %v2372, 0.0
      %v2405 = vmax.f32 %v2373, 0.0
      %v2406 = vmax.f32 %v2374, 0.0
      %v2407 = vmax.f32 %v2375, 0.0
      %v2408 = vmax.f32 %v2376, 0.0
      %v2409 = vmax.f32 %v2377, 0.0
      %v2410 = vmax.f32 %v2378, 0.0
      %v2411 = vmax.f32 %v2379, 0.0
      %v2412 = vmax.f32 %v2380, 0.0
      %v2413 = vmax.f32 %v2381, 0.0
      %v2414 = vmax.f32 %v2382, 0.0
      %v2415 = vmax.f32 %v2383, 0.0
      %v2416 = vmax.f32 %v2384, 0.0
      %v2417 = vmax.f32 %v2385, 0.0
      %v2418 = vpack.c.bf16 %v2387, %v2386
      %v2419 = vpack.c.bf16 %v2389, %v2388
      %v2420 = vpack.c.bf16 %v2391, %v2390
      %v2421 = vpack.c.bf16 %v2393, %v2392
      %v2422 = vpack.c.bf16 %v2395, %v2394
      %v2423 = vpack.c.bf16 %v2397, %v2396
      %v2424 = vpack.c.bf16 %v2399, %v2398
      %v2425 = vpack.c.bf16 %v2401, %v2400
      %v2426 = vpack.c.bf16 %v2403, %v2402
      %v2427 = vpack.c.bf16 %v2405, %v2404
      %v2428 = vpack.c.bf16 %v2407, %v2406
      %v2429 = vpack.c.bf16 %v2409, %v2408
      %v2430 = vpack.c.bf16 %v2411, %v2410
      %v2431 = vpack.c.bf16 %v2413, %v2412
      %v2432 = vpack.c.bf16 %v2415, %v2414
      %v2433 = vpack.c.bf16 %v2417, %v2416
      %v2434 = vld [vmem:[%s3] sm:$0xf]
      %v2435 = vld [vmem:[%s3 + $0x4] sm:$0xf]
      %v2436 = vld [vmem:[%s3 + $0x8] sm:$0xf]
      %v2437 = vld [vmem:[%s3 + $0xc] sm:$0xf]
      %v2438 = vld [vmem:[%s3 + $0x10] sm:$0xf]
      %v2439 = vld [vmem:[%s3 + $0x14] sm:$0xf]
      %v2440 = vld [vmem:[%s3 + $0x18] sm:$0xf]
      %v2441 = vld [vmem:[%s3 + $0x1c] sm:$0xf]
      %v2442 = vld [vmem:[%s3 + $0x20] sm:$0xf]
      %v2443 = vld [vmem:[%s3 + $0x24] sm:$0xf]
      %v2444 = vld [vmem:[%s3 + $0x28] sm:$0xf]
      %v2445 = vld [vmem:[%s3 + $0x2c] sm:$0xf]
      %v2446 = vld [vmem:[%s3 + $0x30] sm:$0xf]
      %v2447 = vld [vmem:[%s3 + $0x34] sm:$0xf]
      %v2448 = vld [vmem:[%s3 + $0x38] sm:$0xf]
      %v2449 = vld [vmem:[%s3 + $0x3c] sm:$0xf]
      %v2466 = vunpack.c.l.b16 %v2434
      %v2467 = vunpack.c.l.b16 %v2435
      %v2468 = vunpack.c.l.b16 %v2436
      %v2469 = vunpack.c.l.b16 %v2437
      %v2470 = vunpack.c.l.b16 %v2438
      %v2471 = vunpack.c.l.b16 %v2439
      %v2472 = vunpack.c.l.b16 %v2440
      %v2473 = vunpack.c.l.b16 %v2441
      %v2474 = vunpack.c.l.b16 %v2442
      %v2475 = vunpack.c.l.b16 %v2443
      %v2476 = vunpack.c.l.b16 %v2444
      %v2477 = vunpack.c.l.b16 %v2445
      %v2478 = vunpack.c.l.b16 %v2446
      %v2479 = vunpack.c.l.b16 %v2447
      %v2480 = vunpack.c.l.b16 %v2448
      %v2481 = vunpack.c.l.b16 %v2449
      %v2482 = vpack.c.b16 %v2467, %v2466
      %v2483 = vpack.c.b16 %v2469, %v2468
      %v2484 = vpack.c.b16 %v2471, %v2470
      %v2485 = vpack.c.b16 %v2473, %v2472
      %v2486 = vpack.c.b16 %v2475, %v2474
      %v2487 = vpack.c.b16 %v2477, %v2476
      %v2488 = vpack.c.b16 %v2479, %v2478
      %v2489 = vpack.c.b16 %v2481, %v2480
      %2498 = vmatprep.subr.bf16.mxu0 0
      %2499 = vmatpush1.bf16.msra.mxu0 %v2482
      %2500 = vmatprep.subr.bf16.mxu0 0
      %2501 = vmatpush1.bf16.msra.mxu0 %v2483
      %2502 = vmatprep.subr.bf16.mxu0 0
      %2503 = vmatpush1.bf16.msra.mxu0 %v2484
      %2504 = vmatprep.subr.bf16.mxu0 0
      %2505 = vmatpush1.bf16.msra.mxu0 %v2485
      %2506 = vmatprep.subr.bf16.mxu0 0
      %2507 = vmatpush1.bf16.msra.mxu0 %v2486
      %2508 = vmatprep.subr.bf16.mxu0 0
      %2509 = vmatpush1.bf16.msra.mxu0 %v2487
      %2510 = vmatprep.subr.bf16.mxu0 0
      %2511 = vmatpush1.bf16.msra.mxu0 %v2488
      %2512 = vmatprep.subr.bf16.mxu0 0
      %2513 = vmatpush1.bf16.msra.mxu0 %v2489
      %2514 = vmatprep.subr.bf16.mxu0 0
      %2515 = vmatpush1.bf16.msra.mxu0 0
      %2516 = vmatprep.subr.bf16.mxu0 0
      %2517 = vmatpush1.bf16.msra.mxu0 0
      %2518 = vmatprep.subr.bf16.mxu0 0
      %2519 = vmatpush1.bf16.msra.mxu0 0
      %2520 = vmatprep.subr.bf16.mxu0 0
      %2521 = vmatpush1.bf16.msra.mxu0 0
      %2522 = vmatprep.subr.bf16.mxu0 0
      %2523 = vmatpush1.bf16.msra.mxu0 0
      %2524 = vmatprep.subr.bf16.mxu0 0
      %2525 = vmatpush1.bf16.msra.mxu0 0
      %2526 = vmatprep.subr.bf16.mxu0 0
      %2527 = vmatpush1.bf16.msra.mxu0 0
      %2528 = vmatprep.subr.bf16.mxu0 0
      %2529 = vmatpush1.bf16.msra.mxu0 0
      %2530 = vmatprep.mubr.bf16.mxu0 0
      %2531 = vmatmul.mubr.bf16.gmra.mrb[0].mxu0 %v2418
      %v2532 = vpop.f32.mrb[0].mxu0
      %v2533 = vadd.f32 0.0, %v2532
      %v2534 = vpop.f32.mrb[0].mxu0
      %v2535 = vpop.f32.mrb[0].mxu0
      %v2536 = vadd.f32 0.0, %v2535
      %v2537 = vpop.f32.mrb[0].mxu0
      %2538 = vmatprep.mubr.bf16.mxu0 0
      %2539 = vmatmul.mubr.bf16.gmra.mrb[0].mxu0 %v2419
      %v2540 = vpop.f32.mrb[0].mxu0
      %v2541 = vadd.f32 0.0, %v2540
      %v2542 = vpop.f32.mrb[0].mxu0
      %v2543 = vpop.f32.mrb[0].mxu0
      %v2544 = vadd.f32 0.0, %v2543
      %v2545 = vpop.f32.mrb[0].mxu0
      %2546 = vmatprep.mubr.bf16.mxu0 0
      %2547 = vmatmul.mubr.bf16.gmra.mrb[0].mxu0 %v2420
      %v2548 = vpop.f32.mrb[0].mxu0
      %v2549 = vadd.f32 0.0, %v2548
      %v2550 = vpop.f32.mrb[0].mxu0
      %v2551 = vpop.f32.mrb[0].mxu0
      %v2552 = vadd.f32 0.0, %v2551
      %v2553 = vpop.f32.mrb[0].mxu0
      %2554 = vmatprep.mubr.bf16.mxu0 0
      %2555 = vmatmul.mubr.bf16.gmra.mrb[0].mxu0 %v2421
      %v2556 = vpop.f32.mrb[0].mxu0
      %v2557 = vadd.f32 0.0, %v2556
      %v2558 = vpop.f32.mrb[0].mxu0
      %v2559 = vpop.f32.mrb[0].mxu0
      %v2560 = vadd.f32 0.0, %v2559
      %v2561 = vpop.f32.mrb[0].mxu0
      %2562 = vmatprep.mubr.bf16.mxu0 0
      %2563 = vmatmul.mubr.bf16.gmra.mrb[0].mxu0 %v2422
      %v2564 = vpop.f32.mrb[0].mxu0
      %v2565 = vadd.f32 0.0, %v2564
      %v2566 = vpop.f32.mrb[0].mxu0
      %v2567 = vpop.f32.mrb[0].mxu0
      %v2568 = vadd.f32 0.0, %v2567
      %v2569 = vpop.f32.mrb[0].mxu0
      %2570 = vmatprep.mubr.bf16.mxu0 0
      %2571 = vmatmul.mubr.bf16.gmra.mrb[0].mxu0 %v2423
      %v2572 = vpop.f32.mrb[0].mxu0
      %v2573 = vadd.f32 0.0, %v2572
      %v2574 = vpop.f32.mrb[0].mxu0
      %v2575 = vpop.f32.mrb[0].mxu0
      %v2576 = vadd.f32 0.0, %v2575
      %v2577 = vpop.f32.mrb[0].mxu0
      %2578 = vmatprep.mubr.bf16.mxu0 0
      %2579 = vmatmul.mubr.bf16.gmra.mrb[0].mxu0 %v2424
      %v2580 = vpop.f32.mrb[0].mxu0
      %v2581 = vadd.f32 0.0, %v2580
      %v2582 = vpop.f32.mrb[0].mxu0
      %v2583 = vpop.f32.mrb[0].mxu0
      %v2584 = vadd.f32 0.0, %v2583
      %v2585 = vpop.f32.mrb[0].mxu0
      %2586 = vmatprep.mubr.bf16.mxu0 0
      %2587 = vmatmul.mubr.bf16.gmra.mrb[0].mxu0 %v2425
      %v2588 = vpop.f32.mrb[0].mxu0
      %v2589 = vadd.f32 0.0, %v2588
      %v2590 = vpop.f32.mrb[0].mxu0
      %v2591 = vpop.f32.mrb[0].mxu0
      %v2592 = vadd.f32 0.0, %v2591
      %v2593 = vpop.f32.mrb[0].mxu0
      %2594 = vmatprep.mubr.bf16.mxu0 0
      %2595 = vmatmul.mubr.bf16.gmra.mrb[0].mxu0 %v2426
      %v2596 = vpop.f32.mrb[0].mxu0
      %v2597 = vadd.f32 0.0, %v2596
      %v2598 = vpop.f32.mrb[0].mxu0
      %v2599 = vpop.f32.mrb[0].mxu0
      %v2600 = vadd.f32 0.0, %v2599
      %v2601 = vpop.f32.mrb[0].mxu0
      %2602 = vmatprep.mubr.bf16.mxu0 0
      %2603 = vmatmul.mubr.bf16.gmra.mrb[0].mxu0 %v2427
      %v2604 = vpop.f32.mrb[0].mxu0
      %v2605 = vadd.f32 0.0, %v2604
      %v2606 = vpop.f32.mrb[0].mxu0
      %v2607 = vpop.f32.mrb[0].mxu0
      %v2608 = vadd.f32 0.0, %v2607
      %v2609 = vpop.f32.mrb[0].mxu0
      %2610 = vmatprep.mubr.bf16.mxu0 0
      %2611 = vmatmul.mubr.bf16.gmra.mrb[0].mxu0 %v2428
      %v2612 = vpop.f32.mrb[0].mxu0
      %v2613 = vadd.f32 0.0, %v2612
      %v2614 = vpop.f32.mrb[0].mxu0
      %v2615 = vpop.f32.mrb[0].mxu0
      %v2616 = vadd.f32 0.0, %v2615
      %v2617 = vpop.f32.mrb[0].mxu0
      %2618 = vmatprep.mubr.bf16.mxu0 0
      %2619 = vmatmul.mubr.bf16.gmra.mrb[0].mxu0 %v2429
      %v2620 = vpop.f32.mrb[0].mxu0
      %v2621 = vadd.f32 0.0, %v2620
      %v2622 = vpop.f32.mrb[0].mxu0
      %v2623 = vpop.f32.mrb[0].mxu0
      %v2624 = vadd.f32 0.0, %v2623
      %v2625 = vpop.f32.mrb[0].mxu0
      %2626 = vmatprep.mubr.bf16.mxu0 0
      %2627 = vmatmul.mubr.bf16.gmra.mrb[0].mxu0 %v2430
      %v2628 = vpop.f32.mrb[0].mxu0
      %v2629 = vadd.f32 0.0, %v2628
      %v2630 = vpop.f32.mrb[0].mxu0
      %v2631 = vpop.f32.mrb[0].mxu0
      %v2632 = vadd.f32 0.0, %v2631
      %v2633 = vpop.f32.mrb[0].mxu0
      %2634 = vmatprep.mubr.bf16.mxu0 0
      %2635 = vmatmul.mubr.bf16.gmra.mrb[0].mxu0 %v2431
      %v2636 = vpop.f32.mrb[0].mxu0
      %v2637 = vadd.f32 0.0, %v2636
      %v2638 = vpop.f32.mrb[0].mxu0
      %v2639 = vpop.f32.mrb[0].mxu0
      %v2640 = vadd.f32 0.0, %v2639
      %v2641 = vpop.f32.mrb[0].mxu0
      %2642 = vmatprep.mubr.bf16.mxu0 0
      %2643 = vmatmul.mubr.bf16.gmra.mrb[0].mxu0 %v2432
      %v2644 = vpop.f32.mrb[0].mxu0
      %v2645 = vadd.f32 0.0, %v2644
      %v2646 = vpop.f32.mrb[0].mxu0
      %v2647 = vpop.f32.mrb[0].mxu0
      %v2648 = vadd.f32 0.0, %v2647
      %v2649 = vpop.f32.mrb[0].mxu0
      %2650 = vmatprep.mubr.bf16.mxu0 0
      %2651 = vmatmul.mubr.bf16.gmra.mrb[0].mxu0 %v2433
      %v2652 = vpop.f32.mrb[0].mxu0
      %v2653 = vadd.f32 0.0, %v2652
      %v2654 = vpop.f32.mrb[0].mxu0
      %v2655 = vpop.f32.mrb[0].mxu0
      %v2656 = vadd.f32 0.0, %v2655
      %v2657 = vpop.f32.mrb[0].mxu0
      %2658 = vdwg.mxu0
      %v2659 = vld [vmem:[%s4] sm:$0x1]
      %v2661 = vlaneseq
      %v2662 = vshrl.u32 %v2661, 7
      %v2663 = vsub.s32 0, %v2662
      %v2664 = vrot.slane %v2659, %v2663
      %v2666 = vmul.f32 %v2533, %v2664
      %v2667 = vmul.f32 %v2536, %v2664
      %v2668 = vmul.f32 %v2541, %v2664
      %v2669 = vmul.f32 %v2544, %v2664
      %v2670 = vmul.f32 %v2549, %v2664
      %v2671 = vmul.f32 %v2552, %v2664
      %v2672 = vmul.f32 %v2557, %v2664
      %v2673 = vmul.f32 %v2560, %v2664
      %v2674 = vmul.f32 %v2565, %v2664
      %v2675 = vmul.f32 %v2568, %v2664
      %v2676 = vmul.f32 %v2573, %v2664
      %v2677 = vmul.f32 %v2576, %v2664
      %v2678 = vmul.f32 %v2581, %v2664
      %v2679 = vmul.f32 %v2584, %v2664
      %v2680 = vmul.f32 %v2589, %v2664
      %v2681 = vmul.f32 %v2592, %v2664
      %v2682 = vmul.f32 %v2597, %v2664
      %v2683 = vmul.f32 %v2600, %v2664
      %v2684 = vmul.f32 %v2605, %v2664
      %v2685 = vmul.f32 %v2608, %v2664
      %v2686 = vmul.f32 %v2613, %v2664
      %v2687 = vmul.f32 %v2616, %v2664
      %v2688 = vmul.f32 %v2621, %v2664
      %v2689 = vmul.f32 %v2624, %v2664
      %v2690 = vmul.f32 %v2629, %v2664
      %v2691 = vmul.f32 %v2632, %v2664
      %v2692 = vmul.f32 %v2637, %v2664
      %v2693 = vmul.f32 %v2640, %v2664
      %v2694 = vmul.f32 %v2645, %v2664
      %v2695 = vmul.f32 %v2648, %v2664
      %v2696 = vmul.f32 %v2653, %v2664
      %v2697 = vmul.f32 %v2656, %v2664
      %v2698 = vld [vmem:[%s5] sm:$0x1]
      %v2700 = vlaneseq
      %v2701 = vshrl.u32 %v2700, 7
      %v2702 = vsub.s32 0, %v2701
      %v2703 = vrot.slane %v2698, %v2702
      %v2705 = vadd.f32 %v2666, %v2703
      %v2706 = vadd.f32 %v2667, %v2703
      %v2707 = vadd.f32 %v2668, %v2703
      %v2708 = vadd.f32 %v2669, %v2703
      %v2709 = vadd.f32 %v2670, %v2703
      %v2710 = vadd.f32 %v2671, %v2703
      %v2711 = vadd.f32 %v2672, %v2703
      %v2712 = vadd.f32 %v2673, %v2703
      %v2713 = vadd.f32 %v2674, %v2703
      %v2714 = vadd.f32 %v2675, %v2703
      %v2715 = vadd.f32 %v2676, %v2703
      %v2716 = vadd.f32 %v2677, %v2703
      %v2717 = vadd.f32 %v2678, %v2703
      %v2718 = vadd.f32 %v2679, %v2703
      %v2719 = vadd.f32 %v2680, %v2703
      %v2720 = vadd.f32 %v2681, %v2703
      %v2721 = vadd.f32 %v2682, %v2703
      %v2722 = vadd.f32 %v2683, %v2703
      %v2723 = vadd.f32 %v2684, %v2703
      %v2724 = vadd.f32 %v2685, %v2703
      %v2725 = vadd.f32 %v2686, %v2703
      %v2726 = vadd.f32 %v2687, %v2703
      %v2727 = vadd.f32 %v2688, %v2703
      %v2728 = vadd.f32 %v2689, %v2703
      %v2729 = vadd.f32 %v2690, %v2703
      %v2730 = vadd.f32 %v2691, %v2703
      %v2731 = vadd.f32 %v2692, %v2703
      %v2732 = vadd.f32 %v2693, %v2703
      %v2733 = vadd.f32 %v2694, %v2703
      %v2734 = vadd.f32 %v2695, %v2703
      %v2735 = vadd.f32 %v2696, %v2703
      %v2736 = vadd.f32 %v2697, %v2703
      %v2737 = vmax.f32 %v2705, 0.0
      %v2738 = vmax.f32 %v2706, 0.0
      %v2739 = vmax.f32 %v2707, 0.0
      %v2740 = vmax.f32 %v2708, 0.0
      %v2741 = vmax.f32 %v2709, 0.0
      %v2742 = vmax.f32 %v2710, 0.0
      %v2743 = vmax.f32 %v2711, 0.0
      %v2744 = vmax.f32 %v2712, 0.0
      %v2745 = vmax.f32 %v2713, 0.0
      %v2746 = vmax.f32 %v2714, 0.0
      %v2747 = vmax.f32 %v2715, 0.0
      %v2748 = vmax.f32 %v2716, 0.0
      %v2749 = vmax.f32 %v2717, 0.0
      %v2750 = vmax.f32 %v2718, 0.0
      %v2751 = vmax.f32 %v2719, 0.0
      %v2752 = vmax.f32 %v2720, 0.0
      %v2753 = vmax.f32 %v2721, 0.0
      %v2754 = vmax.f32 %v2722, 0.0
      %v2755 = vmax.f32 %v2723, 0.0
      %v2756 = vmax.f32 %v2724, 0.0
      %v2757 = vmax.f32 %v2725, 0.0
      %v2758 = vmax.f32 %v2726, 0.0
      %v2759 = vmax.f32 %v2727, 0.0
      %v2760 = vmax.f32 %v2728, 0.0
      %v2761 = vmax.f32 %v2729, 0.0
      %v2762 = vmax.f32 %v2730, 0.0
      %v2763 = vmax.f32 %v2731, 0.0
      %v2764 = vmax.f32 %v2732, 0.0
      %v2765 = vmax.f32 %v2733, 0.0
      %v2766 = vmax.f32 %v2734, 0.0
      %v2767 = vmax.f32 %v2735, 0.0
      %v2768 = vmax.f32 %v2736, 0.0
      %2769 = vst [vmem:[%s275] sm:$0xff] %v2737
      %2770 = vst [vmem:[%s275 + $0x8] sm:$0xff] %v2738
      %2771 = vst [vmem:[%s275 + $0x10] sm:$0xff] %v2739
      %2772 = vst [vmem:[%s275 + $0x18] sm:$0xff] %v2740
      %2773 = vst [vmem:[%s275 + $0x20] sm:$0xff] %v2741
      %2774 = vst [vmem:[%s275 + $0x28] sm:$0xff] %v2742
      %2775 = vst [vmem:[%s275 + $0x30] sm:$0xff] %v2743
      %2776 = vst [vmem:[%s275 + $0x38] sm:$0xff] %v2744
      %2777 = vst [vmem:[%s275 + $0x40] sm:$0xff] %v2745
      %2778 = vst [vmem:[%s275 + $0x48] sm:$0xff] %v2746
      %2779 = vst [vmem:[%s275 + $0x50] sm:$0xff] %v2747
      %2780 = vst [vmem:[%s275 + $0x58] sm:$0xff] %v2748
      %2781 = vst [vmem:[%s275 + $0x60] sm:$0xff] %v2749
      %2782 = vst [vmem:[%s275 + $0x68] sm:$0xff] %v2750
      %2783 = vst [vmem:[%s275 + $0x70] sm:$0xff] %v2751
      %2784 = vst [vmem:[%s275 + $0x78] sm:$0xff] %v2752
      %2785 = vst [vmem:[%s275 + $0x80] sm:$0xff] %v2753
      %2786 = vst [vmem:[%s275 + $0x88] sm:$0xff] %v2754
      %2787 = vst [vmem:[%s275 + $0x90] sm:$0xff] %v2755
      %2788 = vst [vmem:[%s275 + $0x98] sm:$0xff] %v2756
      %2789 = vst [vmem:[%s275 + $0xa0] sm:$0xff] %v2757
      %2790 = vst [vmem:[%s275 + $0xa8] sm:$0xff] %v2758
      %2791 = vst [vmem:[%s275 + $0xb0] sm:$0xff] %v2759
      %2792 = vst [vmem:[%s275 + $0xb8] sm:$0xff] %v2760
      %2793 = vst [vmem:[%s275 + $0xc0] sm:$0xff] %v2761
      %2794 = vst [vmem:[%s275 + $0xc8] sm:$0xff] %v2762
      %2795 = vst [vmem:[%s275 + $0xd0] sm:$0xff] %v2763
      %2796 = vst [vmem:[%s275 + $0xd8] sm:$0xff] %v2764
      %2797 = vst [vmem:[%s275 + $0xe0] sm:$0xff] %v2765
      %2798 = vst [vmem:[%s275 + $0xe8] sm:$0xff] %v2766
      %2799 = vst [vmem:[%s275 + $0xf0] sm:$0xff] %v2767
      %2800 = vst [vmem:[%s275 + $0xf8] sm:$0xff] %v2768
      %s2801 = smul.u32 16, %s22
      %p2802 = scmp.lt.s32.totalorder %s21, 1
      %s2803 = scalar_select %p2802, %s21, 1
      %p2804 = scmp.lt.s32.totalorder %s2801, 15
      %s2805 = scalar_select %p2804, %s2801, 15
      %s2806 = smul.addr %s2805, 2
      %s2807 = smul.addr %s2803, 32
      %s2808 = sadd.s32 %s2806, %s2807
      %s2809 = smul.addr %s2808, 8
      %s2810 = scalar_lea.vmem %s6, %s2809
      // Predicated region
      $region45: #{_depthwise_impl.1} parent=43 // pred_check
        %p2811 = pneg %p180
      $region46: #{_depthwise_impl.1} parent=43 // pred_check_branch
        %2813 = sbr.rel (%p2811) target = $region48
      $region47: #{_depthwise_impl.1} parent=43 // pred_region
        %s2814 = smul.u32 16, %s22
      $region48: #{_depthwise_impl.1} parent=43 // pred_fallthru
        _
    $region44: #{_depthwise_impl.1} parent=5 // pred_fallthru
      _
    %p2815 = scmp.le.s32.totalorder 2, %s12
    // Predicated region
    $region49: #{_depthwise_impl.1} parent=5 // pred_check
      %p2816 = pneg %p2815
    $region50: #{_depthwise_impl.1} parent=5 // pred_check_branch
      %2818 = sbr.rel (%p2816) target = $region52
    $region51: #{_depthwise_impl.1} parent=5 // pred_region
      %s2819 = ssub.s32 %s12, 2
      // Predicated region
      $region53: #{_depthwise_impl.1} parent=51 // pred_check
        %p2820 = pneg %p186
      $region54: #{_depthwise_impl.1} parent=51 // pred_check_branch
        %2822 = sbr.rel (%p2820) target = $region56
      $region55: #{_depthwise_impl.1} parent=51 // pred_region
        %s2823 = smul.u32 16, %s24
        %p2824 = scmp.lt.s32.totalorder %s23, 1
        %s2825 = scalar_select %p2824, %s23, 1
        %p2826 = scmp.lt.s32.totalorder %s2823, 15
        %s2827 = scalar_select %p2826, %s2823, 15
        %s2828 = smul.addr %s2827, 2
        %s2829 = smul.addr %s2825, 32
        %s2830 = sadd.s32 %s2828, %s2829
        %s2831 = smul.addr %s2830, 8
        %s2832 = scalar_lea.vmem %s6, %s2831
      $region56: #{_depthwise_impl.1} parent=51 // pred_fallthru
        _
    $region52: #{_depthwise_impl.1} parent=5 // pred_fallthru
      _
  $region6: #{_depthwise_impl.1} parent=0 // loop_footer
    %s16 = sadd.s32 1, %s12
  $region7: #{_depthwise_impl.1} parent=0 // loop_footer_branch
    %11 = sbr.rel target = $region3
  $region8: #{_depthwise_impl.1} parent=0 // loop_exit
    _

// kernel: _depthwise_impl.1
$region0: #{_depthwise_impl.1}
  #allocation0 [shape = 'u32[]', space=smem, size = 0x4, offset = 0x4, fixed_abs, tag = 'smem constant byte address 0x4 - core index']
  #allocation1 [shape = 'u32[144,128]{1,0:T(1,128)}', space=vmem, size = 0x12000, scoped, tag = 'internal scratch']
  %s0 = inlined_call_operand.vmem [shape: bf16[2,18,18,128], index: 0, kind: input, shape index: {}]
  %s1 = inlined_call_operand.vmem [shape: f32[3,3,128], index: 1, kind: input, shape index: {}]
  %s2 = inlined_call_operand.vmem [shape: f32[1,128], index: 2, kind: input, shape index: {}]
  %s3 = inlined_call_operand.vmem [shape: bf16[128,128], index: 3, kind: input, shape index: {}]
  %s4 = inlined_call_operand.vmem [shape: f32[1,128], index: 4, kind: input, shape index: {}]
  %s5 = inlined_call_operand.vmem [shape: f32[1,128], index: 5, kind: input, shape index: {}]
  %s6 = inlined_call_operand.vmem [shape: f32[2,16,16,128], index: 6, kind: output, shape index: {}]
  %s7 = sld [smem:[#allocation0]]
  $region57: #{_depthwise_impl.1} parent=0
    _
  %s9 = ssub.s32 1, %s7
  %s10 = scalar_select 0, %s9, %s7
  loop: start=0, step=1, limit=4
  $region2: #{_depthwise_impl.1} parent=0 // loop_pre_header
    _
  $region3: #{_depthwise_impl.1} parent=0 // loop_header
    %s12 = sphi 0, %s16
    %p13 = scmp.ge.s32.totalorder %s12, 4
    %s19 = sphi 0, %s31
    %s20 = sphi 0, %s27
    %s21 = sphi 0, %s19
    %s22 = sphi 0, %s20
    %s23 = sphi 0, %s21
    %s24 = sphi 0, %s22
    %s34 = sphi 0, %s36
    %s37 = sphi 0, %s34
    %s38 = sphi 0, %s37
    %s54 = sphi 0, %s38
    %s58 = sphi 0, %s58
    %s60 = sphi 0, %s58
    %s61 = sphi 0, %s60
    %s75 = sphi 0, %s61
    %s79 = sphi 0, %s79
    %s81 = sphi 0, %s79
    %s82 = sphi 0, %s81
    %s96 = sphi 0, %s82
    %s100 = sphi 0, %s100
    %s102 = sphi 0, %s100
    %s103 = sphi 0, %s102
    %s117 = sphi 0, %s103
    %s121 = sphi 0, %s121
    %s123 = sphi 0, %s121
    %s124 = sphi 0, %s123
    %s138 = sphi 0, %s124
    %s142 = sphi 0, %s142
    %s144 = sphi 0, %s142
    %s145 = sphi 0, %s144
    %s159 = sphi 0, %s145
    %s167 = sphi 0, %s169
    %s170 = sphi 0, %s167
    %s171 = sphi 0, %s170
    %s187 = sphi 0, %s171
  $region4: #{_depthwise_impl.1} parent=0 // loop_header_branch
    %15 = sbr.rel (%p13) target = $region8
  $region5: #{_depthwise_impl.1} parent=0 // loop_body
    %s17 = ssub.s32 %s12, 1
    %s18 = ssub.s32 %s12, 2
    %s25 = sadd.s32 1, %s20
    %p26 = scmp.ge.s32.totalorder %s25, 1
    %s27 = scalar_select %p26, 0, %s25
    %s28 = sadd.s32 1, %s19
    %s29 = scalar_select %p26, %s28, %s19
    %p30 = scmp.ge.s32.totalorder %s29, 2
    %s31 = scalar_select %p30, 0, %s29
    %s32 = ssub.s32 %s19, %s31
    %p33 = scmp.eq.s32.totalorder %s32, 0
    %s35 = sadd.s32 %s34, 1
    %s36 = scalar_select %p33, %s34, %s35
    %p39 = pneg %p33
    %p40 = scmp.eq.s32.totalorder %s12, 1
    %p41 = por %p39, %p40
    %p42 = scmp.ne.s32.totalorder %s34, %s37
    %p43 = scmp.eq.s32.totalorder %s12, 0
    %p44 = por %p42, %p43
    %p45 = scmp.ne.s32.totalorder %s34, %s37
    %p46 = scmp.eq.s32.totalorder %s17, 1
    %p47 = por %p45, %p46
    %p48 = scmp.ne.s32.totalorder %s37, %s38
    %p49 = scmp.eq.s32.totalorder %s17, 0
    %p50 = por %p48, %p49
    %p51 = scmp.ne.s32.totalorder %s37, %s38
    %p52 = scmp.eq.s32.totalorder %s18, 1
    %p53 = por %p51, %p52
    %p55 = scmp.ne.s32.totalorder %s38, %s54
    %p56 = scmp.eq.s32.totalorder %s18, 0
    %p57 = por %p55, %p56
    %s59 = sadd.s32 %s58, 1
    %p62 = scmp.eq.s32.totalorder %s12, 1
    %p63 = scmp.ne.s32.totalorder %s58, %s60
    %p64 = scmp.eq.s32.totalorder %s12, 0
    %p65 = por %p63, %p64
    %p66 = scmp.ne.s32.totalorder %s58, %s60
    %p67 = scmp.eq.s32.totalorder %s17, 1
    %p68 = por %p66, %p67
    %p69 = scmp.ne.s32.totalorder %s60, %s61
    %p70 = scmp.eq.s32.totalorder %s17, 0
    %p71 = por %p69, %p70
    %p72 = scmp.ne.s32.totalorder %s60, %s61
    %p73 = scmp.eq.s32.totalorder %s18, 1
    %p74 = por %p72, %p73
    %p76 = scmp.ne.s32.totalorder %s61, %s75
    %p77 = scmp.eq.s32.totalorder %s18, 0
    %p78 = por %p76, %p77
    %s80 = sadd.s32 %s79, 1
    %p83 = scmp.eq.s32.totalorder %s12, 1
    %p84 = scmp.ne.s32.totalorder %s79, %s81
    %p85 = scmp.eq.s32.totalorder %s12, 0
    %p86 = por %p84, %p85
    %p87 = scmp.ne.s32.totalorder %s79, %s81
    %p88 = scmp.eq.s32.totalorder %s17, 1
    %p89 = por %p87, %p88
    %p90 = scmp.ne.s32.totalorder %s81, %s82
    %p91 = scmp.eq.s32.totalorder %s17, 0
    %p92 = por %p90, %p91
    %p93 = scmp.ne.s32.totalorder %s81, %s82
    %p94 = scmp.eq.s32.totalorder %s18, 1
    %p95 = por %p93, %p94
    %p97 = scmp.ne.s32.totalorder %s82, %s96
    %p98 = scmp.eq.s32.totalorder %s18, 0
    %p99 = por %p97, %p98
    %s101 = sadd.s32 %s100, 1
    %p104 = scmp.eq.s32.totalorder %s12, 1
    %p105 = scmp.ne.s32.totalorder %s100, %s102
    %p106 = scmp.eq.s32.totalorder %s12, 0
    %p107 = por %p105, %p106
    %p108 = scmp.ne.s32.totalorder %s100, %s102
    %p109 = scmp.eq.s32.totalorder %s17, 1
    %p110 = por %p108, %p109
    %p111 = scmp.ne.s32.totalorder %s102, %s103
    %p112 = scmp.eq.s32.totalorder %s17, 0
    %p113 = por %p111, %p112
    %p114 = scmp.ne.s32.totalorder %s102, %s103
    %p115 = scmp.eq.s32.totalorder %s18, 1
    %p116 = por %p114, %p115
    %p118 = scmp.ne.s32.totalorder %s103, %s117
    %p119 = scmp.eq.s32.totalorder %s18, 0
    %p120 = por %p118, %p119
    %s122 = sadd.s32 %s121, 1
    %p125 = scmp.eq.s32.totalorder %s12, 1
    %p126 = scmp.ne.s32.totalorder %s121, %s123
    %p127 = scmp.eq.s32.totalorder %s12, 0
    %p128 = por %p126, %p127
    %p129 = scmp.ne.s32.totalorder %s121, %s123
    %p130 = scmp.eq.s32.totalorder %s17, 1
    %p131 = por %p129, %p130
    %p132 = scmp.ne.s32.totalorder %s123, %s124
    %p133 = scmp.eq.s32.totalorder %s17, 0
    %p134 = por %p132, %p133
    %p135 = scmp.ne.s32.totalorder %s123, %s124
    %p136 = scmp.eq.s32.totalorder %s18, 1
    %p137 = por %p135, %p136
    %p139 = scmp.ne.s32.totalorder %s124, %s138
    %p140 = scmp.eq.s32.totalorder %s18, 0
    %p141 = por %p139, %p140
    %s143 = sadd.s32 %s142, 1
    %p146 = scmp.eq.s32.totalorder %s12, 1
    %p147 = scmp.ne.s32.totalorder %s142, %s144
    %p148 = scmp.eq.s32.totalorder %s12, 0
    %p149 = por %p147, %p148
    %p150 = scmp.ne.s32.totalorder %s142, %s144
    %p151 = scmp.eq.s32.totalorder %s17, 1
    %p152 = por %p150, %p151
    %p153 = scmp.ne.s32.totalorder %s144, %s145
    %p154 = scmp.eq.s32.totalorder %s17, 0
    %p155 = por %p153, %p154
    %p156 = scmp.ne.s32.totalorder %s144, %s145
    %p157 = scmp.eq.s32.totalorder %s18, 1
    %p158 = por %p156, %p157
    %p160 = scmp.ne.s32.totalorder %s145, %s159
    %p161 = scmp.eq.s32.totalorder %s18, 0
    %p162 = por %p160, %p161
    %s163 = ssub.s32 %s19, %s31
    %s164 = ssub.s32 %s20, %s27
    %s165 = sor.u32 %s163, %s164
    %p166 = scmp.eq.s32.totalorder %s165, 0
    %s168 = sadd.s32 %s167, 1
    %s169 = scalar_select %p166, %s167, %s168
    %p172 = pneg %p166
    %p173 = scmp.eq.s32.totalorder %s12, 1
    %p174 = por %p172, %p173
    %p175 = scmp.ne.s32.totalorder %s167, %s170
    %p176 = scmp.eq.s32.totalorder %s12, 0
    %p177 = por %p175, %p176
    %p178 = scmp.ne.s32.totalorder %s167, %s170
    %p179 = scmp.eq.s32.totalorder %s17, 1
    %p180 = por %p178, %p179
    %p181 = scmp.ne.s32.totalorder %s170, %s171
    %p182 = scmp.eq.s32.totalorder %s17, 0
    %p183 = por %p181, %p182
    %p184 = scmp.ne.s32.totalorder %s170, %s171
    %p185 = scmp.eq.s32.totalorder %s18, 1
    %p186 = por %p184, %p185
    %p188 = scmp.ne.s32.totalorder %s171, %s187
    %p189 = scmp.eq.s32.totalorder %s18, 0
    %p190 = por %p188, %p189
    %p191 = scmp.le.s32.totalorder 1, %s12
    %p192 = scmp.lt.s32.totalorder %s12, 3
    %p193 = pnand %p191, %p192
    %p194 = pneg %p193
    // Predicated region
    $region9: #{_depthwise_impl.1} parent=5 // pred_check
      _
    $region10: #{_depthwise_impl.1} parent=5 // pred_check_branch
      %196 = sbr.rel (%p193) target = $region12
    $region11: #{_depthwise_impl.1} parent=5 // pred_region
      %s197 = ssub.s32 %s12, 1
      // Predicated region
      $region13: #{_depthwise_impl.1} parent=11 // pred_check
        %p198 = pneg %p71
      $region14: #{_depthwise_impl.1} parent=11 // pred_check_branch
        %200 = sbr.rel (%p198) target = $region16
      $region15: #{_depthwise_impl.1} parent=11 // pred_region
        _
      $region16: #{_depthwise_impl.1} parent=11 // pred_fallthru
        _
      // Predicated region
      $region17: #{_depthwise_impl.1} parent=11 // pred_check
        %p201 = pneg %p92
      $region18: #{_depthwise_impl.1} parent=11 // pred_check_branch
        %203 = sbr.rel (%p201) target = $region20
      $region19: #{_depthwise_impl.1} parent=11 // pred_region
        _
      $region20: #{_depthwise_impl.1} parent=11 // pred_fallthru
        _
      // Predicated region
      $region21: #{_depthwise_impl.1} parent=11 // pred_check
        %p204 = pneg %p113
      $region22: #{_depthwise_impl.1} parent=11 // pred_check_branch
        %206 = sbr.rel (%p204) target = $region24
      $region23: #{_depthwise_impl.1} parent=11 // pred_region
        _
      $region24: #{_depthwise_impl.1} parent=11 // pred_fallthru
        _
      // Predicated region
      $region25: #{_depthwise_impl.1} parent=11 // pred_check
        %p207 = pneg %p134
      $region26: #{_depthwise_impl.1} parent=11 // pred_check_branch
        %209 = sbr.rel (%p207) target = $region28
      $region27: #{_depthwise_impl.1} parent=11 // pred_region
        _
      $region28: #{_depthwise_impl.1} parent=11 // pred_fallthru
        _
      // Predicated region
      $region29: #{_depthwise_impl.1} parent=11 // pred_check
        %p210 = pneg %p155
      $region30: #{_depthwise_impl.1} parent=11 // pred_check_branch
        %212 = sbr.rel (%p210) target = $region32
      $region31: #{_depthwise_impl.1} parent=11 // pred_region
        _
      $region32: #{_depthwise_impl.1} parent=11 // pred_fallthru
        _
    $region12: #{_depthwise_impl.1} parent=5 // pred_fallthru
      _
    %p213 = scmp.lt.s32.totalorder %s12, 2
    // Predicated region
    $region33: #{_depthwise_impl.1} parent=5 // pred_check
      %p214 = pneg %p213
    $region34: #{_depthwise_impl.1} parent=5 // pred_check_branch
      %216 = sbr.rel (%p214) target = $region36
    $region35: #{_depthwise_impl.1} parent=5 // pred_region
      // Predicated region
      $region37: #{_depthwise_impl.1} parent=35 // pred_check
        %p217 = pneg %p44
      $region38: #{_depthwise_impl.1} parent=35 // pred_check_branch
        %219 = sbr.rel (%p217) target = $region40
      $region39: #{_depthwise_impl.1} parent=35 // pred_region
        %p220 = scmp.lt.s32.totalorder %s19, 1
        %s221 = scalar_select %p220, %s19, 1
        %s222 = smul.addr %s221, 54
        %s223 = smul.addr %s222, 4
        %s224 = scalar_lea.vmem %s0, %s223
      $region40: #{_depthwise_impl.1} parent=35 // pred_fallthru
        _
    $region36: #{_depthwise_impl.1} parent=5 // pred_fallthru
      _
    %p225 = scmp.le.s32.totalorder 1, %s12
    %p226 = scmp.lt.s32.totalorder %s12, 3
    %p227 = pnand %p225, %p226
    %p228 = pneg %p227
    // Predicated region
    $region41: #{_depthwise_impl.1} parent=5 // pred_check
      _
    $region42: #{_depthwise_impl.1} parent=5 // pred_check_branch
      %230 = sbr.rel (%p227) target = $region44
    $region43: #{_depthwise_impl.1} parent=5 // pred_region
      %s231 = ssub.s32 %s12, 1
      %p232 = scmp.lt.s32.totalorder %s21, 1
      %s233 = scalar_select %p232, %s21, 1
      %s234 = smul.addr %s233, 54
      %s235 = smul.addr %s234, 4
      %s236 = scalar_lea.vmem %s0, %s235
      %p237 = pneg %p50
      %p238 = pneg %p47
      %p239 = pneg %p71
      %p240 = pneg %p68
      %p241 = pneg %p92
      %p242 = pneg %p89
      %p243 = pneg %p113
      %p244 = pneg %p110
      %p245 = pneg %p134
      %p246 = pneg %p131
      %p247 = pneg %p155
      %p248 = pneg %p152
      %p249 = pneg %p183
      %p250 = pneg %p180
      %s251 = smul.u32 16, %s22
      %p252 = scmp.lt.s32.totalorder %s21, 1
      %s253 = scalar_select %p252, %s21, 1
      %p254 = scmp.lt.s32.totalorder %s251, 15
      %s255 = scalar_select %p254, %s251, 15
      %s256 = smul.addr %s255, 2
      %s257 = smul.addr %s253, 32
      %s258 = sadd.s32 %s256, %s257
      %s259 = smul.addr %s258, 8
      %s260 = scalar_lea.vmem %s6, %s259
      %p261 = scmp.lt.s32.totalorder %s21, 1
      %s262 = scalar_select %p261, %s21, 1
      %s263 = smul.addr %s262, 54
      %s264 = smul.addr %s263, 4
      %s265 = scalar_lea.vmem %s0, %s264
      %s266 = smul.u32 16, %s22
      %p267 = scmp.lt.s32.totalorder %s21, 1
      %s268 = scalar_select %p267, %s21, 1
      %p269 = scmp.lt.s32.totalorder %s266, 15
      %s270 = scalar_select %p269, %s266, 15
      %s271 = smul.addr %s270, 2
      %s272 = smul.addr %s268, 32
      %s273 = sadd.s32 %s271, %s272
      %s274 = smul.addr %s273, 8
      %s275 = scalar_lea.vmem %s6, %s274
      %s276 = smul.u32 16, %s22
      %s278 = smul.u32 %s22, 16
      %v279 = vld [vmem:[%s1] sm:$0x7]
      %v280 = vld [vmem:[%s1 + $0x4] sm:$0x7]
      %v281 = vld [vmem:[%s1 + $0x8] sm:$0x7]
      %s282 = smul.u32 %s278, 3
      %s283 = smul.addr %s282, 4
      %s284 = scalar_lea.vmem %s265, %s283
      %v285 = vld [vmem:[%s284] sm:$0xf]
      %v286 = vld [vmem:[%s284 + $0x4] sm:$0xf]
      %v287 = vld [vmem:[%s284 + $0xc] sm:$0xf]
      %v288 = vld [vmem:[%s284 + $0x10] sm:$0xf]
      %v289 = vld [vmem:[%s284 + $0x18] sm:$0xf]
      %v290 = vld [vmem:[%s284 + $0x1c] sm:$0xf]
      %v291 = vld [vmem:[%s284 + $0x24] sm:$0xf]
      %v292 = vld [vmem:[%s284 + $0x28] sm:$0xf]
      %v293 = vld [vmem:[%s284 + $0x30] sm:$0xf]
      %v294 = vld [vmem:[%s284 + $0x34] sm:$0xf]
      %v295 = vld [vmem:[%s284 + $0x3c] sm:$0xf]
      %v296 = vld [vmem:[%s284 + $0x40] sm:$0xf]
      %v297 = vld [vmem:[%s284 + $0x48] sm:$0xf]
      %v298 = vld [vmem:[%s284 + $0x4c] sm:$0xf]
      %v299 = vld [vmem:[%s284 + $0x54] sm:$0xf]
      %v300 = vld [vmem:[%s284 + $0x58] sm:$0xf]
      %v301 = vld [vmem:[%s284 + $0x60] sm:$0xf]
      %v302 = vld [vmem:[%s284 + $0x64] sm:$0xf]
      %v303 = vld [vmem:[%s284 + $0x6c] sm:$0xf]
      %v304 = vld [vmem:[%s284 + $0x70] sm:$0xf]
      %v305 = vld [vmem:[%s284 + $0x78] sm:$0xf]
      %v306 = vld [vmem:[%s284 + $0x7c] sm:$0xf]
      %v307 = vld [vmem:[%s284 + $0x84] sm:$0xf]
      %v308 = vld [vmem:[%s284 + $0x88] sm:$0xf]
      %v309 = vld [vmem:[%s284 + $0x90] sm:$0xf]
      %v310 = vld [vmem:[%s284 + $0x94] sm:$0xf]
      %v311 = vld [vmem:[%s284 + $0x9c] sm:$0xf]
      %v312 = vld [vmem:[%s284 + $0xa0] sm:$0xf]
      %v313 = vld [vmem:[%s284 + $0xa8] sm:$0xf]
      %v314 = vld [vmem:[%s284 + $0xac] sm:$0xf]
      %v315 = vld [vmem:[%s284 + $0xb4] sm:$0xf]
      %v316 = vld [vmem:[%s284 + $0xb8] sm:$0xf]
      %v317 = vunpack.c.l.bf16 %v285
      %v318 = vunpack.c.l.bf16 %v286
      %v319 = vunpack.c.l.bf16 %v287
      %v320 = vunpack.c.l.bf16 %v288
      %v321 = vunpack.c.l.bf16 %v289
      %v322 = vunpack.c.l.bf16 %v290
      %v323 = vunpack.c.l.bf16 %v291
      %v324 = vunpack.c.l.bf16 %v292
      %v325 = vunpack.c.l.bf16 %v293
      %v326 = vunpack.c.l.bf16 %v294
      %v327 = vunpack.c.l.bf16 %v295
      %v328 = vunpack.c.l.bf16 %v296
      %v329 = vunpack.c.l.bf16 %v297
      %v330 = vunpack.c.l.bf16 %v298
      %v331 = vunpack.c.l.bf16 %v299
      %v332 = vunpack.c.l.bf16 %v300
      %v333 = vunpack.c.l.bf16 %v301
      %v334 = vunpack.c.l.bf16 %v302
      %v335 = vunpack.c.l.bf16 %v303
      %v336 = vunpack.c.l.bf16 %v304
      %v337 = vunpack.c.l.bf16 %v305
      %v338 = vunpack.c.l.bf16 %v306
      %v339 = vunpack.c.l.bf16 %v307
      %v340 = vunpack.c.l.bf16 %v308
      %v341 = vunpack.c.l.bf16 %v309
      %v342 = vunpack.c.l.bf16 %v310
      %v343 = vunpack.c.l.bf16 %v311
      %v344 = vunpack.c.l.bf16 %v312
      %v345 = vunpack.c.l.bf16 %v313
      %v346 = vunpack.c.l.bf16 %v314
      %v347 = vunpack.c.l.bf16 %v315
      %v348 = vunpack.c.l.bf16 %v316
      %v349 = vlaneseq
      %v350 = vshrl.u32 %v349, 7
      %v351 = vsub.s32 0, %v350
      %v352 = vrot.slane %v279, %v351
      %v353 = vmul.f32 %v317, %v352
      %v354 = vmul.f32 %v318, %v352
      %v355 = vmul.f32 %v319, %v352
      %v356 = vmul.f32 %v320, %v352
      %v357 = vmul.f32 %v321, %v352
      %v358 = vmul.f32 %v322, %v352
      %v359 = vmul.f32 %v323, %v352
      %v360 = vmul.f32 %v324, %v352
      %v361 = vmul.f32 %v325, %v352
      %v362 = vmul.f32 %v326, %v352
      %v363 = vmul.f32 %v327, %v352
      %v364 = vmul.f32 %v328, %v352
      %v365 = vmul.f32 %v329, %v352
      %v366 = vmul.f32 %v330, %v352
      %v367 = vmul.f32 %v331, %v352
      %v368 = vmul.f32 %v332, %v352
      %v369 = vmul.f32 %v333, %v352
      %v370 = vmul.f32 %v334, %v352
      %v371 = vmul.f32 %v335, %v352
      %v372 = vmul.f32 %v336, %v352
      %v373 = vmul.f32 %v337, %v352
      %v374 = vmul.f32 %v338, %v352
      %v375 = vmul.f32 %v339, %v352
      %v376 = vmul.f32 %v340, %v352
      %v377 = vmul.f32 %v341, %v352
      %v378 = vmul.f32 %v342, %v352
      %v379 = vmul.f32 %v343, %v352
      %v380 = vmul.f32 %v344, %v352
      %v381 = vmul.f32 %v345, %v352
      %v382 = vmul.f32 %v346, %v352
      %v383 = vmul.f32 %v347, %v352
      %v384 = vmul.f32 %v348, %v352
      %v385 = vadd.f32 %v353, 0.0
      %v386 = vadd.f32 %v354, 0.0
      %v387 = vadd.f32 %v355, 0.0
      %v388 = vadd.f32 %v356, 0.0
      %v389 = vadd.f32 %v357, 0.0
      %v390 = vadd.f32 %v358, 0.0
      %v391 = vadd.f32 %v359, 0.0
      %v392 = vadd.f32 %v360, 0.0
      %v393 = vadd.f32 %v361, 0.0
      %v394 = vadd.f32 %v362, 0.0
      %v395 = vadd.f32 %v363, 0.0
      %v396 = vadd.f32 %v364, 0.0
      %v397 = vadd.f32 %v365, 0.0
      %v398 = vadd.f32 %v366, 0.0
      %v399 = vadd.f32 %v367, 0.0
      %v400 = vadd.f32 %v368, 0.0
      %v401 = vadd.f32 %v369, 0.0
      %v402 = vadd.f32 %v370, 0.0
      %v403 = vadd.f32 %v371, 0.0
      %v404 = vadd.f32 %v372, 0.0
      %v405 = vadd.f32 %v373, 0.0
      %v406 = vadd.f32 %v374, 0.0
      %v407 = vadd.f32 %v375, 0.0
      %v408 = vadd.f32 %v376, 0.0
      %v409 = vadd.f32 %v377, 0.0
      %v410 = vadd.f32 %v378, 0.0
      %v411 = vadd.f32 %v379, 0.0
      %v412 = vadd.f32 %v380, 0.0
      %v413 = vadd.f32 %v381, 0.0
      %v414 = vadd.f32 %v382, 0.0
      %v415 = vadd.f32 %v383, 0.0
      %v416 = vadd.f32 %v384, 0.0
      %v417 = vld [vmem:[%s284 + $0x8] sm:$0x1]
      %v418 = vld [vmem:[%s284 + $0x14] sm:$0x1]
      %v419 = vld [vmem:[%s284 + $0x20] sm:$0x1]
      %v420 = vld [vmem:[%s284 + $0x2c] sm:$0x1]
      %v421 = vld [vmem:[%s284 + $0x38] sm:$0x1]
      %v422 = vld [vmem:[%s284 + $0x44] sm:$0x1]
      %v423 = vld [vmem:[%s284 + $0x50] sm:$0x1]
      %v424 = vld [vmem:[%s284 + $0x5c] sm:$0x1]
      %v425 = vld [vmem:[%s284 + $0x68] sm:$0x1]
      %v426 = vld [vmem:[%s284 + $0x74] sm:$0x1]
      %v427 = vld [vmem:[%s284 + $0x80] sm:$0x1]
      %v428 = vld [vmem:[%s284 + $0x8c] sm:$0x1]
      %v429 = vld [vmem:[%s284 + $0x98] sm:$0x1]
      %v430 = vld [vmem:[%s284 + $0xa4] sm:$0x1]
      %v431 = vld [vmem:[%s284 + $0xb0] sm:$0x1]
      %v432 = vld [vmem:[%s284 + $0xbc] sm:$0x1]
      %v433 = vunpack.c.l.bf16 %v417
      %v434 = vunpack.c.l.bf16 %v418
      %v435 = vunpack.c.l.bf16 %v419
      %v436 = vunpack.c.l.bf16 %v420
      %v437 = vunpack.c.l.bf16 %v421
      %v438 = vunpack.c.l.bf16 %v422
      %v439 = vunpack.c.l.bf16 %v423
      %v440 = vunpack.c.l.bf16 %v424
      %v441 = vunpack.c.l.bf16 %v425
      %v442 = vunpack.c.l.bf16 %v426
      %v443 = vunpack.c.l.bf16 %v427
      %v444 = vunpack.c.l.bf16 %v428
      %v445 = vunpack.c.l.bf16 %v429
      %v446 = vunpack.c.l.bf16 %v430
      %v447 = vunpack.c.l.bf16 %v431
      %v448 = vunpack.c.l.bf16 %v432
      %v449 = vlaneseq
      %v450 = vshrl.u32 %v449, 7
      %v451 = vsub.s32 1, %v450
      %v452 = vrot.slane %v279, %v451
      %v453 = vmul.f32 %v317, %v452
      %v454 = vmul.f32 %v318, %v452
      %v455 = vmul.f32 %v433, %v452
      %v456 = vmul.f32 %v319, %v452
      %v457 = vmul.f32 %v320, %v452
      %v458 = vmul.f32 %v434, %v452
      %v459 = vmul.f32 %v321, %v452
      %v460 = vmul.f32 %v322, %v452
      %v461 = vmul.f32 %v435, %v452
      %v462 = vmul.f32 %v323, %v452
      %v463 = vmul.f32 %v324, %v452
      %v464 = vmul.f32 %v436, %v452
      %v465 = vmul.f32 %v325, %v452
      %v466 = vmul.f32 %v326, %v452
      %v467 = vmul.f32 %v437, %v452
      %v468 = vmul.f32 %v327, %v452
      %v469 = vmul.f32 %v328, %v452
      %v470 = vmul.f32 %v438, %v452
      %v471 = vmul.f32 %v329, %v452
      %v472 = vmul.f32 %v330, %v452
      %v473 = vmul.f32 %v439, %v452
      %v474 = vmul.f32 %v331, %v452
      %v475 = vmul.f32 %v332, %v452
      %v476 = vmul.f32 %v440, %v452
      %v477 = vmul.f32 %v333, %v452
      %v478 = vmul.f32 %v334, %v452
      %v479 = vmul.f32 %v441, %v452
      %v480 = vmul.f32 %v335, %v452
      %v481 = vmul.f32 %v336, %v452
      %v482 = vmul.f32 %v442, %v452
      %v483 = vmul.f32 %v337, %v452
      %v484 = vmul.f32 %v338, %v452
      %v485 = vmul.f32 %v443, %v452
      %v486 = vmul.f32 %v339, %v452
      %v487 = vmul.f32 %v340, %v452
      %v488 = vmul.f32 %v444, %v452
      %v489 = vmul.f32 %v341, %v452
      %v490 = vmul.f32 %v342, %v452
      %v491 = vmul.f32 %v445, %v452
      %v492 = vmul.f32 %v343, %v452
      %v493 = vmul.f32 %v344, %v452
      %v494 = vmul.f32 %v446, %v452
      %v495 = vmul.f32 %v345, %v452
      %v496 = vmul.f32 %v346, %v452
      %v497 = vmul.f32 %v447, %v452
      %v498 = vmul.f32 %v347, %v452
      %v499 = vmul.f32 %v348, %v452
      %v500 = vmul.f32 %v448, %v452
      %vm549 = vcmask 1046528
      %v550 = vrot.slane %v453, 1
      %v551 = vrot.slane %v454, 1
      %v552 = vsel %vm549, %v550, %v551
      %v553 = vrot.slane %v455, 1
      %v554 = vsel %vm549, %v551, %v553
      %v555 = vrot.slane %v456, 1
      %v556 = vrot.slane %v457, 1
      %v557 = vsel %vm549, %v555, %v556
      %v558 = vrot.slane %v458, 1
      %v559 = vsel %vm549, %v556, %v558
      %v560 = vrot.slane %v459, 1
      %v561 = vrot.slane %v460, 1
      %v562 = vsel %vm549, %v560, %v561
      %v563 = vrot.slane %v461, 1
      %v564 = vsel %vm549, %v561, %v563
      %v565 = vrot.slane %v462, 1
      %v566 = vrot.slane %v463, 1
      %v567 = vsel %vm549, %v565, %v566
      %v568 = vrot.slane %v464, 1
      %v569 = vsel %vm549, %v566, %v568
      %v570 = vrot.slane %v465, 1
      %v571 = vrot.slane %v466, 1
      %v572 = vsel %vm549, %v570, %v571
      %v573 = vrot.slane %v467, 1
      %v574 = vsel %vm549, %v571, %v573
      %v575 = vrot.slane %v468, 1
      %v576 = vrot.slane %v469, 1
      %v577 = vsel %vm549, %v575, %v576
      %v578 = vrot.slane %v470, 1
      %v579 = vsel %vm549, %v576, %v578
      %v580 = vrot.slane %v471, 1
      %v581 = vrot.slane %v472, 1
      %v582 = vsel %vm549, %v580, %v581
      %v583 = vrot.slane %v473, 1
      %v584 = vsel %vm549, %v581, %v583
      %v585 = vrot.slane %v474, 1
      %v586 = vrot.slane %v475, 1
      %v587 = vsel %vm549, %v585, %v586
      %v588 = vrot.slane %v476, 1
      %v589 = vsel %vm549, %v586, %v588
      %v590 = vrot.slane %v477, 1
      %v591 = vrot.slane %v478, 1
      %v592 = vsel %vm549, %v590, %v591
      %v593 = vrot.slane %v479, 1
      %v594 = vsel %vm549, %v591, %v593
      %v595 = vrot.slane %v480, 1
      %v596 = vrot.slane %v481, 1
      %v597 = vsel %vm549, %v595, %v596
      %v598 = vrot.slane %v482, 1
      %v599 = vsel %vm549, %v596, %v598
      %v600 = vrot.slane %v483, 1
      %v601 = vrot.slane %v484, 1
      %v602 = vsel %vm549, %v600, %v601
      %v603 = vrot.slane %v485, 1
      %v604 = vsel %vm549, %v601, %v603
      %v605 = vrot.slane %v486, 1
      %v606 = vrot.slane %v487, 1
      %v607 = vsel %vm549, %v605, %v606
      %v608 = vrot.slane %v488, 1
      %v609 = vsel %vm549, %v606, %v608
      %v610 = vrot.slane %v489, 1
      %v611 = vrot.slane %v490, 1
      %v612 = vsel %vm549, %v610, %v611
      %v613 = vrot.slane %v491, 1
      %v614 = vsel %vm549, %v611, %v613
      %v615 = vrot.slane %v492, 1
      %v616 = vrot.slane %v493, 1
      %v617 = vsel %vm549, %v615, %v616
      %v618 = vrot.slane %v494, 1
      %v619 = vsel %vm549, %v616, %v618
      %v620 = vrot.slane %v495, 1
      %v621 = vrot.slane %v496, 1
      %v622 = vsel %vm549, %v620, %v621
      %v623 = vrot.slane %v497, 1
      %v624 = vsel %vm549, %v621, %v623
      %v625 = vrot.slane %v498, 1
      %v626 = vrot.slane %v499, 1
      %v627 = vsel %vm549, %v625, %v626
      %v628 = vrot.slane %v500, 1
      %v629 = vsel %vm549, %v626, %v628
      %v662 = vadd.f32 %v385, %v552
      %v663 = vadd.f32 %v386, %v554
      %v664 = vadd.f32 %v387, %v557
      %v665 = vadd.f32 %v388, %v559
      %v666 = vadd.f32 %v389, %v562
      %v667 = vadd.f32 %v390, %v564
      %v668 = vadd.f32 %v391, %v567
      %v669 = vadd.f32 %v392, %v569
      %v670 = vadd.f32 %v393, %v572
      %v671 = vadd.f32 %v394, %v574
      %v672 = vadd.f32 %v395, %v577
      %v673 = vadd.f32 %v396, %v579
      %v674 = vadd.f32 %v397, %v582
      %v675 = vadd.f32 %v398, %v584
      %v676 = vadd.f32 %v399, %v587
      %v677 = vadd.f32 %v400, %v589
      %v678 = vadd.f32 %v401, %v592
      %v679 = vadd.f32 %v402, %v594
      %v680 = vadd.f32 %v403, %v597
      %v681 = vadd.f32 %v404, %v599
      %v682 = vadd.f32 %v405, %v602
      %v683 = vadd.f32 %v406, %v604
      %v684 = vadd.f32 %v407, %v607
      %v685 = vadd.f32 %v408, %v609
      %v686 = vadd.f32 %v409, %v612
      %v687 = vadd.f32 %v410, %v614
      %v688 = vadd.f32 %v411, %v617
      %v689 = vadd.f32 %v412, %v619
      %v690 = vadd.f32 %v413, %v622
      %v691 = vadd.f32 %v414, %v624
      %v692 = vadd.f32 %v415, %v627
      %v693 = vadd.f32 %v416, %v629
      %v694 = vld [vmem:[%s284] sm:$0xe]
      %v695 = vld [vmem:[%s284 + $0xc] sm:$0xe]
      %v696 = vld [vmem:[%s284 + $0x18] sm:$0xe]
      %v697 = vld [vmem:[%s284 + $0x24] sm:$0xe]
      %v698 = vld [vmem:[%s284 + $0x30] sm:$0xe]
      %v699 = vld [vmem:[%s284 + $0x3c] sm:$0xe]
      %v700 = vld [vmem:[%s284 + $0x48] sm:$0xe]
      %v701 = vld [vmem:[%s284 + $0x54] sm:$0xe]
      %v702 = vld [vmem:[%s284 + $0x60] sm:$0xe]
      %v703 = vld [vmem:[%s284 + $0x6c] sm:$0xe]
      %v704 = vld [vmem:[%s284 + $0x78] sm:$0xe]
      %v705 = vld [vmem:[%s284 + $0x84] sm:$0xe]
      %v706 = vld [vmem:[%s284 + $0x90] sm:$0xe]
      %v707 = vld [vmem:[%s284 + $0x9c] sm:$0xe]
      %v708 = vld [vmem:[%s284 + $0xa8] sm:$0xe]
      %v709 = vld [vmem:[%s284 + $0xb4] sm:$0xe]
      %v710 = vunpack.c.l.bf16 %v694
      %v711 = vunpack.c.l.bf16 %v695
      %v712 = vunpack.c.l.bf16 %v696
      %v713 = vunpack.c.l.bf16 %v697
      %v714 = vunpack.c.l.bf16 %v698
      %v715 = vunpack.c.l.bf16 %v699
      %v716 = vunpack.c.l.bf16 %v700
      %v717 = vunpack.c.l.bf16 %v701
      %v718 = vunpack.c.l.bf16 %v702
      %v719 = vunpack.c.l.bf16 %v703
      %v720 = vunpack.c.l.bf16 %v704
      %v721 = vunpack.c.l.bf16 %v705
      %v722 = vunpack.c.l.bf16 %v706
      %v723 = vunpack.c.l.bf16 %v707
      %v724 = vunpack.c.l.bf16 %v708
      %v725 = vunpack.c.l.bf16 %v709
      %v726 = vlaneseq
      %v727 = vshrl.u32 %v726, 7
      %v728 = vsub.s32 2, %v727
      %v729 = vrot.slane %v279, %v728
      %v730 = vmul.f32 %v710, %v729
      %v731 = vmul.f32 %v318, %v729
      %v732 = vmul.f32 %v433, %v729
      %v733 = vmul.f32 %v711, %v729
      %v734 = vmul.f32 %v320, %v729
      %v735 = vmul.f32 %v434, %v729
      %v736 = vmul.f32 %v712, %v729
      %v737 = vmul.f32 %v322, %v729
      %v738 = vmul.f32 %v435, %v729
      %v739 = vmul.f32 %v713, %v729
      %v740 = vmul.f32 %v324, %v729
      %v741 = vmul.f32 %v436, %v729
      %v742 = vmul.f32 %v714, %v729
      %v743 = vmul.f32 %v326, %v729
      %v744 = vmul.f32 %v437, %v729
      %v745 = vmul.f32 %v715, %v729
      %v746 = vmul.f32 %v328, %v729
      %v747 = vmul.f32 %v438, %v729
      %v748 = vmul.f32 %v716, %v729
      %v749 = vmul.f32 %v330, %v729
      %v750 = vmul.f32 %v439, %v729
      %v751 = vmul.f32 %v717, %v729
      %v752 = vmul.f32 %v332, %v729
      %v753 = vmul.f32 %v440, %v729
      %v754 = vmul.f32 %v718, %v729
      %v755 = vmul.f32 %v334, %v729
      %v756 = vmul.f32 %v441, %v729
      %v757 = vmul.f32 %v719, %v729
      %v758 = vmul.f32 %v336, %v729
      %v759 = vmul.f32 %v442, %v729
      %v760 = vmul.f32 %v720, %v729
      %v761 = vmul.f32 %v338, %v729
      %v762 = vmul.f32 %v443, %v729
      %v763 = vmul.f32 %v721, %v729
      %v764 = vmul.f32 %v340, %v729
      %v765 = vmul.f32 %v444, %v729
      %v766 = vmul.f32 %v722, %v729
      %v767 = vmul.f32 %v342, %v729
      %v768 = vmul.f32 %v445, %v729
      %v769 = vmul.f32 %v723, %v729
      %v770 = vmul.f32 %v344, %v729
      %v771 = vmul.f32 %v446, %v729
      %v772 = vmul.f32 %v724, %v729
      %v773 = vmul.f32 %v346, %v729
      %v774 = vmul.f32 %v447, %v729
      %v775 = vmul.f32 %v725, %v729
      %v776 = vmul.f32 %v348, %v729
      %v777 = vmul.f32 %v448, %v729
      %vm826 = vcmask 1045504
      %v827 = vrot.slane %v730, 2
      %v828 = vrot.slane %v731, 2
      %v829 = vsel %vm826, %v827, %v828
      %v830 = vrot.slane %v732, 2
      %v831 = vsel %vm826, %v828, %v830
      %v832 = vrot.slane %v733, 2
      %v833 = vrot.slane %v734, 2
      %v834 = vsel %vm826, %v832, %v833
      %v835 = vrot.slane %v735, 2
      %v836 = vsel %vm826, %v833, %v835
      %v837 = vrot.slane %v736, 2
      %v838 = vrot.slane %v737, 2
      %v839 = vsel %vm826, %v837, %v838
      %v840 = vrot.slane %v738, 2
      %v841 = vsel %vm826, %v838, %v840
      %v842 = vrot.slane %v739, 2
      %v843 = vrot.slane %v740, 2
      %v844 = vsel %vm826, %v842, %v843
      %v845 = vrot.slane %v741, 2
      %v846 = vsel %vm826, %v843, %v845
      %v847 = vrot.slane %v742, 2
      %v848 = vrot.slane %v743, 2
      %v849 = vsel %vm826, %v847, %v848
      %v850 = vrot.slane %v744, 2
      %v851 = vsel %vm826, %v848, %v850
      %v852 = vrot.slane %v745, 2
      %v853 = vrot.slane %v746, 2
      %v854 = vsel %vm826, %v852, %v853
      %v855 = vrot.slane %v747, 2
      %v856 = vsel %vm826, %v853, %v855
      %v857 = vrot.slane %v748, 2
      %v858 = vrot.slane %v749, 2
      %v859 = vsel %vm826, %v857, %v858
      %v860 = vrot.slane %v750, 2
      %v861 = vsel %vm826, %v858, %v860
      %v862 = vrot.slane %v751, 2
      %v863 = vrot.slane %v752, 2
      %v864 = vsel %vm826, %v862, %v863
      %v865 = vrot.slane %v753, 2
      %v866 = vsel %vm826, %v863, %v865
      %v867 = vrot.slane %v754, 2
      %v868 = vrot.slane %v755, 2
      %v869 = vsel %vm826, %v867, %v868
      %v870 = vrot.slane %v756, 2
      %v871 = vsel %vm826, %v868, %v870
      %v872 = vrot.slane %v757, 2
      %v873 = vrot.slane %v758, 2
      %v874 = vsel %vm826, %v872, %v873
      %v875 = vrot.slane %v759, 2
      %v876 = vsel %vm826, %v873, %v875
      %v877 = vrot.slane %v760, 2
      %v878 = vrot.slane %v761, 2
      %v879 = vsel %vm826, %v877, %v878
      %v880 = vrot.slane %v762, 2
      %v881 = vsel %vm826, %v878, %v880
      %v882 = vrot.slane %v763, 2
      %v883 = vrot.slane %v764, 2
      %v884 = vsel %vm826, %v882, %v883
      %v885 = vrot.slane %v765, 2
      %v886 = vsel %vm826, %v883, %v885
      %v887 = vrot.slane %v766, 2
      %v888 = vrot.slane %v767, 2
      %v889 = vsel %vm826, %v887, %v888
      %v890 = vrot.slane %v768, 2
      %v891 = vsel %vm826, %v888, %v890
      %v892 = vrot.slane %v769, 2
      %v893 = vrot.slane %v770, 2
      %v894 = vsel %vm826, %v892, %v893
      %v895 = vrot.slane %v771, 2
      %v896 = vsel %vm826, %v893, %v895
      %v897 = vrot.slane %v772, 2
      %v898 = vrot.slane %v773, 2
      %v899 = vsel %vm826, %v897, %v898
      %v900 = vrot.slane %v774, 2
      %v901 = vsel %vm826, %v898, %v900
      %v902 = vrot.slane %v775, 2
      %v903 = vrot.slane %v776, 2
      %v904 = vsel %vm826, %v902, %v903
      %v905 = vrot.slane %v777, 2
      %v906 = vsel %vm826, %v903, %v905
      %v939 = vadd.f32 %v662, %v829
      %v940 = vadd.f32 %v663, %v831
      %v941 = vadd.f32 %v664, %v834
      %v942 = vadd.f32 %v665, %v836
      %v943 = vadd.f32 %v666, %v839
      %v944 = vadd.f32 %v667, %v841
      %v945 = vadd.f32 %v668, %v844
      %v946 = vadd.f32 %v669, %v846
      %v947 = vadd.f32 %v670, %v849
      %v948 = vadd.f32 %v671, %v851
      %v949 = vadd.f32 %v672, %v854
      %v950 = vadd.f32 %v673, %v856
      %v951 = vadd.f32 %v674, %v859
      %v952 = vadd.f32 %v675, %v861
      %v953 = vadd.f32 %v676, %v864
      %v954 = vadd.f32 %v677, %v866
      %v955 = vadd.f32 %v678, %v869
      %v956 = vadd.f32 %v679, %v871
      %v957 = vadd.f32 %v680, %v874
      %v958 = vadd.f32 %v681, %v876
      %v959 = vadd.f32 %v682, %v879
      %v960 = vadd.f32 %v683, %v881
      %v961 = vadd.f32 %v684, %v884
      %v962 = vadd.f32 %v685, %v886
      %v963 = vadd.f32 %v686, %v889
      %v964 = vadd.f32 %v687, %v891
      %v965 = vadd.f32 %v688, %v894
      %v966 = vadd.f32 %v689, %v896
      %v967 = vadd.f32 %v690, %v899
      %v968 = vadd.f32 %v691, %v901
      %v969 = vadd.f32 %v692, %v904
      %v970 = vadd.f32 %v693, %v906
      %s971 = sadd.s32 %s278, 1
      %s972 = smul.u32 %s971, 3
      %s973 = smul.addr %s972, 4
      %s974 = scalar_lea.vmem %s265, %s973
      %v975 = vld [vmem:[%s974] sm:$0xf]
      %v976 = vld [vmem:[%s974 + $0x4] sm:$0xf]
      %v977 = vld [vmem:[%s974 + $0xc] sm:$0xf]
      %v978 = vld [vmem:[%s974 + $0x10] sm:$0xf]
      %v979 = vld [vmem:[%s974 + $0x18] sm:$0xf]
      %v980 = vld [vmem:[%s974 + $0x1c] sm:$0xf]
      %v981 = vld [vmem:[%s974 + $0x24] sm:$0xf]
      %v982 = vld [vmem:[%s974 + $0x28] sm:$0xf]
      %v983 = vld [vmem:[%s974 + $0x30] sm:$0xf]
      %v984 = vld [vmem:[%s974 + $0x34] sm:$0xf]
      %v985 = vld [vmem:[%s974 + $0x3c] sm:$0xf]
      %v986 = vld [vmem:[%s974 + $0x40] sm:$0xf]
      %v987 = vld [vmem:[%s974 + $0x48] sm:$0xf]
      %v988 = vld [vmem:[%s974 + $0x4c] sm:$0xf]
      %v989 = vld [vmem:[%s974 + $0x54] sm:$0xf]
      %v990 = vld [vmem:[%s974 + $0x58] sm:$0xf]
      %v991 = vld [vmem:[%s974 + $0x60] sm:$0xf]
      %v992 = vld [vmem:[%s974 + $0x64] sm:$0xf]
      %v993 = vld [vmem:[%s974 + $0x6c] sm:$0xf]
      %v994 = vld [vmem:[%s974 + $0x70] sm:$0xf]
      %v995 = vld [vmem:[%s974 + $0x78] sm:$0xf]
      %v996 = vld [vmem:[%s974 + $0x7c] sm:$0xf]
      %v997 = vld [vmem:[%s974 + $0x84] sm:$0xf]
      %v998 = vld [vmem:[%s974 + $0x88] sm:$0xf]
      %v999 = vld [vmem:[%s974 + $0x90] sm:$0xf]
      %v1000 = vld [vmem:[%s974 + $0x94] sm:$0xf]
      %v1001 = vld [vmem:[%s974 + $0x9c] sm:$0xf]
      %v1002 = vld [vmem:[%s974 + $0xa0] sm:$0xf]
      %v1003 = vld [vmem:[%s974 + $0xa8] sm:$0xf]
      %v1004 = vld [vmem:[%s974 + $0xac] sm:$0xf]
      %v1005 = vld [vmem:[%s974 + $0xb4] sm:$0xf]
      %v1006 = vld [vmem:[%s974 + $0xb8] sm:$0xf]
      %v1007 = vunpack.c.l.bf16 %v975
      %v1008 = vunpack.c.l.bf16 %v976
      %v1009 = vunpack.c.l.bf16 %v977
      %v1010 = vunpack.c.l.bf16 %v978
      %v1011 = vunpack.c.l.bf16 %v979
      %v1012 = vunpack.c.l.bf16 %v980
      %v1013 = vunpack.c.l.bf16 %v981
      %v1014 = vunpack.c.l.bf16 %v982
      %v1015 = vunpack.c.l.bf16 %v983
      %v1016 = vunpack.c.l.bf16 %v984
      %v1017 = vunpack.c.l.bf16 %v985
      %v1018 = vunpack.c.l.bf16 %v986
      %v1019 = vunpack.c.l.bf16 %v987
      %v1020 = vunpack.c.l.bf16 %v988
      %v1021 = vunpack.c.l.bf16 %v989
      %v1022 = vunpack.c.l.bf16 %v990
      %v1023 = vunpack.c.l.bf16 %v991
      %v1024 = vunpack.c.l.bf16 %v992
      %v1025 = vunpack.c.l.bf16 %v993
      %v1026 = vunpack.c.l.bf16 %v994
      %v1027 = vunpack.c.l.bf16 %v995
      %v1028 = vunpack.c.l.bf16 %v996
      %v1029 = vunpack.c.l.bf16 %v997
      %v1030 = vunpack.c.l.bf16 %v998
      %v1031 = vunpack.c.l.bf16 %v999
      %v1032 = vunpack.c.l.bf16 %v1000
      %v1033 = vunpack.c.l.bf16 %v1001
      %v1034 = vunpack.c.l.bf16 %v1002
      %v1035 = vunpack.c.l.bf16 %v1003
      %v1036 = vunpack.c.l.bf16 %v1004
      %v1037 = vunpack.c.l.bf16 %v1005
      %v1038 = vunpack.c.l.bf16 %v1006
      %v1039 = vlaneseq
      %v1040 = vshrl.u32 %v1039, 7
      %v1041 = vsub.s32 0, %v1040
      %v1042 = vrot.slane %v280, %v1041
      %v1043 = vmul.f32 %v1007, %v1042
      %v1044 = vmul.f32 %v1008, %v1042
      %v1045 = vmul.f32 %v1009, %v1042
      %v1046 = vmul.f32 %v1010, %v1042
      %v1047 = vmul.f32 %v1011, %v1042
      %v1048 = vmul.f32 %v1012, %v1042
      %v1049 = vmul.f32 %v1013, %v1042
      %v1050 = vmul.f32 %v1014, %v1042
      %v1051 = vmul.f32 %v1015, %v1042
      %v1052 = vmul.f32 %v1016, %v1042
      %v1053 = vmul.f32 %v1017, %v1042
      %v1054 = vmul.f32 %v1018, %v1042
      %v1055 = vmul.f32 %v1019, %v1042
      %v1056 = vmul.f32 %v1020, %v1042
      %v1057 = vmul.f32 %v1021, %v1042
      %v1058 = vmul.f32 %v1022, %v1042
      %v1059 = vmul.f32 %v1023, %v1042
      %v1060 = vmul.f32 %v1024, %v1042
      %v1061 = vmul.f32 %v1025, %v1042
      %v1062 = vmul.f32 %v1026, %v1042
      %v1063 = vmul.f32 %v1027, %v1042
      %v1064 = vmul.f32 %v1028, %v1042
      %v1065 = vmul.f32 %v1029, %v1042
      %v1066 = vmul.f32 %v1030, %v1042
      %v1067 = vmul.f32 %v1031, %v1042
      %v1068 = vmul.f32 %v1032, %v1042
      %v1069 = vmul.f32 %v1033, %v1042
      %v1070 = vmul.f32 %v1034, %v1042
      %v1071 = vmul.f32 %v1035, %v1042
      %v1072 = vmul.f32 %v1036, %v1042
      %v1073 = vmul.f32 %v1037, %v1042
      %v1074 = vmul.f32 %v1038, %v1042
      %v1075 = vadd.f32 %v939, %v1043
      %v1076 = vadd.f32 %v940, %v1044
      %v1077 = vadd.f32 %v941, %v1045
      %v1078 = vadd.f32 %v942, %v1046
      %v1079 = vadd.f32 %v943, %v1047
      %v1080 = vadd.f32 %v944, %v1048
      %v1081 = vadd.f32 %v945, %v1049
      %v1082 = vadd.f32 %v946, %v1050
      %v1083 = vadd.f32 %v947, %v1051
      %v1084 = vadd.f32 %v948, %v1052
      %v1085 = vadd.f32 %v949, %v1053
      %v1086 = vadd.f32 %v950, %v1054
      %v1087 = vadd.f32 %v951, %v1055
      %v1088 = vadd.f32 %v952, %v1056
      %v1089 = vadd.f32 %v953, %v1057
      %v1090 = vadd.f32 %v954, %v1058
      %v1091 = vadd.f32 %v955, %v1059
      %v1092 = vadd.f32 %v956, %v1060
      %v1093 = vadd.f32 %v957, %v1061
      %v1094 = vadd.f32 %v958, %v1062
      %v1095 = vadd.f32 %v959, %v1063
      %v1096 = vadd.f32 %v960, %v1064
      %v1097 = vadd.f32 %v961, %v1065
      %v1098 = vadd.f32 %v962, %v1066
      %v1099 = vadd.f32 %v963, %v1067
      %v1100 = vadd.f32 %v964, %v1068
      %v1101 = vadd.f32 %v965, %v1069
      %v1102 = vadd.f32 %v966, %v1070
      %v1103 = vadd.f32 %v967, %v1071
      %v1104 = vadd.f32 %v968, %v1072
      %v1105 = vadd.f32 %v969, %v1073
      %v1106 = vadd.f32 %v970, %v1074
      %v1107 = vld [vmem:[%s974 + $0x8] sm:$0x1]
      %v1108 = vld [vmem:[%s974 + $0x14] sm:$0x1]
      %v1109 = vld [vmem:[%s974 + $0x20] sm:$0x1]
      %v1110 = vld [vmem:[%s974 + $0x2c] sm:$0x1]
      %v1111 = vld [vmem:[%s974 + $0x38] sm:$0x1]
      %v1112 = vld [vmem:[%s974 + $0x44] sm:$0x1]
      %v1113 = vld [vmem:[%s974 + $0x50] sm:$0x1]
      %v1114 = vld [vmem:[%s974 + $0x5c] sm:$0x1]
      %v1115 = vld [vmem:[%s974 + $0x68] sm:$0x1]
      %v1116 = vld [vmem:[%s974 + $0x74] sm:$0x1]
      %v1117 = vld [vmem:[%s974 + $0x80] sm:$0x1]
      %v1118 = vld [vmem:[%s974 + $0x8c] sm:$0x1]
      %v1119 = vld [vmem:[%s974 + $0x98] sm:$0x1]
      %v1120 = vld [vmem:[%s974 + $0xa4] sm:$0x1]
      %v1121 = vld [vmem:[%s974 + $0xb0] sm:$0x1]
      %v1122 = vld [vmem:[%s974 + $0xbc] sm:$0x1]
      %v1123 = vunpack.c.l.bf16 %v1107
      %v1124 = vunpack.c.l.bf16 %v1108
      %v1125 = vunpack.c.l.bf16 %v1109
      %v1126 = vunpack.c.l.bf16 %v1110
      %v1127 = vunpack.c.l.bf16 %v1111
      %v1128 = vunpack.c.l.bf16 %v1112
      %v1129 = vunpack.c.l.bf16 %v1113
      %v1130 = vunpack.c.l.bf16 %v1114
      %v1131 = vunpack.c.l.bf16 %v1115
      %v1132 = vunpack.c.l.bf16 %v1116
      %v1133 = vunpack.c.l.bf16 %v1117
      %v1134 = vunpack.c.l.bf16 %v1118
      %v1135 = vunpack.c.l.bf16 %v1119
      %v1136 = vunpack.c.l.bf16 %v1120
      %v1137 = vunpack.c.l.bf16 %v1121
      %v1138 = vunpack.c.l.bf16 %v1122
      %v1139 = vlaneseq
      %v1140 = vshrl.u32 %v1139, 7
      %v1141 = vsub.s32 1, %v1140
      %v1142 = vrot.slane %v280, %v1141
      %v1143 = vmul.f32 %v1007, %v1142
      %v1144 = vmul.f32 %v1008, %v1142
      %v1145 = vmul.f32 %v1123, %v1142
      %v1146 = vmul.f32 %v1009, %v1142
      %v1147 = vmul.f32 %v1010, %v1142
      %v1148 = vmul.f32 %v1124, %v1142
      %v1149 = vmul.f32 %v1011, %v1142
      %v1150 = vmul.f32 %v1012, %v1142
      %v1151 = vmul.f32 %v1125, %v1142
      %v1152 = vmul.f32 %v1013, %v1142
      %v1153 = vmul.f32 %v1014, %v1142
      %v1154 = vmul.f32 %v1126, %v1142
      %v1155 = vmul.f32 %v1015, %v1142
      %v1156 = vmul.f32 %v1016, %v1142
      %v1157 = vmul.f32 %v1127, %v1142
      %v1158 = vmul.f32 %v1017, %v1142
      %v1159 = vmul.f32 %v1018, %v1142
      %v1160 = vmul.f32 %v1128, %v1142
      %v1161 = vmul.f32 %v1019, %v1142
      %v1162 = vmul.f32 %v1020, %v1142
      %v1163 = vmul.f32 %v1129, %v1142
      %v1164 = vmul.f32 %v1021, %v1142
      %v1165 = vmul.f32 %v1022, %v1142
      %v1166 = vmul.f32 %v1130, %v1142
      %v1167 = vmul.f32 %v1023, %v1142
      %v1168 = vmul.f32 %v1024, %v1142
      %v1169 = vmul.f32 %v1131, %v1142
      %v1170 = vmul.f32 %v1025, %v1142
      %v1171 = vmul.f32 %v1026, %v1142
      %v1172 = vmul.f32 %v1132, %v1142
      %v1173 = vmul.f32 %v1027, %v1142
      %v1174 = vmul.f32 %v1028, %v1142
      %v1175 = vmul.f32 %v1133, %v1142
      %v1176 = vmul.f32 %v1029, %v1142
      %v1177 = vmul.f32 %v1030, %v1142
      %v1178 = vmul.f32 %v1134, %v1142
      %v1179 = vmul.f32 %v1031, %v1142
      %v1180 = vmul.f32 %v1032, %v1142
      %v1181 = vmul.f32 %v1135, %v1142
      %v1182 = vmul.f32 %v1033, %v1142
      %v1183 = vmul.f32 %v1034, %v1142
      %v1184 = vmul.f32 %v1136, %v1142
      %v1185 = vmul.f32 %v1035, %v1142
      %v1186 = vmul.f32 %v1036, %v1142
      %v1187 = vmul.f32 %v1137, %v1142
      %v1188 = vmul.f32 %v1037, %v1142
      %v1189 = vmul.f32 %v1038, %v1142
      %v1190 = vmul.f32 %v1138, %v1142
      %v1239 = vrot.slane %v1143, 1
      %v1240 = vrot.slane %v1144, 1
      %v1241 = vsel %vm549, %v1239, %v1240
      %v1242 = vrot.slane %v1145, 1
      %v1243 = vsel %vm549, %v1240, %v1242
      %v1244 = vrot.slane %v1146, 1
      %v1245 = vrot.slane %v1147, 1
      %v1246 = vsel %vm549, %v1244, %v1245
      %v1247 = vrot.slane %v1148, 1
      %v1248 = vsel %vm549, %v1245, %v1247
      %v1249 = vrot.slane %v1149, 1
      %v1250 = vrot.slane %v1150, 1
      %v1251 = vsel %vm549, %v1249, %v1250
      %v1252 = vrot.slane %v1151, 1
      %v1253 = vsel %vm549, %v1250, %v1252
      %v1254 = vrot.slane %v1152, 1
      %v1255 = vrot.slane %v1153, 1
      %v1256 = vsel %vm549, %v1254, %v1255
      %v1257 = vrot.slane %v1154, 1
      %v1258 = vsel %vm549, %v1255, %v1257
      %v1259 = vrot.slane %v1155, 1
      %v1260 = vrot.slane %v1156, 1
      %v1261 = vsel %vm549, %v1259, %v1260
      %v1262 = vrot.slane %v1157, 1
      %v1263 = vsel %vm549, %v1260, %v1262
      %v1264 = vrot.slane %v1158, 1
      %v1265 = vrot.slane %v1159, 1
      %v1266 = vsel %vm549, %v1264, %v1265
      %v1267 = vrot.slane %v1160, 1
      %v1268 = vsel %vm549, %v1265, %v1267
      %v1269 = vrot.slane %v1161, 1
      %v1270 = vrot.slane %v1162, 1
      %v1271 = vsel %vm549, %v1269, %v1270
      %v1272 = vrot.slane %v1163, 1
      %v1273 = vsel %vm549, %v1270, %v1272
      %v1274 = vrot.slane %v1164, 1
      %v1275 = vrot.slane %v1165, 1
      %v1276 = vsel %vm549, %v1274, %v1275
      %v1277 = vrot.slane %v1166, 1
      %v1278 = vsel %vm549, %v1275, %v1277
      %v1279 = vrot.slane %v1167, 1
      %v1280 = vrot.slane %v1168, 1
      %v1281 = vsel %vm549, %v1279, %v1280
      %v1282 = vrot.slane %v1169, 1
      %v1283 = vsel %vm549, %v1280, %v1282
      %v1284 = vrot.slane %v1170, 1
      %v1285 = vrot.slane %v1171, 1
      %v1286 = vsel %vm549, %v1284, %v1285
      %v1287 = vrot.slane %v1172, 1
      %v1288 = vsel %vm549, %v1285, %v1287
      %v1289 = vrot.slane %v1173, 1
      %v1290 = vrot.slane %v1174, 1
      %v1291 = vsel %vm549, %v1289, %v1290
      %v1292 = vrot.slane %v1175, 1
      %v1293 = vsel %vm549, %v1290, %v1292
      %v1294 = vrot.slane %v1176, 1
      %v1295 = vrot.slane %v1177, 1
      %v1296 = vsel %vm549, %v1294, %v1295
      %v1297 = vrot.slane %v1178, 1
      %v1298 = vsel %vm549, %v1295, %v1297
      %v1299 = vrot.slane %v1179, 1
      %v1300 = vrot.slane %v1180, 1
      %v1301 = vsel %vm549, %v1299, %v1300
      %v1302 = vrot.slane %v1181, 1
      %v1303 = vsel %vm549, %v1300, %v1302
      %v1304 = vrot.slane %v1182, 1
      %v1305 = vrot.slane %v1183, 1
      %v1306 = vsel %vm549, %v1304, %v1305
      %v1307 = vrot.slane %v1184, 1
      %v1308 = vsel %vm549, %v1305, %v1307
      %v1309 = vrot.slane %v1185, 1
      %v1310 = vrot.slane %v1186, 1
      %v1311 = vsel %vm549, %v1309, %v1310
      %v1312 = vrot.slane %v1187, 1
      %v1313 = vsel %vm549, %v1310, %v1312
      %v1314 = vrot.slane %v1188, 1
      %v1315 = vrot.slane %v1189, 1
      %v1316 = vsel %vm549, %v1314, %v1315
      %v1317 = vrot.slane %v1190, 1
      %v1318 = vsel %vm549, %v1315, %v1317
      %v1351 = vadd.f32 %v1075, %v1241
      %v1352 = vadd.f32 %v1076, %v1243
      %v1353 = vadd.f32 %v1077, %v1246
      %v1354 = vadd.f32 %v1078, %v1248
      %v1355 = vadd.f32 %v1079, %v1251
      %v1356 = vadd.f32 %v1080, %v1253
      %v1357 = vadd.f32 %v1081, %v1256
      %v1358 = vadd.f32 %v1082, %v1258
      %v1359 = vadd.f32 %v1083, %v1261
      %v1360 = vadd.f32 %v1084, %v1263
      %v1361 = vadd.f32 %v1085, %v1266
      %v1362 = vadd.f32 %v1086, %v1268
      %v1363 = vadd.f32 %v1087, %v1271
      %v1364 = vadd.f32 %v1088, %v1273
      %v1365 = vadd.f32 %v1089, %v1276
      %v1366 = vadd.f32 %v1090, %v1278
      %v1367 = vadd.f32 %v1091, %v1281
      %v1368 = vadd.f32 %v1092, %v1283
      %v1369 = vadd.f32 %v1093, %v1286
      %v1370 = vadd.f32 %v1094, %v1288
      %v1371 = vadd.f32 %v1095, %v1291
      %v1372 = vadd.f32 %v1096, %v1293
      %v1373 = vadd.f32 %v1097, %v1296
      %v1374 = vadd.f32 %v1098, %v1298
      %v1375 = vadd.f32 %v1099, %v1301
      %v1376 = vadd.f32 %v1100, %v1303
      %v1377 = vadd.f32 %v1101, %v1306
      %v1378 = vadd.f32 %v1102, %v1308
      %v1379 = vadd.f32 %v1103, %v1311
      %v1380 = vadd.f32 %v1104, %v1313
      %v1381 = vadd.f32 %v1105, %v1316
      %v1382 = vadd.f32 %v1106, %v1318
      %v1383 = vld [vmem:[%s974] sm:$0xe]
      %v1384 = vld [vmem:[%s974 + $0xc] sm:$0xe]
      %v1385 = vld [vmem:[%s974 + $0x18] sm:$0xe]
      %v1386 = vld [vmem:[%s974 + $0x24] sm:$0xe]
      %v1387 = vld [vmem:[%s974 + $0x30] sm:$0xe]
      %v1388 = vld [vmem:[%s974 + $0x3c] sm:$0xe]
      %v1389 = vld [vmem:[%s974 + $0x48] sm:$0xe]
      %v1390 = vld [vmem:[%s974 + $0x54] sm:$0xe]
      %v1391 = vld [vmem:[%s974 + $0x60] sm:$0xe]
      %v1392 = vld [vmem:[%s974 + $0x6c] sm:$0xe]
      %v1393 = vld [vmem:[%s974 + $0x78] sm:$0xe]
      %v1394 = vld [vmem:[%s974 + $0x84] sm:$0xe]
      %v1395 = vld [vmem:[%s974 + $0x90] sm:$0xe]
      %v1396 = vld [vmem:[%s974 + $0x9c] sm:$0xe]
      %v1397 = vld [vmem:[%s974 + $0xa8] sm:$0xe]
      %v1398 = vld [vmem:[%s974 + $0xb4] sm:$0xe]
      %v1399 = vunpack.c.l.bf16 %v1383
      %v1400 = vunpack.c.l.bf16 %v1384
      %v1401 = vunpack.c.l.bf16 %v1385
      %v1402 = vunpack.c.l.bf16 %v1386
      %v1403 = vunpack.c.l.bf16 %v1387
      %v1404 = vunpack.c.l.bf16 %v1388
      %v1405 = vunpack.c.l.bf16 %v1389
      %v1406 = vunpack.c.l.bf16 %v1390
      %v1407 = vunpack.c.l.bf16 %v1391
      %v1408 = vunpack.c.l.bf16 %v1392
      %v1409 = vunpack.c.l.bf16 %v1393
      %v1410 = vunpack.c.l.bf16 %v1394
      %v1411 = vunpack.c.l.bf16 %v1395
      %v1412 = vunpack.c.l.bf16 %v1396
      %v1413 = vunpack.c.l.bf16 %v1397
      %v1414 = vunpack.c.l.bf16 %v1398
      %v1415 = vlaneseq
      %v1416 = vshrl.u32 %v1415, 7
      %v1417 = vsub.s32 2, %v1416
      %v1418 = vrot.slane %v280, %v1417
      %v1419 = vmul.f32 %v1399, %v1418
      %v1420 = vmul.f32 %v1008, %v1418
      %v1421 = vmul.f32 %v1123, %v1418
      %v1422 = vmul.f32 %v1400, %v1418
      %v1423 = vmul.f32 %v1010, %v1418
      %v1424 = vmul.f32 %v1124, %v1418
      %v1425 = vmul.f32 %v1401, %v1418
      %v1426 = vmul.f32 %v1012, %v1418
      %v1427 = vmul.f32 %v1125, %v1418
      %v1428 = vmul.f32 %v1402, %v1418
      %v1429 = vmul.f32 %v1014, %v1418
      %v1430 = vmul.f32 %v1126, %v1418
      %v1431 = vmul.f32 %v1403, %v1418
      %v1432 = vmul.f32 %v1016, %v1418
      %v1433 = vmul.f32 %v1127, %v1418
      %v1434 = vmul.f32 %v1404, %v1418
      %v1435 = vmul.f32 %v1018, %v1418
      %v1436 = vmul.f32 %v1128, %v1418
      %v1437 = vmul.f32 %v1405, %v1418
      %v1438 = vmul.f32 %v1020, %v1418
      %v1439 = vmul.f32 %v1129, %v1418
      %v1440 = vmul.f32 %v1406, %v1418
      %v1441 = vmul.f32 %v1022, %v1418
      %v1442 = vmul.f32 %v1130, %v1418
      %v1443 = vmul.f32 %v1407, %v1418
      %v1444 = vmul.f32 %v1024, %v1418
      %v1445 = vmul.f32 %v1131, %v1418
      %v1446 = vmul.f32 %v1408, %v1418
      %v1447 = vmul.f32 %v1026, %v1418
      %v1448 = vmul.f32 %v1132, %v1418
      %v1449 = vmul.f32 %v1409, %v1418
      %v1450 = vmul.f32 %v1028, %v1418
      %v1451 = vmul.f32 %v1133, %v1418
      %v1452 = vmul.f32 %v1410, %v1418
      %v1453 = vmul.f32 %v1030, %v1418
      %v1454 = vmul.f32 %v1134, %v1418
      %v1455 = vmul.f32 %v1411, %v1418
      %v1456 = vmul.f32 %v1032, %v1418
      %v1457 = vmul.f32 %v1135, %v1418
      %v1458 = vmul.f32 %v1412, %v1418
      %v1459 = vmul.f32 %v1034, %v1418
      %v1460 = vmul.f32 %v1136, %v1418
      %v1461 = vmul.f32 %v1413, %v1418
      %v1462 = vmul.f32 %v1036, %v1418
      %v1463 = vmul.f32 %v1137, %v1418
      %v1464 = vmul.f32 %v1414, %v1418
      %v1465 = vmul.f32 %v1038, %v1418
      %v1466 = vmul.f32 %v1138, %v1418
      %v1515 = vrot.slane %v1419, 2
      %v1516 = vrot.slane %v1420, 2
      %v1517 = vsel %vm826, %v1515, %v1516
      %v1518 = vrot.slane %v1421, 2
      %v1519 = vsel %vm826, %v1516, %v1518
      %v1520 = vrot.slane %v1422, 2
      %v1521 = vrot.slane %v1423, 2
      %v1522 = vsel %vm826, %v1520, %v1521
      %v1523 = vrot.slane %v1424, 2
      %v1524 = vsel %vm826, %v1521, %v1523
      %v1525 = vrot.slane %v1425, 2
      %v1526 = vrot.slane %v1426, 2
      %v1527 = vsel %vm826, %v1525, %v1526
      %v1528 = vrot.slane %v1427, 2
      %v1529 = vsel %vm826, %v1526, %v1528
      %v1530 = vrot.slane %v1428, 2
      %v1531 = vrot.slane %v1429, 2
      %v1532 = vsel %vm826, %v1530, %v1531
      %v1533 = vrot.slane %v1430, 2
      %v1534 = vsel %vm826, %v1531, %v1533
      %v1535 = vrot.slane %v1431, 2
      %v1536 = vrot.slane %v1432, 2
      %v1537 = vsel %vm826, %v1535, %v1536
      %v1538 = vrot.slane %v1433, 2
      %v1539 = vsel %vm826, %v1536, %v1538
      %v1540 = vrot.slane %v1434, 2
      %v1541 = vrot.slane %v1435, 2
      %v1542 = vsel %vm826, %v1540, %v1541
      %v1543 = vrot.slane %v1436, 2
      %v1544 = vsel %vm826, %v1541, %v1543
      %v1545 = vrot.slane %v1437, 2
      %v1546 = vrot.slane %v1438, 2
      %v1547 = vsel %vm826, %v1545, %v1546
      %v1548 = vrot.slane %v1439, 2
      %v1549 = vsel %vm826, %v1546, %v1548
      %v1550 = vrot.slane %v1440, 2
      %v1551 = vrot.slane %v1441, 2
      %v1552 = vsel %vm826, %v1550, %v1551
      %v1553 = vrot.slane %v1442, 2
      %v1554 = vsel %vm826, %v1551, %v1553
      %v1555 = vrot.slane %v1443, 2
      %v1556 = vrot.slane %v1444, 2
      %v1557 = vsel %vm826, %v1555, %v1556
      %v1558 = vrot.slane %v1445, 2
      %v1559 = vsel %vm826, %v1556, %v1558
      %v1560 = vrot.slane %v1446, 2
      %v1561 = vrot.slane %v1447, 2
      %v1562 = vsel %vm826, %v1560, %v1561
      %v1563 = vrot.slane %v1448, 2
      %v1564 = vsel %vm826, %v1561, %v1563
      %v1565 = vrot.slane %v1449, 2
      %v1566 = vrot.slane %v1450, 2
      %v1567 = vsel %vm826, %v1565, %v1566
      %v1568 = vrot.slane %v1451, 2
      %v1569 = vsel %vm826, %v1566, %v1568
      %v1570 = vrot.slane %v1452, 2
      %v1571 = vrot.slane %v1453, 2
      %v1572 = vsel %vm826, %v1570, %v1571
      %v1573 = vrot.slane %v1454, 2
      %v1574 = vsel %vm826, %v1571, %v1573
      %v1575 = vrot.slane %v1455, 2
      %v1576 = vrot.slane %v1456, 2
      %v1577 = vsel %vm826, %v1575, %v1576
      %v1578 = vrot.slane %v1457, 2
      %v1579 = vsel %vm826, %v1576, %v1578
      %v1580 = vrot.slane %v1458, 2
      %v1581 = vrot.slane %v1459, 2
      %v1582 = vsel %vm826, %v1580, %v1581
      %v1583 = vrot.slane %v1460, 2
      %v1584 = vsel %vm826, %v1581, %v1583
      %v1585 = vrot.slane %v1461, 2
      %v1586 = vrot.slane %v1462, 2
      %v1587 = vsel %vm826, %v1585, %v1586
      %v1588 = vrot.slane %v1463, 2
      %v1589 = vsel %vm826, %v1586, %v1588
      %v1590 = vrot.slane %v1464, 2
      %v1591 = vrot.slane %v1465, 2
      %v1592 = vsel %vm826, %v1590, %v1591
      %v1593 = vrot.slane %v1466, 2
      %v1594 = vsel %vm826, %v1591, %v1593
      %v1627 = vadd.f32 %v1351, %v1517
      %v1628 = vadd.f32 %v1352, %v1519
      %v1629 = vadd.f32 %v1353, %v1522
      %v1630 = vadd.f32 %v1354, %v1524
      %v1631 = vadd.f32 %v1355, %v1527
      %v1632 = vadd.f32 %v1356, %v1529
      %v1633 = vadd.f32 %v1357, %v1532
      %v1634 = vadd.f32 %v1358, %v1534
      %v1635 = vadd.f32 %v1359, %v1537
      %v1636 = vadd.f32 %v1360, %v1539
      %v1637 = vadd.f32 %v1361, %v1542
      %v1638 = vadd.f32 %v1362, %v1544
      %v1639 = vadd.f32 %v1363, %v1547
      %v1640 = vadd.f32 %v1364, %v1549
      %v1641 = vadd.f32 %v1365, %v1552
      %v1642 = vadd.f32 %v1366, %v1554
      %v1643 = vadd.f32 %v1367, %v1557
      %v1644 = vadd.f32 %v1368, %v1559
      %v1645 = vadd.f32 %v1369, %v1562
      %v1646 = vadd.f32 %v1370, %v1564
      %v1647 = vadd.f32 %v1371, %v1567
      %v1648 = vadd.f32 %v1372, %v1569
      %v1649 = vadd.f32 %v1373, %v1572
      %v1650 = vadd.f32 %v1374, %v1574
      %v1651 = vadd.f32 %v1375, %v1577
      %v1652 = vadd.f32 %v1376, %v1579
      %v1653 = vadd.f32 %v1377, %v1582
      %v1654 = vadd.f32 %v1378, %v1584
      %v1655 = vadd.f32 %v1379, %v1587
      %v1656 = vadd.f32 %v1380, %v1589
      %v1657 = vadd.f32 %v1381, %v1592
      %v1658 = vadd.f32 %v1382, %v1594
      %s1659 = sadd.s32 %s278, 2
      %s1660 = smul.u32 %s1659, 3
      %s1661 = smul.addr %s1660, 4
      %s1662 = scalar_lea.vmem %s265, %s1661
      %v1663 = vld [vmem:[%s1662] sm:$0xf]
      %v1664 = vld [vmem:[%s1662 + $0x4] sm:$0xf]
      %v1665 = vld [vmem:[%s1662 + $0xc] sm:$0xf]
      %v1666 = vld [vmem:[%s1662 + $0x10] sm:$0xf]
      %v1667 = vld [vmem:[%s1662 + $0x18] sm:$0xf]
      %v1668 = vld [vmem:[%s1662 + $0x1c] sm:$0xf]
      %v1669 = vld [vmem:[%s1662 + $0x24] sm:$0xf]
      %v1670 = vld [vmem:[%s1662 + $0x28] sm:$0xf]
      %v1671 = vld [vmem:[%s1662 + $0x30] sm:$0xf]
      %v1672 = vld [vmem:[%s1662 + $0x34] sm:$0xf]
      %v1673 = vld [vmem:[%s1662 + $0x3c] sm:$0xf]
      %v1674 = vld [vmem:[%s1662 + $0x40] sm:$0xf]
      %v1675 = vld [vmem:[%s1662 + $0x48] sm:$0xf]
      %v1676 = vld [vmem:[%s1662 + $0x4c] sm:$0xf]
      %v1677 = vld [vmem:[%s1662 + $0x54] sm:$0xf]
      %v1678 = vld [vmem:[%s1662 + $0x58] sm:$0xf]
      %v1679 = vld [vmem:[%s1662 + $0x60] sm:$0xf]
      %v1680 = vld [vmem:[%s1662 + $0x64] sm:$0xf]
      %v1681 = vld [vmem:[%s1662 + $0x6c] sm:$0xf]
      %v1682 = vld [vmem:[%s1662 + $0x70] sm:$0xf]
      %v1683 = vld [vmem:[%s1662 + $0x78] sm:$0xf]
      %v1684 = vld [vmem:[%s1662 + $0x7c] sm:$0xf]
      %v1685 = vld [vmem:[%s1662 + $0x84] sm:$0xf]
      %v1686 = vld [vmem:[%s1662 + $0x88] sm:$0xf]
      %v1687 = vld [vmem:[%s1662 + $0x90] sm:$0xf]
      %v1688 = vld [vmem:[%s1662 + $0x94] sm:$0xf]
      %v1689 = vld [vmem:[%s1662 + $0x9c] sm:$0xf]
      %v1690 = vld [vmem:[%s1662 + $0xa0] sm:$0xf]
      %v1691 = vld [vmem:[%s1662 + $0xa8] sm:$0xf]
      %v1692 = vld [vmem:[%s1662 + $0xac] sm:$0xf]
      %v1693 = vld [vmem:[%s1662 + $0xb4] sm:$0xf]
      %v1694 = vld [vmem:[%s1662 + $0xb8] sm:$0xf]
      %v1695 = vunpack.c.l.bf16 %v1663
      %v1696 = vunpack.c.l.bf16 %v1664
      %v1697 = vunpack.c.l.bf16 %v1665
      %v1698 = vunpack.c.l.bf16 %v1666
      %v1699 = vunpack.c.l.bf16 %v1667
      %v1700 = vunpack.c.l.bf16 %v1668
      %v1701 = vunpack.c.l.bf16 %v1669
      %v1702 = vunpack.c.l.bf16 %v1670
      %v1703 = vunpack.c.l.bf16 %v1671
      %v1704 = vunpack.c.l.bf16 %v1672
      %v1705 = vunpack.c.l.bf16 %v1673
      %v1706 = vunpack.c.l.bf16 %v1674
      %v1707 = vunpack.c.l.bf16 %v1675
      %v1708 = vunpack.c.l.bf16 %v1676
      %v1709 = vunpack.c.l.bf16 %v1677
      %v1710 = vunpack.c.l.bf16 %v1678
      %v1711 = vunpack.c.l.bf16 %v1679
      %v1712 = vunpack.c.l.bf16 %v1680
      %v1713 = vunpack.c.l.bf16 %v1681
      %v1714 = vunpack.c.l.bf16 %v1682
      %v1715 = vunpack.c.l.bf16 %v1683
      %v1716 = vunpack.c.l.bf16 %v1684
      %v1717 = vunpack.c.l.bf16 %v1685
      %v1718 = vunpack.c.l.bf16 %v1686
      %v1719 = vunpack.c.l.bf16 %v1687
      %v1720 = vunpack.c.l.bf16 %v1688
      %v1721 = vunpack.c.l.bf16 %v1689
      %v1722 = vunpack.c.l.bf16 %v1690
      %v1723 = vunpack.c.l.bf16 %v1691
      %v1724 = vunpack.c.l.bf16 %v1692
      %v1725 = vunpack.c.l.bf16 %v1693
      %v1726 = vunpack.c.l.bf16 %v1694
      %v1727 = vlaneseq
      %v1728 = vshrl.u32 %v1727, 7
      %v1729 = vsub.s32 0, %v1728
      %v1730 = vrot.slane %v281, %v1729
      %v1731 = vmul.f32 %v1695, %v1730
      %v1732 = vmul.f32 %v1696, %v1730
      %v1733 = vmul.f32 %v1697, %v1730
      %v1734 = vmul.f32 %v1698, %v1730
      %v1735 = vmul.f32 %v1699, %v1730
      %v1736 = vmul.f32 %v1700, %v1730
      %v1737 = vmul.f32 %v1701, %v1730
      %v1738 = vmul.f32 %v1702, %v1730
      %v1739 = vmul.f32 %v1703, %v1730
      %v1740 = vmul.f32 %v1704, %v1730
      %v1741 = vmul.f32 %v1705, %v1730
      %v1742 = vmul.f32 %v1706, %v1730
      %v1743 = vmul.f32 %v1707, %v1730
      %v1744 = vmul.f32 %v1708, %v1730
      %v1745 = vmul.f32 %v1709, %v1730
      %v1746 = vmul.f32 %v1710, %v1730
      %v1747 = vmul.f32 %v1711, %v1730
      %v1748 = vmul.f32 %v1712, %v1730
      %v1749 = vmul.f32 %v1713, %v1730
      %v1750 = vmul.f32 %v1714, %v1730
      %v1751 = vmul.f32 %v1715, %v1730
      %v1752 = vmul.f32 %v1716, %v1730
      %v1753 = vmul.f32 %v1717, %v1730
      %v1754 = vmul.f32 %v1718, %v1730
      %v1755 = vmul.f32 %v1719, %v1730
      %v1756 = vmul.f32 %v1720, %v1730
      %v1757 = vmul.f32 %v1721, %v1730
      %v1758 = vmul.f32 %v1722, %v1730
      %v1759 = vmul.f32 %v1723, %v1730
      %v1760 = vmul.f32 %v1724, %v1730
      %v1761 = vmul.f32 %v1725, %v1730
      %v1762 = vmul.f32 %v1726, %v1730
      %v1763 = vadd.f32 %v1627, %v1731
      %v1764 = vadd.f32 %v1628, %v1732
      %v1765 = vadd.f32 %v1629, %v1733
      %v1766 = vadd.f32 %v1630, %v1734
      %v1767 = vadd.f32 %v1631, %v1735
      %v1768 = vadd.f32 %v1632, %v1736
      %v1769 = vadd.f32 %v1633, %v1737
      %v1770 = vadd.f32 %v1634, %v1738
      %v1771 = vadd.f32 %v1635, %v1739
      %v1772 = vadd.f32 %v1636, %v1740
      %v1773 = vadd.f32 %v1637, %v1741
      %v1774 = vadd.f32 %v1638, %v1742
      %v1775 = vadd.f32 %v1639, %v1743
      %v1776 = vadd.f32 %v1640, %v1744
      %v1777 = vadd.f32 %v1641, %v1745
      %v1778 = vadd.f32 %v1642, %v1746
      %v1779 = vadd.f32 %v1643, %v1747
      %v1780 = vadd.f32 %v1644, %v1748
      %v1781 = vadd.f32 %v1645, %v1749
      %v1782 = vadd.f32 %v1646, %v1750
      %v1783 = vadd.f32 %v1647, %v1751
      %v1784 = vadd.f32 %v1648, %v1752
      %v1785 = vadd.f32 %v1649, %v1753
      %v1786 = vadd.f32 %v1650, %v1754
      %v1787 = vadd.f32 %v1651, %v1755
      %v1788 = vadd.f32 %v1652, %v1756
      %v1789 = vadd.f32 %v1653, %v1757
      %v1790 = vadd.f32 %v1654, %v1758
      %v1791 = vadd.f32 %v1655, %v1759
      %v1792 = vadd.f32 %v1656, %v1760
      %v1793 = vadd.f32 %v1657, %v1761
      %v1794 = vadd.f32 %v1658, %v1762
      %v1795 = vld [vmem:[%s1662 + $0x8] sm:$0x1]
      %v1796 = vld [vmem:[%s1662 + $0x14] sm:$0x1]
      %v1797 = vld [vmem:[%s1662 + $0x20] sm:$0x1]
      %v1798 = vld [vmem:[%s1662 + $0x2c] sm:$0x1]
      %v1799 = vld [vmem:[%s1662 + $0x38] sm:$0x1]
      %v1800 = vld [vmem:[%s1662 + $0x44] sm:$0x1]
      %v1801 = vld [vmem:[%s1662 + $0x50] sm:$0x1]
      %v1802 = vld [vmem:[%s1662 + $0x5c] sm:$0x1]
      %v1803 = vld [vmem:[%s1662 + $0x68] sm:$0x1]
      %v1804 = vld [vmem:[%s1662 + $0x74] sm:$0x1]
      %v1805 = vld [vmem:[%s1662 + $0x80] sm:$0x1]
      %v1806 = vld [vmem:[%s1662 + $0x8c] sm:$0x1]
      %v1807 = vld [vmem:[%s1662 + $0x98] sm:$0x1]
      %v1808 = vld [vmem:[%s1662 + $0xa4] sm:$0x1]
      %v1809 = vld [vmem:[%s1662 + $0xb0] sm:$0x1]
      %v1810 = vld [vmem:[%s1662 + $0xbc] sm:$0x1]
      %v1811 = vunpack.c.l.bf16 %v1795
      %v1812 = vunpack.c.l.bf16 %v1796
      %v1813 = vunpack.c.l.bf16 %v1797
      %v1814 = vunpack.c.l.bf16 %v1798
      %v1815 = vunpack.c.l.bf16 %v1799
      %v1816 = vunpack.c.l.bf16 %v1800
      %v1817 = vunpack.c.l.bf16 %v1801
      %v1818 = vunpack.c.l.bf16 %v1802
      %v1819 = vunpack.c.l.bf16 %v1803
      %v1820 = vunpack.c.l.bf16 %v1804
      %v1821 = vunpack.c.l.bf16 %v1805
      %v1822 = vunpack.c.l.bf16 %v1806
      %v1823 = vunpack.c.l.bf16 %v1807
      %v1824 = vunpack.c.l.bf16 %v1808
      %v1825 = vunpack.c.l.bf16 %v1809
      %v1826 = vunpack.c.l.bf16 %v1810
      %v1827 = vlaneseq
      %v1828 = vshrl.u32 %v1827, 7
      %v1829 = vsub.s32 1, %v1828
      %v1830 = vrot.slane %v281, %v1829
      %v1831 = vmul.f32 %v1695, %v1830
      %v1832 = vmul.f32 %v1696, %v1830
      %v1833 = vmul.f32 %v1811, %v1830
      %v1834 = vmul.f32 %v1697, %v1830
      %v1835 = vmul.f32 %v1698, %v1830
      %v1836 = vmul.f32 %v1812, %v1830
      %v1837 = vmul.f32 %v1699, %v1830
      %v1838 = vmul.f32 %v1700, %v1830
      %v1839 = vmul.f32 %v1813, %v1830
      %v1840 = vmul.f32 %v1701, %v1830
      %v1841 = vmul.f32 %v1702, %v1830
      %v1842 = vmul.f32 %v1814, %v1830
      %v1843 = vmul.f32 %v1703, %v1830
      %v1844 = vmul.f32 %v1704, %v1830
      %v1845 = vmul.f32 %v1815, %v1830
      %v1846 = vmul.f32 %v1705, %v1830
      %v1847 = vmul.f32 %v1706, %v1830
      %v1848 = vmul.f32 %v1816, %v1830
      %v1849 = vmul.f32 %v1707, %v1830
      %v1850 = vmul.f32 %v1708, %v1830
      %v1851 = vmul.f32 %v1817, %v1830
      %v1852 = vmul.f32 %v1709, %v1830
      %v1853 = vmul.f32 %v1710, %v1830
      %v1854 = vmul.f32 %v1818, %v1830
      %v1855 = vmul.f32 %v1711, %v1830
      %v1856 = vmul.f32 %v1712, %v1830
      %v1857 = vmul.f32 %v1819, %v1830
      %v1858 = vmul.f32 %v1713, %v1830
      %v1859 = vmul.f32 %v1714, %v1830
      %v1860 = vmul.f32 %v1820, %v1830
      %v1861 = vmul.f32 %v1715, %v1830
      %v1862 = vmul.f32 %v1716, %v1830
      %v1863 = vmul.f32 %v1821, %v1830
      %v1864 = vmul.f32 %v1717, %v1830
      %v1865 = vmul.f32 %v1718, %v1830
      %v1866 = vmul.f32 %v1822, %v1830
      %v1867 = vmul.f32 %v1719, %v1830
      %v1868 = vmul.f32 %v1720, %v1830
      %v1869 = vmul.f32 %v1823, %v1830
      %v1870 = vmul.f32 %v1721, %v1830
      %v1871 = vmul.f32 %v1722, %v1830
      %v1872 = vmul.f32 %v1824, %v1830
      %v1873 = vmul.f32 %v1723, %v1830
      %v1874 = vmul.f32 %v1724, %v1830
      %v1875 = vmul.f32 %v1825, %v1830
      %v1876 = vmul.f32 %v1725, %v1830
      %v1877 = vmul.f32 %v1726, %v1830
      %v1878 = vmul.f32 %v1826, %v1830
      %v1927 = vrot.slane %v1831, 1
      %v1928 = vrot.slane %v1832, 1
      %v1929 = vsel %vm549, %v1927, %v1928
      %v1930 = vrot.slane %v1833, 1
      %v1931 = vsel %vm549, %v1928, %v1930
      %v1932 = vrot.slane %v1834, 1
      %v1933 = vrot.slane %v1835, 1
      %v1934 = vsel %vm549, %v1932, %v1933
      %v1935 = vrot.slane %v1836, 1
      %v1936 = vsel %vm549, %v1933, %v1935
      %v1937 = vrot.slane %v1837, 1
      %v1938 = vrot.slane %v1838, 1
      %v1939 = vsel %vm549, %v1937, %v1938
      %v1940 = vrot.slane %v1839, 1
      %v1941 = vsel %vm549, %v1938, %v1940
      %v1942 = vrot.slane %v1840, 1
      %v1943 = vrot.slane %v1841, 1
      %v1944 = vsel %vm549, %v1942, %v1943
      %v1945 = vrot.slane %v1842, 1
      %v1946 = vsel %vm549, %v1943, %v1945
      %v1947 = vrot.slane %v1843, 1
      %v1948 = vrot.slane %v1844, 1
      %v1949 = vsel %vm549, %v1947, %v1948
      %v1950 = vrot.slane %v1845, 1
      %v1951 = vsel %vm549, %v1948, %v1950
      %v1952 = vrot.slane %v1846, 1
      %v1953 = vrot.slane %v1847, 1
      %v1954 = vsel %vm549, %v1952, %v1953
      %v1955 = vrot.slane %v1848, 1
      %v1956 = vsel %vm549, %v1953, %v1955
      %v1957 = vrot.slane %v1849, 1
      %v1958 = vrot.slane %v1850, 1
      %v1959 = vsel %vm549, %v1957, %v1958
      %v1960 = vrot.slane %v1851, 1
      %v1961 = vsel %vm549, %v1958, %v1960
      %v1962 = vrot.slane %v1852, 1
      %v1963 = vrot.slane %v1853, 1
      %v1964 = vsel %vm549, %v1962, %v1963
      %v1965 = vrot.slane %v1854, 1
      %v1966 = vsel %vm549, %v1963, %v1965
      %v1967 = vrot.slane %v1855, 1
      %v1968 = vrot.slane %v1856, 1
      %v1969 = vsel %vm549, %v1967, %v1968
      %v1970 = vrot.slane %v1857, 1
      %v1971 = vsel %vm549, %v1968, %v1970
      %v1972 = vrot.slane %v1858, 1
      %v1973 = vrot.slane %v1859, 1
      %v1974 = vsel %vm549, %v1972, %v1973
      %v1975 = vrot.slane %v1860, 1
      %v1976 = vsel %vm549, %v1973, %v1975
      %v1977 = vrot.slane %v1861, 1
      %v1978 = vrot.slane %v1862, 1
      %v1979 = vsel %vm549, %v1977, %v1978
      %v1980 = vrot.slane %v1863, 1
      %v1981 = vsel %vm549, %v1978, %v1980
      %v1982 = vrot.slane %v1864, 1
      %v1983 = vrot.slane %v1865, 1
      %v1984 = vsel %vm549, %v1982, %v1983
      %v1985 = vrot.slane %v1866, 1
      %v1986 = vsel %vm549, %v1983, %v1985
      %v1987 = vrot.slane %v1867, 1
      %v1988 = vrot.slane %v1868, 1
      %v1989 = vsel %vm549, %v1987, %v1988
      %v1990 = vrot.slane %v1869, 1
      %v1991 = vsel %vm549, %v1988, %v1990
      %v1992 = vrot.slane %v1870, 1
      %v1993 = vrot.slane %v1871, 1
      %v1994 = vsel %vm549, %v1992, %v1993
      %v1995 = vrot.slane %v1872, 1
      %v1996 = vsel %vm549, %v1993, %v1995
      %v1997 = vrot.slane %v1873, 1
      %v1998 = vrot.slane %v1874, 1
      %v1999 = vsel %vm549, %v1997, %v1998
      %v2000 = vrot.slane %v1875, 1
      %v2001 = vsel %vm549, %v1998, %v2000
      %v2002 = vrot.slane %v1876, 1
      %v2003 = vrot.slane %v1877, 1
      %v2004 = vsel %vm549, %v2002, %v2003
      %v2005 = vrot.slane %v1878, 1
      %v2006 = vsel %vm549, %v2003, %v2005
      %v2039 = vadd.f32 %v1763, %v1929
      %v2040 = vadd.f32 %v1764, %v1931
      %v2041 = vadd.f32 %v1765, %v1934
      %v2042 = vadd.f32 %v1766, %v1936
      %v2043 = vadd.f32 %v1767, %v1939
      %v2044 = vadd.f32 %v1768, %v1941
      %v2045 = vadd.f32 %v1769, %v1944
      %v2046 = vadd.f32 %v1770, %v1946
      %v2047 = vadd.f32 %v1771, %v1949
      %v2048 = vadd.f32 %v1772, %v1951
      %v2049 = vadd.f32 %v1773, %v1954
      %v2050 = vadd.f32 %v1774, %v1956
      %v2051 = vadd.f32 %v1775, %v1959
      %v2052 = vadd.f32 %v1776, %v1961
      %v2053 = vadd.f32 %v1777, %v1964
      %v2054 = vadd.f32 %v1778, %v1966
      %v2055 = vadd.f32 %v1779, %v1969
      %v2056 = vadd.f32 %v1780, %v1971
      %v2057 = vadd.f32 %v1781, %v1974
      %v2058 = vadd.f32 %v1782, %v1976
      %v2059 = vadd.f32 %v1783, %v1979
      %v2060 = vadd.f32 %v1784, %v1981
      %v2061 = vadd.f32 %v1785, %v1984
      %v2062 = vadd.f32 %v1786, %v1986
      %v2063 = vadd.f32 %v1787, %v1989
      %v2064 = vadd.f32 %v1788, %v1991
      %v2065 = vadd.f32 %v1789, %v1994
      %v2066 = vadd.f32 %v1790, %v1996
      %v2067 = vadd.f32 %v1791, %v1999
      %v2068 = vadd.f32 %v1792, %v2001
      %v2069 = vadd.f32 %v1793, %v2004
      %v2070 = vadd.f32 %v1794, %v2006
      %v2071 = vld [vmem:[%s1662] sm:$0xe]
      %v2072 = vld [vmem:[%s1662 + $0xc] sm:$0xe]
      %v2073 = vld [vmem:[%s1662 + $0x18] sm:$0xe]
      %v2074 = vld [vmem:[%s1662 + $0x24] sm:$0xe]
      %v2075 = vld [vmem:[%s1662 + $0x30] sm:$0xe]
      %v2076 = vld [vmem:[%s1662 + $0x3c] sm:$0xe]
      %v2077 = vld [vmem:[%s1662 + $0x48] sm:$0xe]
      %v2078 = vld [vmem:[%s1662 + $0x54] sm:$0xe]
      %v2079 = vld [vmem:[%s1662 + $0x60] sm:$0xe]
      %v2080 = vld [vmem:[%s1662 + $0x6c] sm:$0xe]
      %v2081 = vld [vmem:[%s1662 + $0x78] sm:$0xe]
      %v2082 = vld [vmem:[%s1662 + $0x84] sm:$0xe]
      %v2083 = vld [vmem:[%s1662 + $0x90] sm:$0xe]
      %v2084 = vld [vmem:[%s1662 + $0x9c] sm:$0xe]
      %v2085 = vld [vmem:[%s1662 + $0xa8] sm:$0xe]
      %v2086 = vld [vmem:[%s1662 + $0xb4] sm:$0xe]
      %v2087 = vunpack.c.l.bf16 %v2071
      %v2088 = vunpack.c.l.bf16 %v2072
      %v2089 = vunpack.c.l.bf16 %v2073
      %v2090 = vunpack.c.l.bf16 %v2074
      %v2091 = vunpack.c.l.bf16 %v2075
      %v2092 = vunpack.c.l.bf16 %v2076
      %v2093 = vunpack.c.l.bf16 %v2077
      %v2094 = vunpack.c.l.bf16 %v2078
      %v2095 = vunpack.c.l.bf16 %v2079
      %v2096 = vunpack.c.l.bf16 %v2080
      %v2097 = vunpack.c.l.bf16 %v2081
      %v2098 = vunpack.c.l.bf16 %v2082
      %v2099 = vunpack.c.l.bf16 %v2083
      %v2100 = vunpack.c.l.bf16 %v2084
      %v2101 = vunpack.c.l.bf16 %v2085
      %v2102 = vunpack.c.l.bf16 %v2086
      %v2103 = vlaneseq
      %v2104 = vshrl.u32 %v2103, 7
      %v2105 = vsub.s32 2, %v2104
      %v2106 = vrot.slane %v281, %v2105
      %v2107 = vmul.f32 %v2087, %v2106
      %v2108 = vmul.f32 %v1696, %v2106
      %v2109 = vmul.f32 %v1811, %v2106
      %v2110 = vmul.f32 %v2088, %v2106
      %v2111 = vmul.f32 %v1698, %v2106
      %v2112 = vmul.f32 %v1812, %v2106
      %v2113 = vmul.f32 %v2089, %v2106
      %v2114 = vmul.f32 %v1700, %v2106
      %v2115 = vmul.f32 %v1813, %v2106
      %v2116 = vmul.f32 %v2090, %v2106
      %v2117 = vmul.f32 %v1702, %v2106
      %v2118 = vmul.f32 %v1814, %v2106
      %v2119 = vmul.f32 %v2091, %v2106
      %v2120 = vmul.f32 %v1704, %v2106
      %v2121 = vmul.f32 %v1815, %v2106
      %v2122 = vmul.f32 %v2092, %v2106
      %v2123 = vmul.f32 %v1706, %v2106
      %v2124 = vmul.f32 %v1816, %v2106
      %v2125 = vmul.f32 %v2093, %v2106
      %v2126 = vmul.f32 %v1708, %v2106
      %v2127 = vmul.f32 %v1817, %v2106
      %v2128 = vmul.f32 %v2094, %v2106
      %v2129 = vmul.f32 %v1710, %v2106
      %v2130 = vmul.f32 %v1818, %v2106
      %v2131 = vmul.f32 %v2095, %v2106
      %v2132 = vmul.f32 %v1712, %v2106
      %v2133 = vmul.f32 %v1819, %v2106
      %v2134 = vmul.f32 %v2096, %v2106
      %v2135 = vmul.f32 %v1714, %v2106
      %v2136 = vmul.f32 %v1820, %v2106
      %v2137 = vmul.f32 %v2097, %v2106
      %v2138 = vmul.f32 %v1716, %v2106
      %v2139 = vmul.f32 %v1821, %v2106
      %v2140 = vmul.f32 %v2098, %v2106
      %v2141 = vmul.f32 %v1718, %v2106
      %v2142 = vmul.f32 %v1822, %v2106
      %v2143 = vmul.f32 %v2099, %v2106
      %v2144 = vmul.f32 %v1720, %v2106
      %v2145 = vmul.f32 %v1823, %v2106
      %v2146 = vmul.f32 %v2100, %v2106
      %v2147 = vmul.f32 %v1722, %v2106
      %v2148 = vmul.f32 %v1824, %v2106
      %v2149 = vmul.f32 %v2101, %v2106
      %v2150 = vmul.f32 %v1724, %v2106
      %v2151 = vmul.f32 %v1825, %v2106
      %v2152 = vmul.f32 %v2102, %v2106
      %v2153 = vmul.f32 %v1726, %v2106
      %v2154 = vmul.f32 %v1826, %v2106
      %v2203 = vrot.slane %v2107, 2
      %v2204 = vrot.slane %v2108, 2
      %v2205 = vsel %vm826, %v2203, %v2204
      %v2206 = vrot.slane %v2109, 2
      %v2207 = vsel %vm826, %v2204, %v2206
      %v2208 = vrot.slane %v2110, 2
      %v2209 = vrot.slane %v2111, 2
      %v2210 = vsel %vm826, %v2208, %v2209
      %v2211 = vrot.slane %v2112, 2
      %v2212 = vsel %vm826, %v2209, %v2211
      %v2213 = vrot.slane %v2113, 2
      %v2214 = vrot.slane %v2114, 2
      %v2215 = vsel %vm826, %v2213, %v2214
      %v2216 = vrot.slane %v2115, 2
      %v2217 = vsel %vm826, %v2214, %v2216
      %v2218 = vrot.slane %v2116, 2
      %v2219 = vrot.slane %v2117, 2
      %v2220 = vsel %vm826, %v2218, %v2219
      %v2221 = vrot.slane %v2118, 2
      %v2222 = vsel %vm826, %v2219, %v2221
      %v2223 = vrot.slane %v2119, 2
      %v2224 = vrot.slane %v2120, 2
      %v2225 = vsel %vm826, %v2223, %v2224
      %v2226 = vrot.slane %v2121, 2
      %v2227 = vsel %vm826, %v2224, %v2226
      %v2228 = vrot.slane %v2122, 2
      %v2229 = vrot.slane %v2123, 2
      %v2230 = vsel %vm826, %v2228, %v2229
      %v2231 = vrot.slane %v2124, 2
      %v2232 = vsel %vm826, %v2229, %v2231
      %v2233 = vrot.slane %v2125, 2
      %v2234 = vrot.slane %v2126, 2
      %v2235 = vsel %vm826, %v2233, %v2234
      %v2236 = vrot.slane %v2127, 2
      %v2237 = vsel %vm826, %v2234, %v2236
      %v2238 = vrot.slane %v2128, 2
      %v2239 = vrot.slane %v2129, 2
      %v2240 = vsel %vm826, %v2238, %v2239
      %v2241 = vrot.slane %v2130, 2
      %v2242 = vsel %vm826, %v2239, %v2241
      %v2243 = vrot.slane %v2131, 2
      %v2244 = vrot.slane %v2132, 2
      %v2245 = vsel %vm826, %v2243, %v2244
      %v2246 = vrot.slane %v2133, 2
      %v2247 = vsel %vm826, %v2244, %v2246
      %v2248 = vrot.slane %v2134, 2
      %v2249 = vrot.slane %v2135, 2
      %v2250 = vsel %vm826, %v2248, %v2249
      %v2251 = vrot.slane %v2136, 2
      %v2252 = vsel %vm826, %v2249, %v2251
      %v2253 = vrot.slane %v2137, 2
      %v2254 = vrot.slane %v2138, 2
      %v2255 = vsel %vm826, %v2253, %v2254
      %v2256 = vrot.slane %v2139, 2
      %v2257 = vsel %vm826, %v2254, %v2256
      %v2258 = vrot.slane %v2140, 2
      %v2259 = vrot.slane %v2141, 2
      %v2260 = vsel %vm826, %v2258, %v2259
      %v2261 = vrot.slane %v2142, 2
      %v2262 = vsel %vm826, %v2259, %v2261
      %v2263 = vrot.slane %v2143, 2
      %v2264 = vrot.slane %v2144, 2
      %v2265 = vsel %vm826, %v2263, %v2264
      %v2266 = vrot.slane %v2145, 2
      %v2267 = vsel %vm826, %v2264, %v2266
      %v2268 = vrot.slane %v2146, 2
      %v2269 = vrot.slane %v2147, 2
      %v2270 = vsel %vm826, %v2268, %v2269
      %v2271 = vrot.slane %v2148, 2
      %v2272 = vsel %vm826, %v2269, %v2271
      %v2273 = vrot.slane %v2149, 2
      %v2274 = vrot.slane %v2150, 2
      %v2275 = vsel %vm826, %v2273, %v2274
      %v2276 = vrot.slane %v2151, 2
      %v2277 = vsel %vm826, %v2274, %v2276
      %v2278 = vrot.slane %v2152, 2
      %v2279 = vrot.slane %v2153, 2
      %v2280 = vsel %vm826, %v2278, %v2279
      %v2281 = vrot.slane %v2154, 2
      %v2282 = vsel %vm826, %v2279, %v2281
      %v2315 = vadd.f32 %v2039, %v2205
      %v2316 = vadd.f32 %v2040, %v2207
      %v2317 = vadd.f32 %v2041, %v2210
      %v2318 = vadd.f32 %v2042, %v2212
      %v2319 = vadd.f32 %v2043, %v2215
      %v2320 = vadd.f32 %v2044, %v2217
      %v2321 = vadd.f32 %v2045, %v2220
      %v2322 = vadd.f32 %v2046, %v2222
      %v2323 = vadd.f32 %v2047, %v2225
      %v2324 = vadd.f32 %v2048, %v2227
      %v2325 = vadd.f32 %v2049, %v2230
      %v2326 = vadd.f32 %v2050, %v2232
      %v2327 = vadd.f32 %v2051, %v2235
      %v2328 = vadd.f32 %v2052, %v2237
      %v2329 = vadd.f32 %v2053, %v2240
      %v2330 = vadd.f32 %v2054, %v2242
      %v2331 = vadd.f32 %v2055, %v2245
      %v2332 = vadd.f32 %v2056, %v2247
      %v2333 = vadd.f32 %v2057, %v2250
      %v2334 = vadd.f32 %v2058, %v2252
      %v2335 = vadd.f32 %v2059, %v2255
      %v2336 = vadd.f32 %v2060, %v2257
      %v2337 = vadd.f32 %v2061, %v2260
      %v2338 = vadd.f32 %v2062, %v2262
      %v2339 = vadd.f32 %v2063, %v2265
      %v2340 = vadd.f32 %v2064, %v2267
      %v2341 = vadd.f32 %v2065, %v2270
      %v2342 = vadd.f32 %v2066, %v2272
      %v2343 = vadd.f32 %v2067, %v2275
      %v2344 = vadd.f32 %v2068, %v2277
      %v2345 = vadd.f32 %v2069, %v2280
      %v2346 = vadd.f32 %v2070, %v2282
      %v2347 = vld [vmem:[%s2] sm:$0x1]
      %v2349 = vlaneseq
      %v2350 = vshrl.u32 %v2349, 7
      %v2351 = vsub.s32 0, %v2350
      %v2352 = vrot.slane %v2347, %v2351
      %v2354 = vadd.f32 %v2315, %v2352
      %v2355 = vadd.f32 %v2316, %v2352
      %v2356 = vadd.f32 %v2317, %v2352
      %v2357 = vadd.f32 %v2318, %v2352
      %v2358 = vadd.f32 %v2319, %v2352
      %v2359 = vadd.f32 %v2320, %v2352
      %v2360 = vadd.f32 %v2321, %v2352
      %v2361 = vadd.f32 %v2322, %v2352
      %v2362 = vadd.f32 %v2323, %v2352
      %v2363 = vadd.f32 %v2324, %v2352
      %v2364 = vadd.f32 %v2325, %v2352
      %v2365 = vadd.f32 %v2326, %v2352
      %v2366 = vadd.f32 %v2327, %v2352
      %v2367 = vadd.f32 %v2328, %v2352
      %v2368 = vadd.f32 %v2329, %v2352
      %v2369 = vadd.f32 %v2330, %v2352
      %v2370 = vadd.f32 %v2331, %v2352
      %v2371 = vadd.f32 %v2332, %v2352
      %v2372 = vadd.f32 %v2333, %v2352
      %v2373 = vadd.f32 %v2334, %v2352
      %v2374 = vadd.f32 %v2335, %v2352
      %v2375 = vadd.f32 %v2336, %v2352
      %v2376 = vadd.f32 %v2337, %v2352
      %v2377 = vadd.f32 %v2338, %v2352
      %v2378 = vadd.f32 %v2339, %v2352
      %v2379 = vadd.f32 %v2340, %v2352
      %v2380 = vadd.f32 %v2341, %v2352
      %v2381 = vadd.f32 %v2342, %v2352
      %v2382 = vadd.f32 %v2343, %v2352
      %v2383 = vadd.f32 %v2344, %v2352
      %v2384 = vadd.f32 %v2345, %v2352
      %v2385 = vadd.f32 %v2346, %v2352
      %v2386 = vmax.f32 %v2354, 0.0
      %v2387 = vmax.f32 %v2355, 0.0
      %v2388 = vmax.f32 %v2356, 0.0
      %v2389 = vmax.f32 %v2357, 0.0
      %v2390 = vmax.f32 %v2358, 0.0
      %v2391 = vmax.f32 %v2359, 0.0
      %v2392 = vmax.f32 %v2360, 0.0
      %v2393 = vmax.f32 %v2361, 0.0
      %v2394 = vmax.f32 %v2362, 0.0
      %v2395 = vmax.f32 %v2363, 0.0
      %v2396 = vmax.f32 %v2364, 0.0
      %v2397 = vmax.f32 %v2365, 0.0
      %v2398 = vmax.f32 %v2366, 0.0
      %v2399 = vmax.f32 %v2367, 0.0
      %v2400 = vmax.f32 %v2368, 0.0
      %v2401 = vmax.f32 %v2369, 0.0
      %v2402 = vmax.f32 %v2370, 0.0
      %v2403 = vmax.f32 %v2371, 0.0
      %v2404 = vmax.f32 %v2372, 0.0
      %v2405 = vmax.f32 %v2373, 0.0
      %v2406 = vmax.f32 %v2374, 0.0
      %v2407 = vmax.f32 %v2375, 0.0
      %v2408 = vmax.f32 %v2376, 0.0
      %v2409 = vmax.f32 %v2377, 0.0
      %v2410 = vmax.f32 %v2378, 0.0
      %v2411 = vmax.f32 %v2379, 0.0
      %v2412 = vmax.f32 %v2380, 0.0
      %v2413 = vmax.f32 %v2381, 0.0
      %v2414 = vmax.f32 %v2382, 0.0
      %v2415 = vmax.f32 %v2383, 0.0
      %v2416 = vmax.f32 %v2384, 0.0
      %v2417 = vmax.f32 %v2385, 0.0
      %v2418 = vpack.c.bf16 %v2387, %v2386
      %v2419 = vpack.c.bf16 %v2389, %v2388
      %v2420 = vpack.c.bf16 %v2391, %v2390
      %v2421 = vpack.c.bf16 %v2393, %v2392
      %v2422 = vpack.c.bf16 %v2395, %v2394
      %v2423 = vpack.c.bf16 %v2397, %v2396
      %v2424 = vpack.c.bf16 %v2399, %v2398
      %v2425 = vpack.c.bf16 %v2401, %v2400
      %v2426 = vpack.c.bf16 %v2403, %v2402
      %v2427 = vpack.c.bf16 %v2405, %v2404
      %v2428 = vpack.c.bf16 %v2407, %v2406
      %v2429 = vpack.c.bf16 %v2409, %v2408
      %v2430 = vpack.c.bf16 %v2411, %v2410
      %v2431 = vpack.c.bf16 %v2413, %v2412
      %v2432 = vpack.c.bf16 %v2415, %v2414
      %v2433 = vpack.c.bf16 %v2417, %v2416
      %v2434 = vld [vmem:[%s3] sm:$0xf]
      %v2435 = vld [vmem:[%s3 + $0x4] sm:$0xf]
      %v2436 = vld [vmem:[%s3 + $0x8] sm:$0xf]
      %v2437 = vld [vmem:[%s3 + $0xc] sm:$0xf]
      %v2438 = vld [vmem:[%s3 + $0x10] sm:$0xf]
      %v2439 = vld [vmem:[%s3 + $0x14] sm:$0xf]
      %v2440 = vld [vmem:[%s3 + $0x18] sm:$0xf]
      %v2441 = vld [vmem:[%s3 + $0x1c] sm:$0xf]
      %v2442 = vld [vmem:[%s3 + $0x20] sm:$0xf]
      %v2443 = vld [vmem:[%s3 + $0x24] sm:$0xf]
      %v2444 = vld [vmem:[%s3 + $0x28] sm:$0xf]
      %v2445 = vld [vmem:[%s3 + $0x2c] sm:$0xf]
      %v2446 = vld [vmem:[%s3 + $0x30] sm:$0xf]
      %v2447 = vld [vmem:[%s3 + $0x34] sm:$0xf]
      %v2448 = vld [vmem:[%s3 + $0x38] sm:$0xf]
      %v2449 = vld [vmem:[%s3 + $0x3c] sm:$0xf]
      %v2466 = vunpack.c.l.b16 %v2434
      %v2467 = vunpack.c.l.b16 %v2435
      %v2468 = vunpack.c.l.b16 %v2436
      %v2469 = vunpack.c.l.b16 %v2437
      %v2470 = vunpack.c.l.b16 %v2438
      %v2471 = vunpack.c.l.b16 %v2439
      %v2472 = vunpack.c.l.b16 %v2440
      %v2473 = vunpack.c.l.b16 %v2441
      %v2474 = vunpack.c.l.b16 %v2442
      %v2475 = vunpack.c.l.b16 %v2443
      %v2476 = vunpack.c.l.b16 %v2444
      %v2477 = vunpack.c.l.b16 %v2445
      %v2478 = vunpack.c.l.b16 %v2446
      %v2479 = vunpack.c.l.b16 %v2447
      %v2480 = vunpack.c.l.b16 %v2448
      %v2481 = vunpack.c.l.b16 %v2449
      %v2482 = vpack.c.b16 %v2467, %v2466
      %v2483 = vpack.c.b16 %v2469, %v2468
      %v2484 = vpack.c.b16 %v2471, %v2470
      %v2485 = vpack.c.b16 %v2473, %v2472
      %v2486 = vpack.c.b16 %v2475, %v2474
      %v2487 = vpack.c.b16 %v2477, %v2476
      %v2488 = vpack.c.b16 %v2479, %v2478
      %v2489 = vpack.c.b16 %v2481, %v2480
      %2498 = vmatprep.subr.bf16.mxu0 0
      %2499 = vmatpush1.bf16.msra.mxu0 %v2482
      %2500 = vmatprep.subr.bf16.mxu0 0
      %2501 = vmatpush1.bf16.msra.mxu0 %v2483
      %2502 = vmatprep.subr.bf16.mxu0 0
      %2503 = vmatpush1.bf16.msra.mxu0 %v2484
      %2504 = vmatprep.subr.bf16.mxu0 0
      %2505 = vmatpush1.bf16.msra.mxu0 %v2485
      %2506 = vmatprep.subr.bf16.mxu0 0
      %2507 = vmatpush1.bf16.msra.mxu0 %v2486
      %2508 = vmatprep.subr.bf16.mxu0 0
      %2509 = vmatpush1.bf16.msra.mxu0 %v2487
      %2510 = vmatprep.subr.bf16.mxu0 0
      %2511 = vmatpush1.bf16.msra.mxu0 %v2488
      %2512 = vmatprep.subr.bf16.mxu0 0
      %2513 = vmatpush1.bf16.msra.mxu0 %v2489
      %2514 = vmatprep.subr.bf16.mxu0 0
      %2515 = vmatpush1.bf16.msra.mxu0 0
      %2516 = vmatprep.subr.bf16.mxu0 0
      %2517 = vmatpush1.bf16.msra.mxu0 0
      %2518 = vmatprep.subr.bf16.mxu0 0
      %2519 = vmatpush1.bf16.msra.mxu0 0
      %2520 = vmatprep.subr.bf16.mxu0 0
      %2521 = vmatpush1.bf16.msra.mxu0 0
      %2522 = vmatprep.subr.bf16.mxu0 0
      %2523 = vmatpush1.bf16.msra.mxu0 0
      %2524 = vmatprep.subr.bf16.mxu0 0
      %2525 = vmatpush1.bf16.msra.mxu0 0
      %2526 = vmatprep.subr.bf16.mxu0 0
      %2527 = vmatpush1.bf16.msra.mxu0 0
      %2528 = vmatprep.subr.bf16.mxu0 0
      %2529 = vmatpush1.bf16.msra.mxu0 0
      %2530 = vmatprep.mubr.bf16.mxu0 0
      %2531 = vmatmul.mubr.bf16.gmra.mrb[0].mxu0 %v2418
      %v2532 = vpop.f32.mrb[0].mxu0
      %v2533 = vadd.f32 0.0, %v2532
      %v2534 = vpop.f32.mrb[0].mxu0
      %v2535 = vpop.f32.mrb[0].mxu0
      %v2536 = vadd.f32 0.0, %v2535
      %v2537 = vpop.f32.mrb[0].mxu0
      %2538 = vmatprep.mubr.bf16.mxu0 0
      %2539 = vmatmul.mubr.bf16.gmra.mrb[0].mxu0 %v2419
      %v2540 = vpop.f32.mrb[0].mxu0
      %v2541 = vadd.f32 0.0, %v2540
      %v2542 = vpop.f32.mrb[0].mxu0
      %v2543 = vpop.f32.mrb[0].mxu0
      %v2544 = vadd.f32 0.0, %v2543
      %v2545 = vpop.f32.mrb[0].mxu0
      %2546 = vmatprep.mubr.bf16.mxu0 0
      %2547 = vmatmul.mubr.bf16.gmra.mrb[0].mxu0 %v2420
      %v2548 = vpop.f32.mrb[0].mxu0
      %v2549 = vadd.f32 0.0, %v2548
      %v2550 = vpop.f32.mrb[0].mxu0
      %v2551 = vpop.f32.mrb[0].mxu0
      %v2552 = vadd.f32 0.0, %v2551
      %v2553 = vpop.f32.mrb[0].mxu0
      %2554 = vmatprep.mubr.bf16.mxu0 0
      %2555 = vmatmul.mubr.bf16.gmra.mrb[0].mxu0 %v2421
      %v2556 = vpop.f32.mrb[0].mxu0
      %v2557 = vadd.f32 0.0, %v2556
      %v2558 = vpop.f32.mrb[0].mxu0
      %v2559 = vpop.f32.mrb[0].mxu0
      %v2560 = vadd.f32 0.0, %v2559
      %v2561 = vpop.f32.mrb[0].mxu0
      %2562 = vmatprep.mubr.bf16.mxu0 0
      %2563 = vmatmul.mubr.bf16.gmra.mrb[0].mxu0 %v2422
      %v2564 = vpop.f32.mrb[0].mxu0
      %v2565 = vadd.f32 0.0, %v2564
      %v2566 = vpop.f32.mrb[0].mxu0
      %v2567 = vpop.f32.mrb[0].mxu0
      %v2568 = vadd.f32 0.0, %v2567
      %v2569 = vpop.f32.mrb[0].mxu0
      %2570 = vmatprep.mubr.bf16.mxu0 0
      %2571 = vmatmul.mubr.bf16.gmra.mrb[0].mxu0 %v2423
      %v2572 = vpop.f32.mrb[0].mxu0
      %v2573 = vadd.f32 0.0, %v2572
      %v2574 = vpop.f32.mrb[0].mxu0
      %v2575 = vpop.f32.mrb[0].mxu0
      %v2576 = vadd.f32 0.0, %v2575
      %v2577 = vpop.f32.mrb[0].mxu0
      %2578 = vmatprep.mubr.bf16.mxu0 0
      %2579 = vmatmul.mubr.bf16.gmra.mrb[0].mxu0 %v2424
      %v2580 = vpop.f32.mrb[0].mxu0
      %v2581 = vadd.f32 0.0, %v2580
      %v2582 = vpop.f32.mrb[0].mxu0
      %v2583 = vpop.f32.mrb[0].mxu0
      %v2584 = vadd.f32 0.0, %v2583
      %v2585 = vpop.f32.mrb[0].mxu0
      %2586 = vmatprep.mubr.bf16.mxu0 0
      %2587 = vmatmul.mubr.bf16.gmra.mrb[0].mxu0 %v2425
      %v2588 = vpop.f32.mrb[0].mxu0
      %v2589 = vadd.f32 0.0, %v2588
      %v2590 = vpop.f32.mrb[0].mxu0
      %v2591 = vpop.f32.mrb[0].mxu0
      %v2592 = vadd.f32 0.0, %v2591
      %v2593 = vpop.f32.mrb[0].mxu0
      %2594 = vmatprep.mubr.bf16.mxu0 0
      %2595 = vmatmul.mubr.bf16.gmra.mrb[0].mxu0 %v2426
      %v2596 = vpop.f32.mrb[0].mxu0
      %v2597 = vadd.f32 0.0, %v2596
      %v2598 = vpop.f32.mrb[0].mxu0
      %v2599 = vpop.f32.mrb[0].mxu0
      %v2600 = vadd.f32 0.0, %v2599
      %v2601 = vpop.f32.mrb[0].mxu0
      %2602 = vmatprep.mubr.bf16.mxu0 0
      %2603 = vmatmul.mubr.bf16.gmra.mrb[0].mxu0 %v2427
      %v2604 = vpop.f32.mrb[0].mxu0
      %v2605 = vadd.f32 0.0, %v2604
      %v2606 = vpop.f32.mrb[0].mxu0
      %v2607 = vpop.f32.mrb[0].mxu0
      %v2608 = vadd.f32 0.0, %v2607
      %v2609 = vpop.f32.mrb[0].mxu0
      %2610 = vmatprep.mubr.bf16.mxu0 0
      %2611 = vmatmul.mubr.bf16.gmra.mrb[0].mxu0 %v2428
      %v2612 = vpop.f32.mrb[0].mxu0
      %v2613 = vadd.f32 0.0, %v2612
      %v2614 = vpop.f32.mrb[0].mxu0
      %v2615 = vpop.f32.mrb[0].mxu0
      %v2616 = vadd.f32 0.0, %v2615
      %v2617 = vpop.f32.mrb[0].mxu0
      %2618 = vmatprep.mubr.bf16.mxu0 0
      %2619 = vmatmul.mubr.bf16.gmra.mrb[0].mxu0 %v2429
      %v2620 = vpop.f32.mrb[0].mxu0
      %v2621 = vadd.f32 0.0, %v2620
      %v2622 = vpop.f32.mrb[0].mxu0
      %v2623 = vpop.f32.mrb[0].mxu0
      %v2624 = vadd.f32 0.0, %v2623
      %v2625 = vpop.f32.mrb[0].mxu0
      %2626 = vmatprep.mubr.bf16.mxu0 0
      %2627 = vmatmul.mubr.bf16.gmra.mrb[0].mxu0 %v2430
      %v2628 = vpop.f32.mrb[0].mxu0
      %v2629 = vadd.f32 0.0, %v2628
      %v2630 = vpop.f32.mrb[0].mxu0
      %v2631 = vpop.f32.mrb[0].mxu0
      %v2632 = vadd.f32 0.0, %v2631
      %v2633 = vpop.f32.mrb[0].mxu0
      %2634 = vmatprep.mubr.bf16.mxu0 0
      %2635 = vmatmul.mubr.bf16.gmra.mrb[0].mxu0 %v2431
      %v2636 = vpop.f32.mrb[0].mxu0
      %v2637 = vadd.f32 0.0, %v2636
      %v2638 = vpop.f32.mrb[0].mxu0
      %v2639 = vpop.f32.mrb[0].mxu0
      %v2640 = vadd.f32 0.0, %v2639
      %v2641 = vpop.f32.mrb[0].mxu0
      %2642 = vmatprep.mubr.bf16.mxu0 0
      %2643 = vmatmul.mubr.bf16.gmra.mrb[0].mxu0 %v2432
      %v2644 = vpop.f32.mrb[0].mxu0
      %v2645 = vadd.f32 0.0, %v2644
      %v2646 = vpop.f32.mrb[0].mxu0
      %v2647 = vpop.f32.mrb[0].mxu0
      %v2648 = vadd.f32 0.0, %v2647
      %v2649 = vpop.f32.mrb[0].mxu0
      %2650 = vmatprep.mubr.bf16.mxu0 0
      %2651 = vmatmul.mubr.bf16.gmra.mrb[0].mxu0 %v2433
      %v2652 = vpop.f32.mrb[0].mxu0
      %v2653 = vadd.f32 0.0, %v2652
      %v2654 = vpop.f32.mrb[0].mxu0
      %v2655 = vpop.f32.mrb[0].mxu0
      %v2656 = vadd.f32 0.0, %v2655
      %v2657 = vpop.f32.mrb[0].mxu0
      %2658 = vdwg.mxu0
      %v2659 = vld [vmem:[%s4] sm:$0x1]
      %v2661 = vlaneseq
      %v2662 = vshrl.u32 %v2661, 7
      %v2663 = vsub.s32 0, %v2662
      %v2664 = vrot.slane %v2659, %v2663
      %v2666 = vmul.f32 %v2533, %v2664
      %v2667 = vmul.f32 %v2536, %v2664
      %v2668 = vmul.f32 %v2541, %v2664
      %v2669 = vmul.f32 %v2544, %v2664
      %v2670 = vmul.f32 %v2549, %v2664
      %v2671 = vmul.f32 %v2552, %v2664
      %v2672 = vmul.f32 %v2557, %v2664
      %v2673 = vmul.f32 %v2560, %v2664
      %v2674 = vmul.f32 %v2565, %v2664
      %v2675 = vmul.f32 %v2568, %v2664
      %v2676 = vmul.f32 %v2573, %v2664
      %v2677 = vmul.f32 %v2576, %v2664
      %v2678 = vmul.f32 %v2581, %v2664
      %v2679 = vmul.f32 %v2584, %v2664
      %v2680 = vmul.f32 %v2589, %v2664
      %v2681 = vmul.f32 %v2592, %v2664
      %v2682 = vmul.f32 %v2597, %v2664
      %v2683 = vmul.f32 %v2600, %v2664
      %v2684 = vmul.f32 %v2605, %v2664
      %v2685 = vmul.f32 %v2608, %v2664
      %v2686 = vmul.f32 %v2613, %v2664
      %v2687 = vmul.f32 %v2616, %v2664
      %v2688 = vmul.f32 %v2621, %v2664
      %v2689 = vmul.f32 %v2624, %v2664
      %v2690 = vmul.f32 %v2629, %v2664
      %v2691 = vmul.f32 %v2632, %v2664
      %v2692 = vmul.f32 %v2637, %v2664
      %v2693 = vmul.f32 %v2640, %v2664
      %v2694 = vmul.f32 %v2645, %v2664
      %v2695 = vmul.f32 %v2648, %v2664
      %v2696 = vmul.f32 %v2653, %v2664
      %v2697 = vmul.f32 %v2656, %v2664
      %v2698 = vld [vmem:[%s5] sm:$0x1]
      %v2700 = vlaneseq
      %v2701 = vshrl.u32 %v2700, 7
      %v2702 = vsub.s32 0, %v2701
      %v2703 = vrot.slane %v2698, %v2702
      %v2705 = vadd.f32 %v2666, %v2703
      %v2706 = vadd.f32 %v2667, %v2703
      %v2707 = vadd.f32 %v2668, %v2703
      %v2708 = vadd.f32 %v2669, %v2703
      %v2709 = vadd.f32 %v2670, %v2703
      %v2710 = vadd.f32 %v2671, %v2703
      %v2711 = vadd.f32 %v2672, %v2703
      %v2712 = vadd.f32 %v2673, %v2703
      %v2713 = vadd.f32 %v2674, %v2703
      %v2714 = vadd.f32 %v2675, %v2703
      %v2715 = vadd.f32 %v2676, %v2703
      %v2716 = vadd.f32 %v2677, %v2703
      %v2717 = vadd.f32 %v2678, %v2703
      %v2718 = vadd.f32 %v2679, %v2703
      %v2719 = vadd.f32 %v2680, %v2703
      %v2720 = vadd.f32 %v2681, %v2703
      %v2721 = vadd.f32 %v2682, %v2703
      %v2722 = vadd.f32 %v2683, %v2703
      %v2723 = vadd.f32 %v2684, %v2703
      %v2724 = vadd.f32 %v2685, %v2703
      %v2725 = vadd.f32 %v2686, %v2703
      %v2726 = vadd.f32 %v2687, %v2703
      %v2727 = vadd.f32 %v2688, %v2703
      %v2728 = vadd.f32 %v2689, %v2703
      %v2729 = vadd.f32 %v2690, %v2703
      %v2730 = vadd.f32 %v2691, %v2703
      %v2731 = vadd.f32 %v2692, %v2703
      %v2732 = vadd.f32 %v2693, %v2703
      %v2733 = vadd.f32 %v2694, %v2703
      %v2734 = vadd.f32 %v2695, %v2703
      %v2735 = vadd.f32 %v2696, %v2703
      %v2736 = vadd.f32 %v2697, %v2703
      %v2737 = vmax.f32 %v2705, 0.0
      %v2738 = vmax.f32 %v2706, 0.0
      %v2739 = vmax.f32 %v2707, 0.0
      %v2740 = vmax.f32 %v2708, 0.0
      %v2741 = vmax.f32 %v2709, 0.0
      %v2742 = vmax.f32 %v2710, 0.0
      %v2743 = vmax.f32 %v2711, 0.0
      %v2744 = vmax.f32 %v2712, 0.0
      %v2745 = vmax.f32 %v2713, 0.0
      %v2746 = vmax.f32 %v2714, 0.0
      %v2747 = vmax.f32 %v2715, 0.0
      %v2748 = vmax.f32 %v2716, 0.0
      %v2749 = vmax.f32 %v2717, 0.0
      %v2750 = vmax.f32 %v2718, 0.0
      %v2751 = vmax.f32 %v2719, 0.0
      %v2752 = vmax.f32 %v2720, 0.0
      %v2753 = vmax.f32 %v2721, 0.0
      %v2754 = vmax.f32 %v2722, 0.0
      %v2755 = vmax.f32 %v2723, 0.0
      %v2756 = vmax.f32 %v2724, 0.0
      %v2757 = vmax.f32 %v2725, 0.0
      %v2758 = vmax.f32 %v2726, 0.0
      %v2759 = vmax.f32 %v2727, 0.0
      %v2760 = vmax.f32 %v2728, 0.0
      %v2761 = vmax.f32 %v2729, 0.0
      %v2762 = vmax.f32 %v2730, 0.0
      %v2763 = vmax.f32 %v2731, 0.0
      %v2764 = vmax.f32 %v2732, 0.0
      %v2765 = vmax.f32 %v2733, 0.0
      %v2766 = vmax.f32 %v2734, 0.0
      %v2767 = vmax.f32 %v2735, 0.0
      %v2768 = vmax.f32 %v2736, 0.0
      %2769 = vst [vmem:[%s275] sm:$0xff] %v2737
      %2770 = vst [vmem:[%s275 + $0x8] sm:$0xff] %v2738
      %2771 = vst [vmem:[%s275 + $0x10] sm:$0xff] %v2739
      %2772 = vst [vmem:[%s275 + $0x18] sm:$0xff] %v2740
      %2773 = vst [vmem:[%s275 + $0x20] sm:$0xff] %v2741
      %2774 = vst [vmem:[%s275 + $0x28] sm:$0xff] %v2742
      %2775 = vst [vmem:[%s275 + $0x30] sm:$0xff] %v2743
      %2776 = vst [vmem:[%s275 + $0x38] sm:$0xff] %v2744
      %2777 = vst [vmem:[%s275 + $0x40] sm:$0xff] %v2745
      %2778 = vst [vmem:[%s275 + $0x48] sm:$0xff] %v2746
      %2779 = vst [vmem:[%s275 + $0x50] sm:$0xff] %v2747
      %2780 = vst [vmem:[%s275 + $0x58] sm:$0xff] %v2748
      %2781 = vst [vmem:[%s275 + $0x60] sm:$0xff] %v2749
      %2782 = vst [vmem:[%s275 + $0x68] sm:$0xff] %v2750
      %2783 = vst [vmem:[%s275 + $0x70] sm:$0xff] %v2751
      %2784 = vst [vmem:[%s275 + $0x78] sm:$0xff] %v2752
      %2785 = vst [vmem:[%s275 + $0x80] sm:$0xff] %v2753
      %2786 = vst [vmem:[%s275 + $0x88] sm:$0xff] %v2754
      %2787 = vst [vmem:[%s275 + $0x90] sm:$0xff] %v2755
      %2788 = vst [vmem:[%s275 + $0x98] sm:$0xff] %v2756
      %2789 = vst [vmem:[%s275 + $0xa0] sm:$0xff] %v2757
      %2790 = vst [vmem:[%s275 + $0xa8] sm:$0xff] %v2758
      %2791 = vst [vmem:[%s275 + $0xb0] sm:$0xff] %v2759
      %2792 = vst [vmem:[%s275 + $0xb8] sm:$0xff] %v2760
      %2793 = vst [vmem:[%s275 + $0xc0] sm:$0xff] %v2761
      %2794 = vst [vmem:[%s275 + $0xc8] sm:$0xff] %v2762
      %2795 = vst [vmem:[%s275 + $0xd0] sm:$0xff] %v2763
      %2796 = vst [vmem:[%s275 + $0xd8] sm:$0xff] %v2764
      %2797 = vst [vmem:[%s275 + $0xe0] sm:$0xff] %v2765
      %2798 = vst [vmem:[%s275 + $0xe8] sm:$0xff] %v2766
      %2799 = vst [vmem:[%s275 + $0xf0] sm:$0xff] %v2767
      %2800 = vst [vmem:[%s275 + $0xf8] sm:$0xff] %v2768
      %s2801 = smul.u32 16, %s22
      %p2802 = scmp.lt.s32.totalorder %s21, 1
      %s2803 = scalar_select %p2802, %s21, 1
      %p2804 = scmp.lt.s32.totalorder %s2801, 15
      %s2805 = scalar_select %p2804, %s2801, 15
      %s2806 = smul.addr %s2805, 2
      %s2807 = smul.addr %s2803, 32
      %s2808 = sadd.s32 %s2806, %s2807
      %s2809 = smul.addr %s2808, 8
      %s2810 = scalar_lea.vmem %s6, %s2809
      // Predicated region
      $region45: #{_depthwise_impl.1} parent=43 // pred_check
        %p2811 = pneg %p180
      $region46: #{_depthwise_impl.1} parent=43 // pred_check_branch
        %2813 = sbr.rel (%p2811) target = $region48
      $region47: #{_depthwise_impl.1} parent=43 // pred_region
        %s2814 = smul.u32 16, %s22
      $region48: #{_depthwise_impl.1} parent=43 // pred_fallthru
        _
    $region44: #{_depthwise_impl.1} parent=5 // pred_fallthru
      _
    %p2815 = scmp.le.s32.totalorder 2, %s12
    // Predicated region
    $region49: #{_depthwise_impl.1} parent=5 // pred_check
      %p2816 = pneg %p2815
    $region50: #{_depthwise_impl.1} parent=5 // pred_check_branch
      %2818 = sbr.rel (%p2816) target = $region52
    $region51: #{_depthwise_impl.1} parent=5 // pred_region
      %s2819 = ssub.s32 %s12, 2
      // Predicated region
      $region53: #{_depthwise_impl.1} parent=51 // pred_check
        %p2820 = pneg %p186
      $region54: #{_depthwise_impl.1} parent=51 // pred_check_branch
        %2822 = sbr.rel (%p2820) target = $region56
      $region55: #{_depthwise_impl.1} parent=51 // pred_region
        %s2823 = smul.u32 16, %s24
        %p2824 = scmp.lt.s32.totalorder %s23, 1
        %s2825 = scalar_select %p2824, %s23, 1
        %p2826 = scmp.lt.s32.totalorder %s2823, 15
        %s2827 = scalar_select %p2826, %s2823, 15
        %s2828 = smul.addr %s2827, 2
        %s2829 = smul.addr %s2825, 32
        %s2830 = sadd.s32 %s2828, %s2829
        %s2831 = smul.addr %s2830, 8
        %s2832 = scalar_lea.vmem %s6, %s2831
      $region56: #{_depthwise_impl.1} parent=51 // pred_fallthru
        _
    $region52: #{_depthwise_impl.1} parent=5 // pred_fallthru
      _
  $region6: #{_depthwise_impl.1} parent=0 // loop_footer
    %s16 = sadd.s32 1, %s12
  $region7: #{_depthwise_impl.1} parent=0 // loop_footer_branch
    %11 = sbr.rel target = $region3
  $region8: #{_depthwise_impl.1} parent=0 // loop_exit
    _

</llo_original>
